<compile_context>
chip_gen: v6e
topology: v6e:2x2x1
jax: 0.10.0
libtpu: 0.0.40
codegen_flags: <defaults>
</compile_context>

<pallas_src>
import jax
import jax.numpy as jnp
from jax.experimental import pallas as pl
from jax.experimental.pallas import tpu as pltpu


def _agent_mlp_kernel(x_ref, w1_ref, b1_ref, w2_ref, b2_ref, o_ref):
    tb = x_ref.shape[0]          # batch tile
    s_size = x_ref.shape[1]      # observation dim (tiny, e.g. 4)
    hidden = w1_ref.shape[1]     # hidden width (e.g. 16)
    a_pad = w2_ref.shape[1]      # lane-padded action dim (multiple of 128)

    x = x_ref[...]               # [tb, s_size]
    w1 = w1_ref[...]             # [s_size, hidden]
    w2 = w2_ref[...]             # [hidden, a_pad]

    # ---- Layer 1: h = relu(x @ w1 + b1) --------------------------------
    # K = s_size is tiny, so do it as unrolled VPU MACs (outer products);
    # the bias is the accumulator init.
    h = jnp.broadcast_to(b1_ref[...], (tb, hidden))
    for k in range(s_size):                       # static unroll (4 iters)
        h = h + x[:, k:k + 1] * w1[k:k + 1, :]
    h = jnp.maximum(h, 0.0)

    # ---- Layer 2: y = tanh(h @ w2 + b2) --------------------------------
    y = jnp.broadcast_to(b2_ref[...], (tb, a_pad))
    for k in range(hidden):                       # static unroll (16 iters)
        y = y + h[:, k:k + 1] * w2[k:k + 1, :]

    o_ref[...] = jnp.tanh(y).astype(o_ref.dtype)


def agent_forward(x, w1, b1, w2, b2, *, batch_tile=256):
    """Batched Agent MLP forward pass as a single gridded Pallas TPU kernel.

    Args:
      x:  [B, s_size] float32 observations (B = env steps / envs batched)
      w1: [s_size, hidden] float32 (transpose of nn.Linear.weight)
      b1: [hidden] float32
      w2: [hidden, a_size] float32
      b2: [a_size] float32
    Returns:
      [B, a_size] float32 actions in (-1, 1)
    """
    B, s_size = x.shape
    hidden = w1.shape[1]
    a_size = w2.shape[1]

    LANES = 128
    a_pad = pl.cdiv(a_size, LANES) * LANES        # lane-dense output width

    # Batch tile: multiple of 8 sublanes, no bigger than needed.
    tb = batch_tile
    if B < tb:
        tb = max(8, ((B + 7) // 8) * 8)
    B_pad = pl.cdiv(B, tb) * tb

    # Pad batch (zeros are harmless, sliced off below).
    x_p = x if B_pad == B else jnp.pad(x, ((0, B_pad - B), (0, 0)))

    # Pad output features to a lane-dense width with zero weights / bias.
    w2_p = jnp.pad(w2, ((0, 0), (0, a_pad - a_size)))
    b2_p = jnp.pad(b2, ((0, a_pad - a_size),))

    # Keep biases 2D so they map cleanly onto (sublane, lane) vregs.
    b1_2d = b1.reshape(1, hidden)
    b2_2d = b2_p.reshape(1, a_pad)

    grid = (B_pad // tb,)

    out = pl.pallas_call(
        _agent_mlp_kernel,
        out_shape=jax.ShapeDtypeStruct((B_pad, a_pad), jnp.float32),
        grid_spec=pltpu.PrefetchScalarGridSpec(
            num_scalar_prefetch=0,
            grid=grid,
            in_specs=[
                # Activations: one batch tile per grid step.
                pl.BlockSpec((tb, s_size), lambda i: (i, 0)),
                # Weights / biases: constant block index -> fetched once,
                # VMEM-resident across all grid iterations.
                pl.BlockSpec((s_size, hidden), lambda i: (0, 0)),
                pl.BlockSpec((1, hidden), lambda i: (0, 0)),
                pl.BlockSpec((hidden, a_pad), lambda i: (0, 0)),
                pl.BlockSpec((1, a_pad), lambda i: (0, 0)),
            ],
            out_specs=pl.BlockSpec((tb, a_pad), lambda i: (i, 0)),
        ),
        compiler_params=pltpu.CompilerParams(
            # Batch tiles are independent -> shard across both v7x TCs.
            dimension_semantics=("parallel",),
        ),
    )(x_p, w1, b1_2d, w2_p, b2_2d)

    return out[:B, :a_size]


def reference_forward(x, w1, b1, w2, b2):
    h = jnp.maximum(x @ w1 + b1, 0.0)
    return jnp.tanh(h @ w2 + b2)


if __name__ == "__main__":
    # Shapes consistent with the module: s_size = obs dim, fc_sizes=[16],
    # a_size = action dim.  The batch dim represents many env observations
    # (rollout steps / CEM population) evaluated in one fused kernel call.
    batch = 1024
    s_size = 4       # env.observation_space.shape[0]
    hidden = 16      # fc_sizes[0]
    a_size = 2       # env.action_space.shape[0]

    key = jax.random.PRNGKey(0)
    kx, kw1, kb1, kw2, kb2 = jax.random.split(key, 5)

    x = jax.random.normal(kx, (batch, s_size), dtype=jnp.float32)
    # PyTorch-Linear-style uniform init bounds.
    bound1 = 1.0 / jnp.sqrt(s_size)
    bound2 = 1.0 / jnp.sqrt(hidden)
    w1 = jax.random.uniform(kw1, (s_size, hidden), jnp.float32, -bound1, bound1)
    b1 = jax.random.uniform(kb1, (hidden,), jnp.float32, -bound1, bound1)
    w2 = jax.random.uniform(kw2, (hidden, a_size), jnp.float32, -bound2, bound2)
    b2 = jax.random.uniform(kb2, (a_size,), jnp.float32, -bound2, bound2)

    out = agent_forward(x, w1, b1, w2, b2)
    out = jax.block_until_ready(out)

    ref = reference_forward(x, w1, b1, w2, b2)
    assert out.shape == (batch, a_size)
    assert bool(jnp.all(jnp.abs(out) < 1.0))          # tanh range
    assert jnp.allclose(out, ref, atol=1e-5, rtol=1e-5)

    # TODO(synk): Agent.evaluate's env.reset/env.step interaction loop is
    # host-side control flow and has no Pallas equivalent; only forward() is
    # implemented here.
    print("KERNEL_OK")
</pallas_src>

<mosaic_0001>
module attributes {stable_mosaic.version = 11 : i64} {
  func.func @_agent_mlp_kernel(%arg0: i32, %arg1: memref<256x4xf32, #tpu.memory_space<vmem>>, %arg2: memref<4x16xf32, #tpu.memory_space<vmem>>, %arg3: memref<1x16xf32, #tpu.memory_space<vmem>>, %arg4: memref<16x128xf32, #tpu.memory_space<vmem>>, %arg5: memref<1x128xf32, #tpu.memory_space<vmem>>, %arg6: memref<256x128xf32, #tpu.memory_space<vmem>>) attributes {dimension_semantics = [#tpu.dimension_semantics<parallel>], iteration_bounds = array<i64: 4>, scalar_prefetch = 0 : i64, scratch_operands = 0 : i64, tpu.core_type = #tpu.core_type<tc>, window_params = [{transform_indices = @transform_0, window_bounds = array<i64: 256, 4>}, {pipeline_mode = #tpu.pipeline_mode<synchronous>, transform_indices = @transform_1, window_bounds = array<i64: 4, 16>}, {pipeline_mode = #tpu.pipeline_mode<synchronous>, transform_indices = @transform_2, window_bounds = array<i64: 1, 16>}, {pipeline_mode = #tpu.pipeline_mode<synchronous>, transform_indices = @transform_3, window_bounds = array<i64: 16, 128>}, {pipeline_mode = #tpu.pipeline_mode<synchronous>, transform_indices = @transform_4, window_bounds = array<i64: 1, 128>}, {transform_indices = @transform_5, window_bounds = array<i64: 256, 128>}]} {
    %c0 = arith.constant 0 : index
    %c0_0 = arith.constant 0 : index
    %0 = vector.load %arg1[%c0, %c0_0] : memref<256x4xf32, #tpu.memory_space<vmem>>, vector<256x4xf32>
    %c0_1 = arith.constant 0 : index
    %c0_2 = arith.constant 0 : index
    %1 = vector.load %arg2[%c0_1, %c0_2] : memref<4x16xf32, #tpu.memory_space<vmem>>, vector<4x16xf32>
    %c0_3 = arith.constant 0 : index
    %c0_4 = arith.constant 0 : index
    %2 = vector.load %arg4[%c0_3, %c0_4] : memref<16x128xf32, #tpu.memory_space<vmem>>, vector<16x128xf32>
    %c0_5 = arith.constant 0 : index
    %c0_6 = arith.constant 0 : index
    %3 = vector.load %arg3[%c0_5, %c0_6] : memref<1x16xf32, #tpu.memory_space<vmem>>, vector<1x16xf32>
    %4 = vector.shape_cast %3 : vector<1x16xf32> to vector<1x16xf32>
    %5 = vector.broadcast %4 : vector<1x16xf32> to vector<256x16xf32>
    %6 = vector.extract_strided_slice %0 {offsets = [0, 0], sizes = [256, 1], strides = [1, 1]} : vector<256x4xf32> to vector<256x1xf32>
    %7 = vector.extract_strided_slice %1 {offsets = [0, 0], sizes = [1, 16], strides = [1, 1]} : vector<4x16xf32> to vector<1x16xf32>
    %8 = vector.broadcast %6 : vector<256x1xf32> to vector<256x16xf32>
    %9 = vector.broadcast %7 : vector<1x16xf32> to vector<256x16xf32>
    %10 = arith.mulf %8, %9 : vector<256x16xf32>
    %11 = arith.addf %5, %10 : vector<256x16xf32>
    %12 = vector.extract_strided_slice %0 {offsets = [0, 1], sizes = [256, 1], strides = [1, 1]} : vector<256x4xf32> to vector<256x1xf32>
    %13 = vector.extract_strided_slice %1 {offsets = [1, 0], sizes = [1, 16], strides = [1, 1]} : vector<4x16xf32> to vector<1x16xf32>
    %14 = vector.broadcast %12 : vector<256x1xf32> to vector<256x16xf32>
    %15 = vector.broadcast %13 : vector<1x16xf32> to vector<256x16xf32>
    %16 = arith.mulf %14, %15 : vector<256x16xf32>
    %17 = arith.addf %11, %16 : vector<256x16xf32>
    %18 = vector.extract_strided_slice %0 {offsets = [0, 2], sizes = [256, 1], strides = [1, 1]} : vector<256x4xf32> to vector<256x1xf32>
    %19 = vector.extract_strided_slice %1 {offsets = [2, 0], sizes = [1, 16], strides = [1, 1]} : vector<4x16xf32> to vector<1x16xf32>
    %20 = vector.broadcast %18 : vector<256x1xf32> to vector<256x16xf32>
    %21 = vector.broadcast %19 : vector<1x16xf32> to vector<256x16xf32>
    %22 = arith.mulf %20, %21 : vector<256x16xf32>
    %23 = arith.addf %17, %22 : vector<256x16xf32>
    %24 = vector.extract_strided_slice %0 {offsets = [0, 3], sizes = [256, 1], strides = [1, 1]} : vector<256x4xf32> to vector<256x1xf32>
    %25 = vector.extract_strided_slice %1 {offsets = [3, 0], sizes = [1, 16], strides = [1, 1]} : vector<4x16xf32> to vector<1x16xf32>
    %26 = vector.broadcast %24 : vector<256x1xf32> to vector<256x16xf32>
    %27 = vector.broadcast %25 : vector<1x16xf32> to vector<256x16xf32>
    %28 = arith.mulf %26, %27 : vector<256x16xf32>
    %29 = arith.addf %23, %28 : vector<256x16xf32>
    %cst = arith.constant 0.000000e+00 : f32
    %30 = vector.broadcast %cst : f32 to vector<256x16xf32>
    %31 = arith.maximumf %29, %30 : vector<256x16xf32>
    %c0_7 = arith.constant 0 : index
    %c0_8 = arith.constant 0 : index
    %32 = vector.load %arg5[%c0_7, %c0_8] : memref<1x128xf32, #tpu.memory_space<vmem>>, vector<1x128xf32>
    %33 = vector.shape_cast %32 : vector<1x128xf32> to vector<1x128xf32>
    %34 = vector.broadcast %33 : vector<1x128xf32> to vector<256x128xf32>
    %35 = vector.extract_strided_slice %31 {offsets = [0, 0], sizes = [256, 1], strides = [1, 1]} : vector<256x16xf32> to vector<256x1xf32>
    %36 = vector.extract_strided_slice %2 {offsets = [0, 0], sizes = [1, 128], strides = [1, 1]} : vector<16x128xf32> to vector<1x128xf32>
    %37 = vector.broadcast %35 : vector<256x1xf32> to vector<256x128xf32>
    %38 = vector.broadcast %36 : vector<1x128xf32> to vector<256x128xf32>
    %39 = arith.mulf %37, %38 : vector<256x128xf32>
    %40 = arith.addf %34, %39 : vector<256x128xf32>
    %41 = vector.extract_strided_slice %31 {offsets = [0, 1], sizes = [256, 1], strides = [1, 1]} : vector<256x16xf32> to vector<256x1xf32>
    %42 = vector.extract_strided_slice %2 {offsets = [1, 0], sizes = [1, 128], strides = [1, 1]} : vector<16x128xf32> to vector<1x128xf32>
    %43 = vector.broadcast %41 : vector<256x1xf32> to vector<256x128xf32>
    %44 = vector.broadcast %42 : vector<1x128xf32> to vector<256x128xf32>
    %45 = arith.mulf %43, %44 : vector<256x128xf32>
    %46 = arith.addf %40, %45 : vector<256x128xf32>
    %47 = vector.extract_strided_slice %31 {offsets = [0, 2], sizes = [256, 1], strides = [1, 1]} : vector<256x16xf32> to vector<256x1xf32>
    %48 = vector.extract_strided_slice %2 {offsets = [2, 0], sizes = [1, 128], strides = [1, 1]} : vector<16x128xf32> to vector<1x128xf32>
    %49 = vector.broadcast %47 : vector<256x1xf32> to vector<256x128xf32>
    %50 = vector.broadcast %48 : vector<1x128xf32> to vector<256x128xf32>
    %51 = arith.mulf %49, %50 : vector<256x128xf32>
    %52 = arith.addf %46, %51 : vector<256x128xf32>
    %53 = vector.extract_strided_slice %31 {offsets = [0, 3], sizes = [256, 1], strides = [1, 1]} : vector<256x16xf32> to vector<256x1xf32>
    %54 = vector.extract_strided_slice %2 {offsets = [3, 0], sizes = [1, 128], strides = [1, 1]} : vector<16x128xf32> to vector<1x128xf32>
    %55 = vector.broadcast %53 : vector<256x1xf32> to vector<256x128xf32>
    %56 = vector.broadcast %54 : vector<1x128xf32> to vector<256x128xf32>
    %57 = arith.mulf %55, %56 : vector<256x128xf32>
    %58 = arith.addf %52, %57 : vector<256x128xf32>
    %59 = vector.extract_strided_slice %31 {offsets = [0, 4], sizes = [256, 1], strides = [1, 1]} : vector<256x16xf32> to vector<256x1xf32>
    %60 = vector.extract_strided_slice %2 {offsets = [4, 0], sizes = [1, 128], strides = [1, 1]} : vector<16x128xf32> to vector<1x128xf32>
    %61 = vector.broadcast %59 : vector<256x1xf32> to vector<256x128xf32>
    %62 = vector.broadcast %60 : vector<1x128xf32> to vector<256x128xf32>
    %63 = arith.mulf %61, %62 : vector<256x128xf32>
    %64 = arith.addf %58, %63 : vector<256x128xf32>
    %65 = vector.extract_strided_slice %31 {offsets = [0, 5], sizes = [256, 1], strides = [1, 1]} : vector<256x16xf32> to vector<256x1xf32>
    %66 = vector.extract_strided_slice %2 {offsets = [5, 0], sizes = [1, 128], strides = [1, 1]} : vector<16x128xf32> to vector<1x128xf32>
    %67 = vector.broadcast %65 : vector<256x1xf32> to vector<256x128xf32>
    %68 = vector.broadcast %66 : vector<1x128xf32> to vector<256x128xf32>
    %69 = arith.mulf %67, %68 : vector<256x128xf32>
    %70 = arith.addf %64, %69 : vector<256x128xf32>
    %71 = vector.extract_strided_slice %31 {offsets = [0, 6], sizes = [256, 1], strides = [1, 1]} : vector<256x16xf32> to vector<256x1xf32>
    %72 = vector.extract_strided_slice %2 {offsets = [6, 0], sizes = [1, 128], strides = [1, 1]} : vector<16x128xf32> to vector<1x128xf32>
    %73 = vector.broadcast %71 : vector<256x1xf32> to vector<256x128xf32>
    %74 = vector.broadcast %72 : vector<1x128xf32> to vector<256x128xf32>
    %75 = arith.mulf %73, %74 : vector<256x128xf32>
    %76 = arith.addf %70, %75 : vector<256x128xf32>
    %77 = vector.extract_strided_slice %31 {offsets = [0, 7], sizes = [256, 1], strides = [1, 1]} : vector<256x16xf32> to vector<256x1xf32>
    %78 = vector.extract_strided_slice %2 {offsets = [7, 0], sizes = [1, 128], strides = [1, 1]} : vector<16x128xf32> to vector<1x128xf32>
    %79 = vector.broadcast %77 : vector<256x1xf32> to vector<256x128xf32>
    %80 = vector.broadcast %78 : vector<1x128xf32> to vector<256x128xf32>
    %81 = arith.mulf %79, %80 : vector<256x128xf32>
    %82 = arith.addf %76, %81 : vector<256x128xf32>
    %83 = vector.extract_strided_slice %31 {offsets = [0, 8], sizes = [256, 1], strides = [1, 1]} : vector<256x16xf32> to vector<256x1xf32>
    %84 = vector.extract_strided_slice %2 {offsets = [8, 0], sizes = [1, 128], strides = [1, 1]} : vector<16x128xf32> to vector<1x128xf32>
    %85 = vector.broadcast %83 : vector<256x1xf32> to vector<256x128xf32>
    %86 = vector.broadcast %84 : vector<1x128xf32> to vector<256x128xf32>
    %87 = arith.mulf %85, %86 : vector<256x128xf32>
    %88 = arith.addf %82, %87 : vector<256x128xf32>
    %89 = vector.extract_strided_slice %31 {offsets = [0, 9], sizes = [256, 1], strides = [1, 1]} : vector<256x16xf32> to vector<256x1xf32>
    %90 = vector.extract_strided_slice %2 {offsets = [9, 0], sizes = [1, 128], strides = [1, 1]} : vector<16x128xf32> to vector<1x128xf32>
    %91 = vector.broadcast %89 : vector<256x1xf32> to vector<256x128xf32>
    %92 = vector.broadcast %90 : vector<1x128xf32> to vector<256x128xf32>
    %93 = arith.mulf %91, %92 : vector<256x128xf32>
    %94 = arith.addf %88, %93 : vector<256x128xf32>
    %95 = vector.extract_strided_slice %31 {offsets = [0, 10], sizes = [256, 1], strides = [1, 1]} : vector<256x16xf32> to vector<256x1xf32>
    %96 = vector.extract_strided_slice %2 {offsets = [10, 0], sizes = [1, 128], strides = [1, 1]} : vector<16x128xf32> to vector<1x128xf32>
    %97 = vector.broadcast %95 : vector<256x1xf32> to vector<256x128xf32>
    %98 = vector.broadcast %96 : vector<1x128xf32> to vector<256x128xf32>
    %99 = arith.mulf %97, %98 : vector<256x128xf32>
    %100 = arith.addf %94, %99 : vector<256x128xf32>
    %101 = vector.extract_strided_slice %31 {offsets = [0, 11], sizes = [256, 1], strides = [1, 1]} : vector<256x16xf32> to vector<256x1xf32>
    %102 = vector.extract_strided_slice %2 {offsets = [11, 0], sizes = [1, 128], strides = [1, 1]} : vector<16x128xf32> to vector<1x128xf32>
    %103 = vector.broadcast %101 : vector<256x1xf32> to vector<256x128xf32>
    %104 = vector.broadcast %102 : vector<1x128xf32> to vector<256x128xf32>
    %105 = arith.mulf %103, %104 : vector<256x128xf32>
    %106 = arith.addf %100, %105 : vector<256x128xf32>
    %107 = vector.extract_strided_slice %31 {offsets = [0, 12], sizes = [256, 1], strides = [1, 1]} : vector<256x16xf32> to vector<256x1xf32>
    %108 = vector.extract_strided_slice %2 {offsets = [12, 0], sizes = [1, 128], strides = [1, 1]} : vector<16x128xf32> to vector<1x128xf32>
    %109 = vector.broadcast %107 : vector<256x1xf32> to vector<256x128xf32>
    %110 = vector.broadcast %108 : vector<1x128xf32> to vector<256x128xf32>
    %111 = arith.mulf %109, %110 : vector<256x128xf32>
    %112 = arith.addf %106, %111 : vector<256x128xf32>
    %113 = vector.extract_strided_slice %31 {offsets = [0, 13], sizes = [256, 1], strides = [1, 1]} : vector<256x16xf32> to vector<256x1xf32>
    %114 = vector.extract_strided_slice %2 {offsets = [13, 0], sizes = [1, 128], strides = [1, 1]} : vector<16x128xf32> to vector<1x128xf32>
    %115 = vector.broadcast %113 : vector<256x1xf32> to vector<256x128xf32>
    %116 = vector.broadcast %114 : vector<1x128xf32> to vector<256x128xf32>
    %117 = arith.mulf %115, %116 : vector<256x128xf32>
    %118 = arith.addf %112, %117 : vector<256x128xf32>
    %119 = vector.extract_strided_slice %31 {offsets = [0, 14], sizes = [256, 1], strides = [1, 1]} : vector<256x16xf32> to vector<256x1xf32>
    %120 = vector.extract_strided_slice %2 {offsets = [14, 0], sizes = [1, 128], strides = [1, 1]} : vector<16x128xf32> to vector<1x128xf32>
    %121 = vector.broadcast %119 : vector<256x1xf32> to vector<256x128xf32>
    %122 = vector.broadcast %120 : vector<1x128xf32> to vector<256x128xf32>
    %123 = arith.mulf %121, %122 : vector<256x128xf32>
    %124 = arith.addf %118, %123 : vector<256x128xf32>
    %125 = vector.extract_strided_slice %31 {offsets = [0, 15], sizes = [256, 1], strides = [1, 1]} : vector<256x16xf32> to vector<256x1xf32>
    %126 = vector.extract_strided_slice %2 {offsets = [15, 0], sizes = [1, 128], strides = [1, 1]} : vector<16x128xf32> to vector<1x128xf32>
    %127 = vector.broadcast %125 : vector<256x1xf32> to vector<256x128xf32>
    %128 = vector.broadcast %126 : vector<1x128xf32> to vector<256x128xf32>
    %129 = arith.mulf %127, %128 : vector<256x128xf32>
    %130 = arith.addf %124, %129 : vector<256x128xf32>
    %131 = math.tanh %130 : vector<256x128xf32>
    %c0_9 = arith.constant 0 : index
    %c0_10 = arith.constant 0 : index
    %132 = vector.load %arg6[%c0_9, %c0_10] : memref<256x128xf32, #tpu.memory_space<vmem>>, vector<256x128xf32>
    tpu.vector_store %arg6[%c0_9, %c0_10], %131 {strides = array<i32>} : memref<256x128xf32, #tpu.memory_space<vmem>>, vector<256x128xf32>,
    return
  }
  func.func @transform_0(%arg0: i32) -> (i32, i32) {
    %c0_i32 = arith.constant 0 : i32
    %c0_i32_0 = arith.constant 0 : i32
    return %arg0, %c0_i32 : i32, i32
  }
  func.func @transform_1(%arg0: i32) -> (i32, i32) {
    %c0_i32 = arith.constant 0 : i32
    %c0_i32_0 = arith.constant 0 : i32
    %c0_i32_1 = arith.constant 0 : i32
    return %c0_i32, %c0_i32_0 : i32, i32
  }
  func.func @transform_2(%arg0: i32) -> (i32, i32) {
    %c0_i32 = arith.constant 0 : i32
    %c0_i32_0 = arith.constant 0 : i32
    %c0_i32_1 = arith.constant 0 : i32
    return %c0_i32, %c0_i32_0 : i32, i32
  }
  func.func @transform_3(%arg0: i32) -> (i32, i32) {
    %c0_i32 = arith.constant 0 : i32
    %c0_i32_0 = arith.constant 0 : i32
    %c0_i32_1 = arith.constant 0 : i32
    return %c0_i32, %c0_i32_0 : i32, i32
  }
  func.func @transform_4(%arg0: i32) -> (i32, i32) {
    %c0_i32 = arith.constant 0 : i32
    %c0_i32_0 = arith.constant 0 : i32
    %c0_i32_1 = arith.constant 0 : i32
    return %c0_i32, %c0_i32_0 : i32, i32
  }
  func.func @transform_5(%arg0: i32) -> (i32, i32) {
    %c0_i32 = arith.constant 0 : i32
    %c0_i32_0 = arith.constant 0 : i32
    return %arg0, %c0_i32 : i32, i32
  }
}

</mosaic_0001>

<llo_original>
// kernel: tpu_custom_call.1
$region0: #{tpu_custom_call.1}
  #allocation0 [shape = 'u32[]', space=smem, size = 0x4, offset = 0x4, fixed_abs, tag = 'smem constant byte address 0x4 - core index']
  #allocation1 [shape = 'u32[144,128]{1,0:T(1,128)}', space=vmem, size = 0x12000, scoped, tag = 'internal scratch']
  %s0 = inlined_call_operand.vmem [shape: f32[1024,4], index: 0, kind: input, shape index: {}]
  %s1 = inlined_call_operand.vmem [shape: f32[4,16], index: 1, kind: input, shape index: {}]
  %s2 = inlined_call_operand.vmem [shape: f32[1,16], index: 2, kind: input, shape index: {}]
  %s3 = inlined_call_operand.vmem [shape: f32[16,128], index: 3, kind: input, shape index: {}]
  %s4 = inlined_call_operand.vmem [shape: f32[1,128], index: 4, kind: input, shape index: {}]
  %s5 = inlined_call_operand.hbm [shape: f32[1024,128], index: 5, kind: output, shape index: {}]
  %s6 = sld [smem:[#allocation0]]
  $region53: #{tpu_custom_call.1} parent=0
    _
  %s8 = ssub.s32 1, %s6
  %s9 = scalar_select 0, %s8, %s6
  $region1: #{tpu_custom_call.1} parent=0
    #allocation2 [shape = 'u8[262144]{0}', space=vmem, size = 0x40000, scoped, tag = 'output window, operand 0']
    #allocation3 [shape = 's32[2]{0}', space=sflag, size = 0x8, scoped, tag = 'scoped memory for tpu_custom_call.1']
    %10 = vsyncpa [#allocation3], 0
    %s11 = scalar_lea.sflag [#allocation3], 1
    %12 = vsyncpa %s11, 0
    loop: start=0, step=1, limit=6
    $region2: #{tpu_custom_call.1} parent=1 // loop_pre_header
      _
    $region3: #{tpu_custom_call.1} parent=1 // loop_header
      %s14 = sphi 0, %s18
      %p15 = scmp.ge.s32.totalorder %s14, 6
      %s24 = sphi 0, %s26
      %s27 = sphi 0, %s24
      %s28 = sphi 0, %s27
      %s44 = sphi 0, %s28
      %s48 = sphi 0, %s48
      %s50 = sphi 0, %s48
      %s51 = sphi 0, %s50
      %s65 = sphi 0, %s51
      %s69 = sphi 0, %s69
      %s71 = sphi 0, %s69
      %s72 = sphi 0, %s71
      %s86 = sphi 0, %s72
      %s90 = sphi 0, %s90
      %s92 = sphi 0, %s90
      %s93 = sphi 0, %s92
      %s107 = sphi 0, %s93
      %s111 = sphi 0, %s111
      %s113 = sphi 0, %s111
      %s114 = sphi 0, %s113
      %s128 = sphi 0, %s114
      %s134 = sphi 0, %s136
      %s137 = sphi 0, %s134
      %s138 = sphi 0, %s137
      %s154 = sphi 0, %s138
    $region4: #{tpu_custom_call.1} parent=1 // loop_header_branch
      %17 = sbr.rel (%p15) target = $region8
    $region5: #{tpu_custom_call.1} parent=1 // loop_body
      %s19 = ssub.s32 %s14, 1
      %s20 = ssub.s32 %s14, 2
      %s21 = sadd.s32 %s14, 1
      %s22 = ssub.s32 %s14, %s21
      %p23 = scmp.eq.s32.totalorder %s22, 0
      %s25 = sadd.s32 %s24, 1
      %s26 = scalar_select %p23, %s24, %s25
      %p29 = pneg %p23
      %p30 = scmp.eq.s32.totalorder %s14, 3
      %p31 = por %p29, %p30
      %p32 = scmp.ne.s32.totalorder %s24, %s27
      %p33 = scmp.eq.s32.totalorder %s14, 0
      %p34 = por %p32, %p33
      %p35 = scmp.ne.s32.totalorder %s24, %s27
      %p36 = scmp.eq.s32.totalorder %s19, 3
      %p37 = por %p35, %p36
      %p38 = scmp.ne.s32.totalorder %s27, %s28
      %p39 = scmp.eq.s32.totalorder %s19, 0
      %p40 = por %p38, %p39
      %p41 = scmp.ne.s32.totalorder %s27, %s28
      %p42 = scmp.eq.s32.totalorder %s20, 3
      %p43 = por %p41, %p42
      %p45 = scmp.ne.s32.totalorder %s28, %s44
      %p46 = scmp.eq.s32.totalorder %s20, 0
      %p47 = por %p45, %p46
      %s49 = sadd.s32 %s48, 1
      %p52 = scmp.eq.s32.totalorder %s14, 3
      %p53 = scmp.ne.s32.totalorder %s48, %s50
      %p54 = scmp.eq.s32.totalorder %s14, 0
      %p55 = por %p53, %p54
      %p56 = scmp.ne.s32.totalorder %s48, %s50
      %p57 = scmp.eq.s32.totalorder %s19, 3
      %p58 = por %p56, %p57
      %p59 = scmp.ne.s32.totalorder %s50, %s51
      %p60 = scmp.eq.s32.totalorder %s19, 0
      %p61 = por %p59, %p60
      %p62 = scmp.ne.s32.totalorder %s50, %s51
      %p63 = scmp.eq.s32.totalorder %s20, 3
      %p64 = por %p62, %p63
      %p66 = scmp.ne.s32.totalorder %s51, %s65
      %p67 = scmp.eq.s32.totalorder %s20, 0
      %p68 = por %p66, %p67
      %s70 = sadd.s32 %s69, 1
      %p73 = scmp.eq.s32.totalorder %s14, 3
      %p74 = scmp.ne.s32.totalorder %s69, %s71
      %p75 = scmp.eq.s32.totalorder %s14, 0
      %p76 = por %p74, %p75
      %p77 = scmp.ne.s32.totalorder %s69, %s71
      %p78 = scmp.eq.s32.totalorder %s19, 3
      %p79 = por %p77, %p78
      %p80 = scmp.ne.s32.totalorder %s71, %s72
      %p81 = scmp.eq.s32.totalorder %s19, 0
      %p82 = por %p80, %p81
      %p83 = scmp.ne.s32.totalorder %s71, %s72
      %p84 = scmp.eq.s32.totalorder %s20, 3
      %p85 = por %p83, %p84
      %p87 = scmp.ne.s32.totalorder %s72, %s86
      %p88 = scmp.eq.s32.totalorder %s20, 0
      %p89 = por %p87, %p88
      %s91 = sadd.s32 %s90, 1
      %p94 = scmp.eq.s32.totalorder %s14, 3
      %p95 = scmp.ne.s32.totalorder %s90, %s92
      %p96 = scmp.eq.s32.totalorder %s14, 0
      %p97 = por %p95, %p96
      %p98 = scmp.ne.s32.totalorder %s90, %s92
      %p99 = scmp.eq.s32.totalorder %s19, 3
      %p100 = por %p98, %p99
      %p101 = scmp.ne.s32.totalorder %s92, %s93
      %p102 = scmp.eq.s32.totalorder %s19, 0
      %p103 = por %p101, %p102
      %p104 = scmp.ne.s32.totalorder %s92, %s93
      %p105 = scmp.eq.s32.totalorder %s20, 3
      %p106 = por %p104, %p105
      %p108 = scmp.ne.s32.totalorder %s93, %s107
      %p109 = scmp.eq.s32.totalorder %s20, 0
      %p110 = por %p108, %p109
      %s112 = sadd.s32 %s111, 1
      %p115 = scmp.eq.s32.totalorder %s14, 3
      %p116 = scmp.ne.s32.totalorder %s111, %s113
      %p117 = scmp.eq.s32.totalorder %s14, 0
      %p118 = por %p116, %p117
      %p119 = scmp.ne.s32.totalorder %s111, %s113
      %p120 = scmp.eq.s32.totalorder %s19, 3
      %p121 = por %p119, %p120
      %p122 = scmp.ne.s32.totalorder %s113, %s114
      %p123 = scmp.eq.s32.totalorder %s19, 0
      %p124 = por %p122, %p123
      %p125 = scmp.ne.s32.totalorder %s113, %s114
      %p126 = scmp.eq.s32.totalorder %s20, 3
      %p127 = por %p125, %p126
      %p129 = scmp.ne.s32.totalorder %s114, %s128
      %p130 = scmp.eq.s32.totalorder %s20, 0
      %p131 = por %p129, %p130
      %s132 = ssub.s32 %s14, %s21
      %p133 = scmp.eq.s32.totalorder %s132, 0
      %s135 = sadd.s32 %s134, 1
      %s136 = scalar_select %p133, %s134, %s135
      %p139 = pneg %p133
      %p140 = scmp.eq.s32.totalorder %s14, 3
      %p141 = por %p139, %p140
      %p142 = scmp.ne.s32.totalorder %s134, %s137
      %p143 = scmp.eq.s32.totalorder %s14, 0
      %p144 = por %p142, %p143
      %p145 = scmp.ne.s32.totalorder %s134, %s137
      %p146 = scmp.eq.s32.totalorder %s19, 3
      %p147 = por %p145, %p146
      %p148 = scmp.ne.s32.totalorder %s137, %s138
      %p149 = scmp.eq.s32.totalorder %s19, 0
      %p150 = por %p148, %p149
      %p151 = scmp.ne.s32.totalorder %s137, %s138
      %p152 = scmp.eq.s32.totalorder %s20, 3
      %p153 = por %p151, %p152
      %p155 = scmp.ne.s32.totalorder %s138, %s154
      %p156 = scmp.eq.s32.totalorder %s20, 0
      %p157 = por %p155, %p156
      %p158 = scmp.le.s32.totalorder 1, %s14
      %p159 = scmp.lt.s32.totalorder %s14, 5
      %p160 = pnand %p158, %p159
      %p161 = pneg %p160
      // Predicated region
      $region9: #{tpu_custom_call.1} parent=5 // pred_check
        _
      $region10: #{tpu_custom_call.1} parent=5 // pred_check_branch
        %163 = sbr.rel (%p160) target = $region12
      $region11: #{tpu_custom_call.1} parent=5 // pred_region
        %s164 = ssub.s32 %s14, 1
        // Predicated region
        $region13: #{tpu_custom_call.1} parent=11 // pred_check
          %p165 = pneg %p61
        $region14: #{tpu_custom_call.1} parent=11 // pred_check_branch
          %167 = sbr.rel (%p165) target = $region16
        $region15: #{tpu_custom_call.1} parent=11 // pred_region
          _
        $region16: #{tpu_custom_call.1} parent=11 // pred_fallthru
          _
        // Predicated region
        $region17: #{tpu_custom_call.1} parent=11 // pred_check
          %p168 = pneg %p82
        $region18: #{tpu_custom_call.1} parent=11 // pred_check_branch
          %170 = sbr.rel (%p168) target = $region20
        $region19: #{tpu_custom_call.1} parent=11 // pred_region
          _
        $region20: #{tpu_custom_call.1} parent=11 // pred_fallthru
          _
        // Predicated region
        $region21: #{tpu_custom_call.1} parent=11 // pred_check
          %p171 = pneg %p103
        $region22: #{tpu_custom_call.1} parent=11 // pred_check_branch
          %173 = sbr.rel (%p171) target = $region24
        $region23: #{tpu_custom_call.1} parent=11 // pred_region
          _
        $region24: #{tpu_custom_call.1} parent=11 // pred_fallthru
          _
        // Predicated region
        $region25: #{tpu_custom_call.1} parent=11 // pred_check
          %p174 = pneg %p124
        $region26: #{tpu_custom_call.1} parent=11 // pred_check_branch
          %176 = sbr.rel (%p174) target = $region28
        $region27: #{tpu_custom_call.1} parent=11 // pred_region
          _
        $region28: #{tpu_custom_call.1} parent=11 // pred_fallthru
          _
      $region12: #{tpu_custom_call.1} parent=5 // pred_fallthru
        _
      %p177 = scmp.lt.s32.totalorder %s14, 4
      // Predicated region
      $region29: #{tpu_custom_call.1} parent=5 // pred_check
        %p178 = pneg %p177
      $region30: #{tpu_custom_call.1} parent=5 // pred_check_branch
        %180 = sbr.rel (%p178) target = $region32
      $region31: #{tpu_custom_call.1} parent=5 // pred_region
        // Predicated region
        $region33: #{tpu_custom_call.1} parent=31 // pred_check
          %p181 = pneg %p34
        $region34: #{tpu_custom_call.1} parent=31 // pred_check_branch
          %183 = sbr.rel (%p181) target = $region36
        $region35: #{tpu_custom_call.1} parent=31 // pred_region
          %s184 = smul.u32 32, %s14
          %p185 = scmp.lt.s32.totalorder %s184, 127
          %s186 = scalar_select %p185, %s184, 127
          %s187 = smul.addr %s186, 8
          %s188 = scalar_lea.vmem %s0, %s187
          %s189 = smul.u32 32, %s14
        $region36: #{tpu_custom_call.1} parent=31 // pred_fallthru
          _
      $region32: #{tpu_custom_call.1} parent=5 // pred_fallthru
        _
      %p190 = scmp.le.s32.totalorder 1, %s14
      %p191 = scmp.lt.s32.totalorder %s14, 5
      %p192 = pnand %p190, %p191
      %p193 = pneg %p192
      // Predicated region
      $region37: #{tpu_custom_call.1} parent=5 // pred_check
        _
      $region38: #{tpu_custom_call.1} parent=5 // pred_check_branch
        %195 = sbr.rel (%p192) target = $region40
      $region39: #{tpu_custom_call.1} parent=5 // pred_region
        %s196 = ssub.s32 %s14, 1
        %s197 = smul.u32 32, %s19
        %p198 = scmp.lt.s32.totalorder %s197, 127
        %s199 = scalar_select %p198, %s197, 127
        %s200 = smul.addr %s199, 8
        %s201 = scalar_lea.vmem %s0, %s200
        %p202 = pneg %p40
        %p203 = pneg %p37
        %p204 = pneg %p61
        %p205 = pneg %p58
        %p206 = pneg %p82
        %p207 = pneg %p79
        %p208 = pneg %p103
        %p209 = pneg %p100
        %p210 = pneg %p124
        %p211 = pneg %p121
        %p212 = pneg %p150
        %p213 = pneg %p147
        %s214 = sand.u32 %s137, 1
        %s215 = scalar_lea.sflag [#allocation3], %s214
        %s216 = sand.u32 %s137, 1
        %s217 = smul.addr %s216, 256
        %s218 = scalar_lea.vmem [#allocation2], %s217
        %s219 = smul.u32 32, %s19
        %p220 = scmp.lt.s32.totalorder %s219, 127
        %s221 = scalar_select %p220, %s219, 127
        %s222 = smul.addr %s221, 8
        %s223 = scalar_lea.vmem %s0, %s222
        %s224 = smul.u32 32, %s19
        %s225 = smul.u32 32, %s19
        %v226 = vld [vmem:[%s223] sm:$0xff]
        %v227 = vld [vmem:[%s223 + $0x8] sm:$0xff]
        %v228 = vld [vmem:[%s223 + $0x10] sm:$0xff]
        %v229 = vld [vmem:[%s223 + $0x18] sm:$0xff]
        %v230 = vld [vmem:[%s223 + $0x20] sm:$0xff]
        %v231 = vld [vmem:[%s223 + $0x28] sm:$0xff]
        %v232 = vld [vmem:[%s223 + $0x30] sm:$0xff]
        %v233 = vld [vmem:[%s223 + $0x38] sm:$0xff]
        %v234 = vld [vmem:[%s223 + $0x40] sm:$0xff]
        %v235 = vld [vmem:[%s223 + $0x48] sm:$0xff]
        %v236 = vld [vmem:[%s223 + $0x50] sm:$0xff]
        %v237 = vld [vmem:[%s223 + $0x58] sm:$0xff]
        %v238 = vld [vmem:[%s223 + $0x60] sm:$0xff]
        %v239 = vld [vmem:[%s223 + $0x68] sm:$0xff]
        %v240 = vld [vmem:[%s223 + $0x70] sm:$0xff]
        %v241 = vld [vmem:[%s223 + $0x78] sm:$0xff]
        %v242 = vld [vmem:[%s223 + $0x80] sm:$0xff]
        %v243 = vld [vmem:[%s223 + $0x88] sm:$0xff]
        %v244 = vld [vmem:[%s223 + $0x90] sm:$0xff]
        %v245 = vld [vmem:[%s223 + $0x98] sm:$0xff]
        %v246 = vld [vmem:[%s223 + $0xa0] sm:$0xff]
        %v247 = vld [vmem:[%s223 + $0xa8] sm:$0xff]
        %v248 = vld [vmem:[%s223 + $0xb0] sm:$0xff]
        %v249 = vld [vmem:[%s223 + $0xb8] sm:$0xff]
        %v250 = vld [vmem:[%s223 + $0xc0] sm:$0xff]
        %v251 = vld [vmem:[%s223 + $0xc8] sm:$0xff]
        %v252 = vld [vmem:[%s223 + $0xd0] sm:$0xff]
        %v253 = vld [vmem:[%s223 + $0xd8] sm:$0xff]
        %v254 = vld [vmem:[%s223 + $0xe0] sm:$0xff]
        %v255 = vld [vmem:[%s223 + $0xe8] sm:$0xff]
        %v256 = vld [vmem:[%s223 + $0xf0] sm:$0xff]
        %v257 = vld [vmem:[%s223 + $0xf8] sm:$0xff]
        %v258 = vld [vmem:[%s1] sm:$0xf]
        %v259 = vld [vmem:[%s3] sm:$0xff]
        %v260 = vld [vmem:[%s3 + $0x8] sm:$0xff]
        %v261 = vld [vmem:[%s2] sm:$0x1]
        %v263 = vlaneseq
        %v264 = vshrl.u32 %v263, 7
        %v265 = vsub.s32 0, %v264
        %v266 = vrot.slane %v261, %v265
        %269 = vset.pattern.permute.xlu0 0
        %270 = vperm.xlu0 %269, %v226
        %v271 = vpop.permute.xlu0 %270
        %274 = vset.pattern.permute.xlu0 0
        %275 = vperm.xlu0 %274, %v227
        %v276 = vpop.permute.xlu0 %275
        %279 = vset.pattern.permute.xlu0 0
        %280 = vperm.xlu0 %279, %v228
        %v281 = vpop.permute.xlu0 %280
        %284 = vset.pattern.permute.xlu0 0
        %285 = vperm.xlu0 %284, %v229
        %v286 = vpop.permute.xlu0 %285
        %289 = vset.pattern.permute.xlu0 0
        %290 = vperm.xlu0 %289, %v230
        %v291 = vpop.permute.xlu0 %290
        %294 = vset.pattern.permute.xlu0 0
        %295 = vperm.xlu0 %294, %v231
        %v296 = vpop.permute.xlu0 %295
        %299 = vset.pattern.permute.xlu0 0
        %300 = vperm.xlu0 %299, %v232
        %v301 = vpop.permute.xlu0 %300
        %304 = vset.pattern.permute.xlu0 0
        %305 = vperm.xlu0 %304, %v233
        %v306 = vpop.permute.xlu0 %305
        %309 = vset.pattern.permute.xlu0 0
        %310 = vperm.xlu0 %309, %v234
        %v311 = vpop.permute.xlu0 %310
        %314 = vset.pattern.permute.xlu0 0
        %315 = vperm.xlu0 %314, %v235
        %v316 = vpop.permute.xlu0 %315
        %319 = vset.pattern.permute.xlu0 0
        %320 = vperm.xlu0 %319, %v236
        %v321 = vpop.permute.xlu0 %320
        %324 = vset.pattern.permute.xlu0 0
        %325 = vperm.xlu0 %324, %v237
        %v326 = vpop.permute.xlu0 %325
        %329 = vset.pattern.permute.xlu0 0
        %330 = vperm.xlu0 %329, %v238
        %v331 = vpop.permute.xlu0 %330
        %334 = vset.pattern.permute.xlu0 0
        %335 = vperm.xlu0 %334, %v239
        %v336 = vpop.permute.xlu0 %335
        %339 = vset.pattern.permute.xlu0 0
        %340 = vperm.xlu0 %339, %v240
        %v341 = vpop.permute.xlu0 %340
        %344 = vset.pattern.permute.xlu0 0
        %345 = vperm.xlu0 %344, %v241
        %v346 = vpop.permute.xlu0 %345
        %349 = vset.pattern.permute.xlu0 0
        %350 = vperm.xlu0 %349, %v242
        %v351 = vpop.permute.xlu0 %350
        %354 = vset.pattern.permute.xlu0 0
        %355 = vperm.xlu0 %354, %v243
        %v356 = vpop.permute.xlu0 %355
        %359 = vset.pattern.permute.xlu0 0
        %360 = vperm.xlu0 %359, %v244
        %v361 = vpop.permute.xlu0 %360
        %364 = vset.pattern.permute.xlu0 0
        %365 = vperm.xlu0 %364, %v245
        %v366 = vpop.permute.xlu0 %365
        %369 = vset.pattern.permute.xlu0 0
        %370 = vperm.xlu0 %369, %v246
        %v371 = vpop.permute.xlu0 %370
        %374 = vset.pattern.permute.xlu0 0
        %375 = vperm.xlu0 %374, %v247
        %v376 = vpop.permute.xlu0 %375
        %379 = vset.pattern.permute.xlu0 0
        %380 = vperm.xlu0 %379, %v248
        %v381 = vpop.permute.xlu0 %380
        %384 = vset.pattern.permute.xlu0 0
        %385 = vperm.xlu0 %384, %v249
        %v386 = vpop.permute.xlu0 %385
        %389 = vset.pattern.permute.xlu0 0
        %390 = vperm.xlu0 %389, %v250
        %v391 = vpop.permute.xlu0 %390
        %394 = vset.pattern.permute.xlu0 0
        %395 = vperm.xlu0 %394, %v251
        %v396 = vpop.permute.xlu0 %395
        %399 = vset.pattern.permute.xlu0 0
        %400 = vperm.xlu0 %399, %v252
        %v401 = vpop.permute.xlu0 %400
        %404 = vset.pattern.permute.xlu0 0
        %405 = vperm.xlu0 %404, %v253
        %v406 = vpop.permute.xlu0 %405
        %409 = vset.pattern.permute.xlu0 0
        %410 = vperm.xlu0 %409, %v254
        %v411 = vpop.permute.xlu0 %410
        %414 = vset.pattern.permute.xlu0 0
        %415 = vperm.xlu0 %414, %v255
        %v416 = vpop.permute.xlu0 %415
        %419 = vset.pattern.permute.xlu0 0
        %420 = vperm.xlu0 %419, %v256
        %v421 = vpop.permute.xlu0 %420
        %424 = vset.pattern.permute.xlu0 0
        %425 = vperm.xlu0 %424, %v257
        %v426 = vpop.permute.xlu0 %425
        %v428 = vlaneseq
        %v429 = vshrl.u32 %v428, 7
        %v430 = vsub.s32 0, %v429
        %v431 = vrot.slane %v258, %v430
        %v432 = vmul.f32 %v271, %v431
        %v433 = vmul.f32 %v276, %v431
        %v434 = vmul.f32 %v281, %v431
        %v435 = vmul.f32 %v286, %v431
        %v436 = vmul.f32 %v291, %v431
        %v437 = vmul.f32 %v296, %v431
        %v438 = vmul.f32 %v301, %v431
        %v439 = vmul.f32 %v306, %v431
        %v440 = vmul.f32 %v311, %v431
        %v441 = vmul.f32 %v316, %v431
        %v442 = vmul.f32 %v321, %v431
        %v443 = vmul.f32 %v326, %v431
        %v444 = vmul.f32 %v331, %v431
        %v445 = vmul.f32 %v336, %v431
        %v446 = vmul.f32 %v341, %v431
        %v447 = vmul.f32 %v346, %v431
        %v448 = vmul.f32 %v351, %v431
        %v449 = vmul.f32 %v356, %v431
        %v450 = vmul.f32 %v361, %v431
        %v451 = vmul.f32 %v366, %v431
        %v452 = vmul.f32 %v371, %v431
        %v453 = vmul.f32 %v376, %v431
        %v454 = vmul.f32 %v381, %v431
        %v455 = vmul.f32 %v386, %v431
        %v456 = vmul.f32 %v391, %v431
        %v457 = vmul.f32 %v396, %v431
        %v458 = vmul.f32 %v401, %v431
        %v459 = vmul.f32 %v406, %v431
        %v460 = vmul.f32 %v411, %v431
        %v461 = vmul.f32 %v416, %v431
        %v462 = vmul.f32 %v421, %v431
        %v463 = vmul.f32 %v426, %v431
        %v464 = vadd.f32 %v266, %v432
        %v465 = vadd.f32 %v266, %v433
        %v466 = vadd.f32 %v266, %v434
        %v467 = vadd.f32 %v266, %v435
        %v468 = vadd.f32 %v266, %v436
        %v469 = vadd.f32 %v266, %v437
        %v470 = vadd.f32 %v266, %v438
        %v471 = vadd.f32 %v266, %v439
        %v472 = vadd.f32 %v266, %v440
        %v473 = vadd.f32 %v266, %v441
        %v474 = vadd.f32 %v266, %v442
        %v475 = vadd.f32 %v266, %v443
        %v476 = vadd.f32 %v266, %v444
        %v477 = vadd.f32 %v266, %v445
        %v478 = vadd.f32 %v266, %v446
        %v479 = vadd.f32 %v266, %v447
        %v480 = vadd.f32 %v266, %v448
        %v481 = vadd.f32 %v266, %v449
        %v482 = vadd.f32 %v266, %v450
        %v483 = vadd.f32 %v266, %v451
        %v484 = vadd.f32 %v266, %v452
        %v485 = vadd.f32 %v266, %v453
        %v486 = vadd.f32 %v266, %v454
        %v487 = vadd.f32 %v266, %v455
        %v488 = vadd.f32 %v266, %v456
        %v489 = vadd.f32 %v266, %v457
        %v490 = vadd.f32 %v266, %v458
        %v491 = vadd.f32 %v266, %v459
        %v492 = vadd.f32 %v266, %v460
        %v493 = vadd.f32 %v266, %v461
        %v494 = vadd.f32 %v266, %v462
        %v495 = vadd.f32 %v266, %v463
        %496 = vset.pattern.permute.xlu0 1
        %497 = vperm.xlu0 %496, %v226
        %v498 = vpop.permute.xlu0 %497
        %500 = vset.pattern.permute.xlu0 1
        %501 = vperm.xlu0 %500, %v227
        %v502 = vpop.permute.xlu0 %501
        %504 = vset.pattern.permute.xlu0 1
        %505 = vperm.xlu0 %504, %v228
        %v506 = vpop.permute.xlu0 %505
        %508 = vset.pattern.permute.xlu0 1
        %509 = vperm.xlu0 %508, %v229
        %v510 = vpop.permute.xlu0 %509
        %512 = vset.pattern.permute.xlu0 1
        %513 = vperm.xlu0 %512, %v230
        %v514 = vpop.permute.xlu0 %513
        %516 = vset.pattern.permute.xlu0 1
        %517 = vperm.xlu0 %516, %v231
        %v518 = vpop.permute.xlu0 %517
        %520 = vset.pattern.permute.xlu0 1
        %521 = vperm.xlu0 %520, %v232
        %v522 = vpop.permute.xlu0 %521
        %524 = vset.pattern.permute.xlu0 1
        %525 = vperm.xlu0 %524, %v233
        %v526 = vpop.permute.xlu0 %525
        %528 = vset.pattern.permute.xlu0 1
        %529 = vperm.xlu0 %528, %v234
        %v530 = vpop.permute.xlu0 %529
        %532 = vset.pattern.permute.xlu0 1
        %533 = vperm.xlu0 %532, %v235
        %v534 = vpop.permute.xlu0 %533
        %536 = vset.pattern.permute.xlu0 1
        %537 = vperm.xlu0 %536, %v236
        %v538 = vpop.permute.xlu0 %537
        %540 = vset.pattern.permute.xlu0 1
        %541 = vperm.xlu0 %540, %v237
        %v542 = vpop.permute.xlu0 %541
        %544 = vset.pattern.permute.xlu0 1
        %545 = vperm.xlu0 %544, %v238
        %v546 = vpop.permute.xlu0 %545
        %548 = vset.pattern.permute.xlu0 1
        %549 = vperm.xlu0 %548, %v239
        %v550 = vpop.permute.xlu0 %549
        %552 = vset.pattern.permute.xlu0 1
        %553 = vperm.xlu0 %552, %v240
        %v554 = vpop.permute.xlu0 %553
        %556 = vset.pattern.permute.xlu0 1
        %557 = vperm.xlu0 %556, %v241
        %v558 = vpop.permute.xlu0 %557
        %560 = vset.pattern.permute.xlu0 1
        %561 = vperm.xlu0 %560, %v242
        %v562 = vpop.permute.xlu0 %561
        %564 = vset.pattern.permute.xlu0 1
        %565 = vperm.xlu0 %564, %v243
        %v566 = vpop.permute.xlu0 %565
        %568 = vset.pattern.permute.xlu0 1
        %569 = vperm.xlu0 %568, %v244
        %v570 = vpop.permute.xlu0 %569
        %572 = vset.pattern.permute.xlu0 1
        %573 = vperm.xlu0 %572, %v245
        %v574 = vpop.permute.xlu0 %573
        %576 = vset.pattern.permute.xlu0 1
        %577 = vperm.xlu0 %576, %v246
        %v578 = vpop.permute.xlu0 %577
        %580 = vset.pattern.permute.xlu0 1
        %581 = vperm.xlu0 %580, %v247
        %v582 = vpop.permute.xlu0 %581
        %584 = vset.pattern.permute.xlu0 1
        %585 = vperm.xlu0 %584, %v248
        %v586 = vpop.permute.xlu0 %585
        %588 = vset.pattern.permute.xlu0 1
        %589 = vperm.xlu0 %588, %v249
        %v590 = vpop.permute.xlu0 %589
        %592 = vset.pattern.permute.xlu0 1
        %593 = vperm.xlu0 %592, %v250
        %v594 = vpop.permute.xlu0 %593
        %596 = vset.pattern.permute.xlu0 1
        %597 = vperm.xlu0 %596, %v251
        %v598 = vpop.permute.xlu0 %597
        %600 = vset.pattern.permute.xlu0 1
        %601 = vperm.xlu0 %600, %v252
        %v602 = vpop.permute.xlu0 %601
        %604 = vset.pattern.permute.xlu0 1
        %605 = vperm.xlu0 %604, %v253
        %v606 = vpop.permute.xlu0 %605
        %608 = vset.pattern.permute.xlu0 1
        %609 = vperm.xlu0 %608, %v254
        %v610 = vpop.permute.xlu0 %609
        %612 = vset.pattern.permute.xlu0 1
        %613 = vperm.xlu0 %612, %v255
        %v614 = vpop.permute.xlu0 %613
        %616 = vset.pattern.permute.xlu0 1
        %617 = vperm.xlu0 %616, %v256
        %v618 = vpop.permute.xlu0 %617
        %620 = vset.pattern.permute.xlu0 1
        %621 = vperm.xlu0 %620, %v257
        %v622 = vpop.permute.xlu0 %621
        %v624 = vlaneseq
        %v625 = vshrl.u32 %v624, 7
        %v626 = vsub.s32 1, %v625
        %v627 = vrot.slane %v258, %v626
        %v628 = vmul.f32 %v498, %v627
        %v629 = vmul.f32 %v502, %v627
        %v630 = vmul.f32 %v506, %v627
        %v631 = vmul.f32 %v510, %v627
        %v632 = vmul.f32 %v514, %v627
        %v633 = vmul.f32 %v518, %v627
        %v634 = vmul.f32 %v522, %v627
        %v635 = vmul.f32 %v526, %v627
        %v636 = vmul.f32 %v530, %v627
        %v637 = vmul.f32 %v534, %v627
        %v638 = vmul.f32 %v538, %v627
        %v639 = vmul.f32 %v542, %v627
        %v640 = vmul.f32 %v546, %v627
        %v641 = vmul.f32 %v550, %v627
        %v642 = vmul.f32 %v554, %v627
        %v643 = vmul.f32 %v558, %v627
        %v644 = vmul.f32 %v562, %v627
        %v645 = vmul.f32 %v566, %v627
        %v646 = vmul.f32 %v570, %v627
        %v647 = vmul.f32 %v574, %v627
        %v648 = vmul.f32 %v578, %v627
        %v649 = vmul.f32 %v582, %v627
        %v650 = vmul.f32 %v586, %v627
        %v651 = vmul.f32 %v590, %v627
        %v652 = vmul.f32 %v594, %v627
        %v653 = vmul.f32 %v598, %v627
        %v654 = vmul.f32 %v602, %v627
        %v655 = vmul.f32 %v606, %v627
        %v656 = vmul.f32 %v610, %v627
        %v657 = vmul.f32 %v614, %v627
        %v658 = vmul.f32 %v618, %v627
        %v659 = vmul.f32 %v622, %v627
        %v660 = vadd.f32 %v464, %v628
        %v661 = vadd.f32 %v465, %v629
        %v662 = vadd.f32 %v466, %v630
        %v663 = vadd.f32 %v467, %v631
        %v664 = vadd.f32 %v468, %v632
        %v665 = vadd.f32 %v469, %v633
        %v666 = vadd.f32 %v470, %v634
        %v667 = vadd.f32 %v471, %v635
        %v668 = vadd.f32 %v472, %v636
        %v669 = vadd.f32 %v473, %v637
        %v670 = vadd.f32 %v474, %v638
        %v671 = vadd.f32 %v475, %v639
        %v672 = vadd.f32 %v476, %v640
        %v673 = vadd.f32 %v477, %v641
        %v674 = vadd.f32 %v478, %v642
        %v675 = vadd.f32 %v479, %v643
        %v676 = vadd.f32 %v480, %v644
        %v677 = vadd.f32 %v481, %v645
        %v678 = vadd.f32 %v482, %v646
        %v679 = vadd.f32 %v483, %v647
        %v680 = vadd.f32 %v484, %v648
        %v681 = vadd.f32 %v485, %v649
        %v682 = vadd.f32 %v486, %v650
        %v683 = vadd.f32 %v487, %v651
        %v684 = vadd.f32 %v488, %v652
        %v685 = vadd.f32 %v489, %v653
        %v686 = vadd.f32 %v490, %v654
        %v687 = vadd.f32 %v491, %v655
        %v688 = vadd.f32 %v492, %v656
        %v689 = vadd.f32 %v493, %v657
        %v690 = vadd.f32 %v494, %v658
        %v691 = vadd.f32 %v495, %v659
        %692 = vset.pattern.permute.xlu0 2
        %693 = vperm.xlu0 %692, %v226
        %v694 = vpop.permute.xlu0 %693
        %696 = vset.pattern.permute.xlu0 2
        %697 = vperm.xlu0 %696, %v227
        %v698 = vpop.permute.xlu0 %697
        %700 = vset.pattern.permute.xlu0 2
        %701 = vperm.xlu0 %700, %v228
        %v702 = vpop.permute.xlu0 %701
        %704 = vset.pattern.permute.xlu0 2
        %705 = vperm.xlu0 %704, %v229
        %v706 = vpop.permute.xlu0 %705
        %708 = vset.pattern.permute.xlu0 2
        %709 = vperm.xlu0 %708, %v230
        %v710 = vpop.permute.xlu0 %709
        %712 = vset.pattern.permute.xlu0 2
        %713 = vperm.xlu0 %712, %v231
        %v714 = vpop.permute.xlu0 %713
        %716 = vset.pattern.permute.xlu0 2
        %717 = vperm.xlu0 %716, %v232
        %v718 = vpop.permute.xlu0 %717
        %720 = vset.pattern.permute.xlu0 2
        %721 = vperm.xlu0 %720, %v233
        %v722 = vpop.permute.xlu0 %721
        %724 = vset.pattern.permute.xlu0 2
        %725 = vperm.xlu0 %724, %v234
        %v726 = vpop.permute.xlu0 %725
        %728 = vset.pattern.permute.xlu0 2
        %729 = vperm.xlu0 %728, %v235
        %v730 = vpop.permute.xlu0 %729
        %732 = vset.pattern.permute.xlu0 2
        %733 = vperm.xlu0 %732, %v236
        %v734 = vpop.permute.xlu0 %733
        %736 = vset.pattern.permute.xlu0 2
        %737 = vperm.xlu0 %736, %v237
        %v738 = vpop.permute.xlu0 %737
        %740 = vset.pattern.permute.xlu0 2
        %741 = vperm.xlu0 %740, %v238
        %v742 = vpop.permute.xlu0 %741
        %744 = vset.pattern.permute.xlu0 2
        %745 = vperm.xlu0 %744, %v239
        %v746 = vpop.permute.xlu0 %745
        %748 = vset.pattern.permute.xlu0 2
        %749 = vperm.xlu0 %748, %v240
        %v750 = vpop.permute.xlu0 %749
        %752 = vset.pattern.permute.xlu0 2
        %753 = vperm.xlu0 %752, %v241
        %v754 = vpop.permute.xlu0 %753
        %756 = vset.pattern.permute.xlu0 2
        %757 = vperm.xlu0 %756, %v242
        %v758 = vpop.permute.xlu0 %757
        %760 = vset.pattern.permute.xlu0 2
        %761 = vperm.xlu0 %760, %v243
        %v762 = vpop.permute.xlu0 %761
        %764 = vset.pattern.permute.xlu0 2
        %765 = vperm.xlu0 %764, %v244
        %v766 = vpop.permute.xlu0 %765
        %768 = vset.pattern.permute.xlu0 2
        %769 = vperm.xlu0 %768, %v245
        %v770 = vpop.permute.xlu0 %769
        %772 = vset.pattern.permute.xlu0 2
        %773 = vperm.xlu0 %772, %v246
        %v774 = vpop.permute.xlu0 %773
        %776 = vset.pattern.permute.xlu0 2
        %777 = vperm.xlu0 %776, %v247
        %v778 = vpop.permute.xlu0 %777
        %780 = vset.pattern.permute.xlu0 2
        %781 = vperm.xlu0 %780, %v248
        %v782 = vpop.permute.xlu0 %781
        %784 = vset.pattern.permute.xlu0 2
        %785 = vperm.xlu0 %784, %v249
        %v786 = vpop.permute.xlu0 %785
        %788 = vset.pattern.permute.xlu0 2
        %789 = vperm.xlu0 %788, %v250
        %v790 = vpop.permute.xlu0 %789
        %792 = vset.pattern.permute.xlu0 2
        %793 = vperm.xlu0 %792, %v251
        %v794 = vpop.permute.xlu0 %793
        %796 = vset.pattern.permute.xlu0 2
        %797 = vperm.xlu0 %796, %v252
        %v798 = vpop.permute.xlu0 %797
        %800 = vset.pattern.permute.xlu0 2
        %801 = vperm.xlu0 %800, %v253
        %v802 = vpop.permute.xlu0 %801
        %804 = vset.pattern.permute.xlu0 2
        %805 = vperm.xlu0 %804, %v254
        %v806 = vpop.permute.xlu0 %805
        %808 = vset.pattern.permute.xlu0 2
        %809 = vperm.xlu0 %808, %v255
        %v810 = vpop.permute.xlu0 %809
        %812 = vset.pattern.permute.xlu0 2
        %813 = vperm.xlu0 %812, %v256
        %v814 = vpop.permute.xlu0 %813
        %816 = vset.pattern.permute.xlu0 2
        %817 = vperm.xlu0 %816, %v257
        %v818 = vpop.permute.xlu0 %817
        %v820 = vlaneseq
        %v821 = vshrl.u32 %v820, 7
        %v822 = vsub.s32 2, %v821
        %v823 = vrot.slane %v258, %v822
        %v824 = vmul.f32 %v694, %v823
        %v825 = vmul.f32 %v698, %v823
        %v826 = vmul.f32 %v702, %v823
        %v827 = vmul.f32 %v706, %v823
        %v828 = vmul.f32 %v710, %v823
        %v829 = vmul.f32 %v714, %v823
        %v830 = vmul.f32 %v718, %v823
        %v831 = vmul.f32 %v722, %v823
        %v832 = vmul.f32 %v726, %v823
        %v833 = vmul.f32 %v730, %v823
        %v834 = vmul.f32 %v734, %v823
        %v835 = vmul.f32 %v738, %v823
        %v836 = vmul.f32 %v742, %v823
        %v837 = vmul.f32 %v746, %v823
        %v838 = vmul.f32 %v750, %v823
        %v839 = vmul.f32 %v754, %v823
        %v840 = vmul.f32 %v758, %v823
        %v841 = vmul.f32 %v762, %v823
        %v842 = vmul.f32 %v766, %v823
        %v843 = vmul.f32 %v770, %v823
        %v844 = vmul.f32 %v774, %v823
        %v845 = vmul.f32 %v778, %v823
        %v846 = vmul.f32 %v782, %v823
        %v847 = vmul.f32 %v786, %v823
        %v848 = vmul.f32 %v790, %v823
        %v849 = vmul.f32 %v794, %v823
        %v850 = vmul.f32 %v798, %v823
        %v851 = vmul.f32 %v802, %v823
        %v852 = vmul.f32 %v806, %v823
        %v853 = vmul.f32 %v810, %v823
        %v854 = vmul.f32 %v814, %v823
        %v855 = vmul.f32 %v818, %v823
        %v856 = vadd.f32 %v660, %v824
        %v857 = vadd.f32 %v661, %v825
        %v858 = vadd.f32 %v662, %v826
        %v859 = vadd.f32 %v663, %v827
        %v860 = vadd.f32 %v664, %v828
        %v861 = vadd.f32 %v665, %v829
        %v862 = vadd.f32 %v666, %v830
        %v863 = vadd.f32 %v667, %v831
        %v864 = vadd.f32 %v668, %v832
        %v865 = vadd.f32 %v669, %v833
        %v866 = vadd.f32 %v670, %v834
        %v867 = vadd.f32 %v671, %v835
        %v868 = vadd.f32 %v672, %v836
        %v869 = vadd.f32 %v673, %v837
        %v870 = vadd.f32 %v674, %v838
        %v871 = vadd.f32 %v675, %v839
        %v872 = vadd.f32 %v676, %v840
        %v873 = vadd.f32 %v677, %v841
        %v874 = vadd.f32 %v678, %v842
        %v875 = vadd.f32 %v679, %v843
        %v876 = vadd.f32 %v680, %v844
        %v877 = vadd.f32 %v681, %v845
        %v878 = vadd.f32 %v682, %v846
        %v879 = vadd.f32 %v683, %v847
        %v880 = vadd.f32 %v684, %v848
        %v881 = vadd.f32 %v685, %v849
        %v882 = vadd.f32 %v686, %v850
        %v883 = vadd.f32 %v687, %v851
        %v884 = vadd.f32 %v688, %v852
        %v885 = vadd.f32 %v689, %v853
        %v886 = vadd.f32 %v690, %v854
        %v887 = vadd.f32 %v691, %v855
        %888 = vset.pattern.permute.xlu0 3
        %889 = vperm.xlu0 %888, %v226
        %v890 = vpop.permute.xlu0 %889
        %892 = vset.pattern.permute.xlu0 3
        %893 = vperm.xlu0 %892, %v227
        %v894 = vpop.permute.xlu0 %893
        %896 = vset.pattern.permute.xlu0 3
        %897 = vperm.xlu0 %896, %v228
        %v898 = vpop.permute.xlu0 %897
        %900 = vset.pattern.permute.xlu0 3
        %901 = vperm.xlu0 %900, %v229
        %v902 = vpop.permute.xlu0 %901
        %904 = vset.pattern.permute.xlu0 3
        %905 = vperm.xlu0 %904, %v230
        %v906 = vpop.permute.xlu0 %905
        %908 = vset.pattern.permute.xlu0 3
        %909 = vperm.xlu0 %908, %v231
        %v910 = vpop.permute.xlu0 %909
        %912 = vset.pattern.permute.xlu0 3
        %913 = vperm.xlu0 %912, %v232
        %v914 = vpop.permute.xlu0 %913
        %916 = vset.pattern.permute.xlu0 3
        %917 = vperm.xlu0 %916, %v233
        %v918 = vpop.permute.xlu0 %917
        %920 = vset.pattern.permute.xlu0 3
        %921 = vperm.xlu0 %920, %v234
        %v922 = vpop.permute.xlu0 %921
        %924 = vset.pattern.permute.xlu0 3
        %925 = vperm.xlu0 %924, %v235
        %v926 = vpop.permute.xlu0 %925
        %928 = vset.pattern.permute.xlu0 3
        %929 = vperm.xlu0 %928, %v236
        %v930 = vpop.permute.xlu0 %929
        %932 = vset.pattern.permute.xlu0 3
        %933 = vperm.xlu0 %932, %v237
        %v934 = vpop.permute.xlu0 %933
        %936 = vset.pattern.permute.xlu0 3
        %937 = vperm.xlu0 %936, %v238
        %v938 = vpop.permute.xlu0 %937
        %940 = vset.pattern.permute.xlu0 3
        %941 = vperm.xlu0 %940, %v239
        %v942 = vpop.permute.xlu0 %941
        %944 = vset.pattern.permute.xlu0 3
        %945 = vperm.xlu0 %944, %v240
        %v946 = vpop.permute.xlu0 %945
        %948 = vset.pattern.permute.xlu0 3
        %949 = vperm.xlu0 %948, %v241
        %v950 = vpop.permute.xlu0 %949
        %952 = vset.pattern.permute.xlu0 3
        %953 = vperm.xlu0 %952, %v242
        %v954 = vpop.permute.xlu0 %953
        %956 = vset.pattern.permute.xlu0 3
        %957 = vperm.xlu0 %956, %v243
        %v958 = vpop.permute.xlu0 %957
        %960 = vset.pattern.permute.xlu0 3
        %961 = vperm.xlu0 %960, %v244
        %v962 = vpop.permute.xlu0 %961
        %964 = vset.pattern.permute.xlu0 3
        %965 = vperm.xlu0 %964, %v245
        %v966 = vpop.permute.xlu0 %965
        %968 = vset.pattern.permute.xlu0 3
        %969 = vperm.xlu0 %968, %v246
        %v970 = vpop.permute.xlu0 %969
        %972 = vset.pattern.permute.xlu0 3
        %973 = vperm.xlu0 %972, %v247
        %v974 = vpop.permute.xlu0 %973
        %976 = vset.pattern.permute.xlu0 3
        %977 = vperm.xlu0 %976, %v248
        %v978 = vpop.permute.xlu0 %977
        %980 = vset.pattern.permute.xlu0 3
        %981 = vperm.xlu0 %980, %v249
        %v982 = vpop.permute.xlu0 %981
        %984 = vset.pattern.permute.xlu0 3
        %985 = vperm.xlu0 %984, %v250
        %v986 = vpop.permute.xlu0 %985
        %988 = vset.pattern.permute.xlu0 3
        %989 = vperm.xlu0 %988, %v251
        %v990 = vpop.permute.xlu0 %989
        %992 = vset.pattern.permute.xlu0 3
        %993 = vperm.xlu0 %992, %v252
        %v994 = vpop.permute.xlu0 %993
        %996 = vset.pattern.permute.xlu0 3
        %997 = vperm.xlu0 %996, %v253
        %v998 = vpop.permute.xlu0 %997
        %1000 = vset.pattern.permute.xlu0 3
        %1001 = vperm.xlu0 %1000, %v254
        %v1002 = vpop.permute.xlu0 %1001
        %1004 = vset.pattern.permute.xlu0 3
        %1005 = vperm.xlu0 %1004, %v255
        %v1006 = vpop.permute.xlu0 %1005
        %1008 = vset.pattern.permute.xlu0 3
        %1009 = vperm.xlu0 %1008, %v256
        %v1010 = vpop.permute.xlu0 %1009
        %1012 = vset.pattern.permute.xlu0 3
        %1013 = vperm.xlu0 %1012, %v257
        %v1014 = vpop.permute.xlu0 %1013
        %v1016 = vlaneseq
        %v1017 = vshrl.u32 %v1016, 7
        %v1018 = vsub.s32 3, %v1017
        %v1019 = vrot.slane %v258, %v1018
        %v1020 = vmul.f32 %v890, %v1019
        %v1021 = vmul.f32 %v894, %v1019
        %v1022 = vmul.f32 %v898, %v1019
        %v1023 = vmul.f32 %v902, %v1019
        %v1024 = vmul.f32 %v906, %v1019
        %v1025 = vmul.f32 %v910, %v1019
        %v1026 = vmul.f32 %v914, %v1019
        %v1027 = vmul.f32 %v918, %v1019
        %v1028 = vmul.f32 %v922, %v1019
        %v1029 = vmul.f32 %v926, %v1019
        %v1030 = vmul.f32 %v930, %v1019
        %v1031 = vmul.f32 %v934, %v1019
        %v1032 = vmul.f32 %v938, %v1019
        %v1033 = vmul.f32 %v942, %v1019
        %v1034 = vmul.f32 %v946, %v1019
        %v1035 = vmul.f32 %v950, %v1019
        %v1036 = vmul.f32 %v954, %v1019
        %v1037 = vmul.f32 %v958, %v1019
        %v1038 = vmul.f32 %v962, %v1019
        %v1039 = vmul.f32 %v966, %v1019
        %v1040 = vmul.f32 %v970, %v1019
        %v1041 = vmul.f32 %v974, %v1019
        %v1042 = vmul.f32 %v978, %v1019
        %v1043 = vmul.f32 %v982, %v1019
        %v1044 = vmul.f32 %v986, %v1019
        %v1045 = vmul.f32 %v990, %v1019
        %v1046 = vmul.f32 %v994, %v1019
        %v1047 = vmul.f32 %v998, %v1019
        %v1048 = vmul.f32 %v1002, %v1019
        %v1049 = vmul.f32 %v1006, %v1019
        %v1050 = vmul.f32 %v1010, %v1019
        %v1051 = vmul.f32 %v1014, %v1019
        %v1052 = vadd.f32 %v856, %v1020
        %v1053 = vadd.f32 %v857, %v1021
        %v1054 = vadd.f32 %v858, %v1022
        %v1055 = vadd.f32 %v859, %v1023
        %v1056 = vadd.f32 %v860, %v1024
        %v1057 = vadd.f32 %v861, %v1025
        %v1058 = vadd.f32 %v862, %v1026
        %v1059 = vadd.f32 %v863, %v1027
        %v1060 = vadd.f32 %v864, %v1028
        %v1061 = vadd.f32 %v865, %v1029
        %v1062 = vadd.f32 %v866, %v1030
        %v1063 = vadd.f32 %v867, %v1031
        %v1064 = vadd.f32 %v868, %v1032
        %v1065 = vadd.f32 %v869, %v1033
        %v1066 = vadd.f32 %v870, %v1034
        %v1067 = vadd.f32 %v871, %v1035
        %v1068 = vadd.f32 %v872, %v1036
        %v1069 = vadd.f32 %v873, %v1037
        %v1070 = vadd.f32 %v874, %v1038
        %v1071 = vadd.f32 %v875, %v1039
        %v1072 = vadd.f32 %v876, %v1040
        %v1073 = vadd.f32 %v877, %v1041
        %v1074 = vadd.f32 %v878, %v1042
        %v1075 = vadd.f32 %v879, %v1043
        %v1076 = vadd.f32 %v880, %v1044
        %v1077 = vadd.f32 %v881, %v1045
        %v1078 = vadd.f32 %v882, %v1046
        %v1079 = vadd.f32 %v883, %v1047
        %v1080 = vadd.f32 %v884, %v1048
        %v1081 = vadd.f32 %v885, %v1049
        %v1082 = vadd.f32 %v886, %v1050
        %v1083 = vadd.f32 %v887, %v1051
        %v1084 = vmax.f32 %v1052, 0.0
        %v1085 = vmax.f32 %v1053, 0.0
        %v1086 = vmax.f32 %v1054, 0.0
        %v1087 = vmax.f32 %v1055, 0.0
        %v1088 = vmax.f32 %v1056, 0.0
        %v1089 = vmax.f32 %v1057, 0.0
        %v1090 = vmax.f32 %v1058, 0.0
        %v1091 = vmax.f32 %v1059, 0.0
        %v1092 = vmax.f32 %v1060, 0.0
        %v1093 = vmax.f32 %v1061, 0.0
        %v1094 = vmax.f32 %v1062, 0.0
        %v1095 = vmax.f32 %v1063, 0.0
        %v1096 = vmax.f32 %v1064, 0.0
        %v1097 = vmax.f32 %v1065, 0.0
        %v1098 = vmax.f32 %v1066, 0.0
        %v1099 = vmax.f32 %v1067, 0.0
        %v1100 = vmax.f32 %v1068, 0.0
        %v1101 = vmax.f32 %v1069, 0.0
        %v1102 = vmax.f32 %v1070, 0.0
        %v1103 = vmax.f32 %v1071, 0.0
        %v1104 = vmax.f32 %v1072, 0.0
        %v1105 = vmax.f32 %v1073, 0.0
        %v1106 = vmax.f32 %v1074, 0.0
        %v1107 = vmax.f32 %v1075, 0.0
        %v1108 = vmax.f32 %v1076, 0.0
        %v1109 = vmax.f32 %v1077, 0.0
        %v1110 = vmax.f32 %v1078, 0.0
        %v1111 = vmax.f32 %v1079, 0.0
        %v1112 = vmax.f32 %v1080, 0.0
        %v1113 = vmax.f32 %v1081, 0.0
        %v1114 = vmax.f32 %v1082, 0.0
        %v1115 = vmax.f32 %v1083, 0.0
        %v1116 = vld [vmem:[%s4] sm:$0x1]
        %v1118 = vlaneseq
        %v1119 = vshrl.u32 %v1118, 7
        %v1120 = vsub.s32 0, %v1119
        %v1121 = vrot.slane %v1116, %v1120
        %1124 = vset.pattern.permute.xlu0 0
        %1125 = vperm.xlu0 %1124, %v1084
        %v1126 = vpop.permute.xlu0 %1125
        %1129 = vset.pattern.permute.xlu0 0
        %1130 = vperm.xlu0 %1129, %v1085
        %v1131 = vpop.permute.xlu0 %1130
        %1134 = vset.pattern.permute.xlu0 0
        %1135 = vperm.xlu0 %1134, %v1086
        %v1136 = vpop.permute.xlu0 %1135
        %1139 = vset.pattern.permute.xlu0 0
        %1140 = vperm.xlu0 %1139, %v1087
        %v1141 = vpop.permute.xlu0 %1140
        %1144 = vset.pattern.permute.xlu0 0
        %1145 = vperm.xlu0 %1144, %v1088
        %v1146 = vpop.permute.xlu0 %1145
        %1149 = vset.pattern.permute.xlu0 0
        %1150 = vperm.xlu0 %1149, %v1089
        %v1151 = vpop.permute.xlu0 %1150
        %1154 = vset.pattern.permute.xlu0 0
        %1155 = vperm.xlu0 %1154, %v1090
        %v1156 = vpop.permute.xlu0 %1155
        %1159 = vset.pattern.permute.xlu0 0
        %1160 = vperm.xlu0 %1159, %v1091
        %v1161 = vpop.permute.xlu0 %1160
        %1164 = vset.pattern.permute.xlu0 0
        %1165 = vperm.xlu0 %1164, %v1092
        %v1166 = vpop.permute.xlu0 %1165
        %1169 = vset.pattern.permute.xlu0 0
        %1170 = vperm.xlu0 %1169, %v1093
        %v1171 = vpop.permute.xlu0 %1170
        %1174 = vset.pattern.permute.xlu0 0
        %1175 = vperm.xlu0 %1174, %v1094
        %v1176 = vpop.permute.xlu0 %1175
        %1179 = vset.pattern.permute.xlu0 0
        %1180 = vperm.xlu0 %1179, %v1095
        %v1181 = vpop.permute.xlu0 %1180
        %1184 = vset.pattern.permute.xlu0 0
        %1185 = vperm.xlu0 %1184, %v1096
        %v1186 = vpop.permute.xlu0 %1185
        %1189 = vset.pattern.permute.xlu0 0
        %1190 = vperm.xlu0 %1189, %v1097
        %v1191 = vpop.permute.xlu0 %1190
        %1194 = vset.pattern.permute.xlu0 0
        %1195 = vperm.xlu0 %1194, %v1098
        %v1196 = vpop.permute.xlu0 %1195
        %1199 = vset.pattern.permute.xlu0 0
        %1200 = vperm.xlu0 %1199, %v1099
        %v1201 = vpop.permute.xlu0 %1200
        %1204 = vset.pattern.permute.xlu0 0
        %1205 = vperm.xlu0 %1204, %v1100
        %v1206 = vpop.permute.xlu0 %1205
        %1209 = vset.pattern.permute.xlu0 0
        %1210 = vperm.xlu0 %1209, %v1101
        %v1211 = vpop.permute.xlu0 %1210
        %1214 = vset.pattern.permute.xlu0 0
        %1215 = vperm.xlu0 %1214, %v1102
        %v1216 = vpop.permute.xlu0 %1215
        %1219 = vset.pattern.permute.xlu0 0
        %1220 = vperm.xlu0 %1219, %v1103
        %v1221 = vpop.permute.xlu0 %1220
        %1224 = vset.pattern.permute.xlu0 0
        %1225 = vperm.xlu0 %1224, %v1104
        %v1226 = vpop.permute.xlu0 %1225
        %1229 = vset.pattern.permute.xlu0 0
        %1230 = vperm.xlu0 %1229, %v1105
        %v1231 = vpop.permute.xlu0 %1230
        %1234 = vset.pattern.permute.xlu0 0
        %1235 = vperm.xlu0 %1234, %v1106
        %v1236 = vpop.permute.xlu0 %1235
        %1239 = vset.pattern.permute.xlu0 0
        %1240 = vperm.xlu0 %1239, %v1107
        %v1241 = vpop.permute.xlu0 %1240
        %1244 = vset.pattern.permute.xlu0 0
        %1245 = vperm.xlu0 %1244, %v1108
        %v1246 = vpop.permute.xlu0 %1245
        %1249 = vset.pattern.permute.xlu0 0
        %1250 = vperm.xlu0 %1249, %v1109
        %v1251 = vpop.permute.xlu0 %1250
        %1254 = vset.pattern.permute.xlu0 0
        %1255 = vperm.xlu0 %1254, %v1110
        %v1256 = vpop.permute.xlu0 %1255
        %1259 = vset.pattern.permute.xlu0 0
        %1260 = vperm.xlu0 %1259, %v1111
        %v1261 = vpop.permute.xlu0 %1260
        %1264 = vset.pattern.permute.xlu0 0
        %1265 = vperm.xlu0 %1264, %v1112
        %v1266 = vpop.permute.xlu0 %1265
        %1269 = vset.pattern.permute.xlu0 0
        %1270 = vperm.xlu0 %1269, %v1113
        %v1271 = vpop.permute.xlu0 %1270
        %1274 = vset.pattern.permute.xlu0 0
        %1275 = vperm.xlu0 %1274, %v1114
        %v1276 = vpop.permute.xlu0 %1275
        %1279 = vset.pattern.permute.xlu0 0
        %1280 = vperm.xlu0 %1279, %v1115
        %v1281 = vpop.permute.xlu0 %1280
        %v1283 = vlaneseq
        %v1284 = vshrl.u32 %v1283, 7
        %v1285 = vsub.s32 0, %v1284
        %v1286 = vrot.slane %v259, %v1285
        %v1287 = vmul.f32 %v1126, %v1286
        %v1288 = vmul.f32 %v1131, %v1286
        %v1289 = vmul.f32 %v1136, %v1286
        %v1290 = vmul.f32 %v1141, %v1286
        %v1291 = vmul.f32 %v1146, %v1286
        %v1292 = vmul.f32 %v1151, %v1286
        %v1293 = vmul.f32 %v1156, %v1286
        %v1294 = vmul.f32 %v1161, %v1286
        %v1295 = vmul.f32 %v1166, %v1286
        %v1296 = vmul.f32 %v1171, %v1286
        %v1297 = vmul.f32 %v1176, %v1286
        %v1298 = vmul.f32 %v1181, %v1286
        %v1299 = vmul.f32 %v1186, %v1286
        %v1300 = vmul.f32 %v1191, %v1286
        %v1301 = vmul.f32 %v1196, %v1286
        %v1302 = vmul.f32 %v1201, %v1286
        %v1303 = vmul.f32 %v1206, %v1286
        %v1304 = vmul.f32 %v1211, %v1286
        %v1305 = vmul.f32 %v1216, %v1286
        %v1306 = vmul.f32 %v1221, %v1286
        %v1307 = vmul.f32 %v1226, %v1286
        %v1308 = vmul.f32 %v1231, %v1286
        %v1309 = vmul.f32 %v1236, %v1286
        %v1310 = vmul.f32 %v1241, %v1286
        %v1311 = vmul.f32 %v1246, %v1286
        %v1312 = vmul.f32 %v1251, %v1286
        %v1313 = vmul.f32 %v1256, %v1286
        %v1314 = vmul.f32 %v1261, %v1286
        %v1315 = vmul.f32 %v1266, %v1286
        %v1316 = vmul.f32 %v1271, %v1286
        %v1317 = vmul.f32 %v1276, %v1286
        %v1318 = vmul.f32 %v1281, %v1286
        %v1319 = vadd.f32 %v1121, %v1287
        %v1320 = vadd.f32 %v1121, %v1288
        %v1321 = vadd.f32 %v1121, %v1289
        %v1322 = vadd.f32 %v1121, %v1290
        %v1323 = vadd.f32 %v1121, %v1291
        %v1324 = vadd.f32 %v1121, %v1292
        %v1325 = vadd.f32 %v1121, %v1293
        %v1326 = vadd.f32 %v1121, %v1294
        %v1327 = vadd.f32 %v1121, %v1295
        %v1328 = vadd.f32 %v1121, %v1296
        %v1329 = vadd.f32 %v1121, %v1297
        %v1330 = vadd.f32 %v1121, %v1298
        %v1331 = vadd.f32 %v1121, %v1299
        %v1332 = vadd.f32 %v1121, %v1300
        %v1333 = vadd.f32 %v1121, %v1301
        %v1334 = vadd.f32 %v1121, %v1302
        %v1335 = vadd.f32 %v1121, %v1303
        %v1336 = vadd.f32 %v1121, %v1304
        %v1337 = vadd.f32 %v1121, %v1305
        %v1338 = vadd.f32 %v1121, %v1306
        %v1339 = vadd.f32 %v1121, %v1307
        %v1340 = vadd.f32 %v1121, %v1308
        %v1341 = vadd.f32 %v1121, %v1309
        %v1342 = vadd.f32 %v1121, %v1310
        %v1343 = vadd.f32 %v1121, %v1311
        %v1344 = vadd.f32 %v1121, %v1312
        %v1345 = vadd.f32 %v1121, %v1313
        %v1346 = vadd.f32 %v1121, %v1314
        %v1347 = vadd.f32 %v1121, %v1315
        %v1348 = vadd.f32 %v1121, %v1316
        %v1349 = vadd.f32 %v1121, %v1317
        %v1350 = vadd.f32 %v1121, %v1318
        %1351 = vset.pattern.permute.xlu0 1
        %1352 = vperm.xlu0 %1351, %v1084
        %v1353 = vpop.permute.xlu0 %1352
        %1355 = vset.pattern.permute.xlu0 1
        %1356 = vperm.xlu0 %1355, %v1085
        %v1357 = vpop.permute.xlu0 %1356
        %1359 = vset.pattern.permute.xlu0 1
        %1360 = vperm.xlu0 %1359, %v1086
        %v1361 = vpop.permute.xlu0 %1360
        %1363 = vset.pattern.permute.xlu0 1
        %1364 = vperm.xlu0 %1363, %v1087
        %v1365 = vpop.permute.xlu0 %1364
        %1367 = vset.pattern.permute.xlu0 1
        %1368 = vperm.xlu0 %1367, %v1088
        %v1369 = vpop.permute.xlu0 %1368
        %1371 = vset.pattern.permute.xlu0 1
        %1372 = vperm.xlu0 %1371, %v1089
        %v1373 = vpop.permute.xlu0 %1372
        %1375 = vset.pattern.permute.xlu0 1
        %1376 = vperm.xlu0 %1375, %v1090
        %v1377 = vpop.permute.xlu0 %1376
        %1379 = vset.pattern.permute.xlu0 1
        %1380 = vperm.xlu0 %1379, %v1091
        %v1381 = vpop.permute.xlu0 %1380
        %1383 = vset.pattern.permute.xlu0 1
        %1384 = vperm.xlu0 %1383, %v1092
        %v1385 = vpop.permute.xlu0 %1384
        %1387 = vset.pattern.permute.xlu0 1
        %1388 = vperm.xlu0 %1387, %v1093
        %v1389 = vpop.permute.xlu0 %1388
        %1391 = vset.pattern.permute.xlu0 1
        %1392 = vperm.xlu0 %1391, %v1094
        %v1393 = vpop.permute.xlu0 %1392
        %1395 = vset.pattern.permute.xlu0 1
        %1396 = vperm.xlu0 %1395, %v1095
        %v1397 = vpop.permute.xlu0 %1396
        %1399 = vset.pattern.permute.xlu0 1
        %1400 = vperm.xlu0 %1399, %v1096
        %v1401 = vpop.permute.xlu0 %1400
        %1403 = vset.pattern.permute.xlu0 1
        %1404 = vperm.xlu0 %1403, %v1097
        %v1405 = vpop.permute.xlu0 %1404
        %1407 = vset.pattern.permute.xlu0 1
        %1408 = vperm.xlu0 %1407, %v1098
        %v1409 = vpop.permute.xlu0 %1408
        %1411 = vset.pattern.permute.xlu0 1
        %1412 = vperm.xlu0 %1411, %v1099
        %v1413 = vpop.permute.xlu0 %1412
        %1415 = vset.pattern.permute.xlu0 1
        %1416 = vperm.xlu0 %1415, %v1100
        %v1417 = vpop.permute.xlu0 %1416
        %1419 = vset.pattern.permute.xlu0 1
        %1420 = vperm.xlu0 %1419, %v1101
        %v1421 = vpop.permute.xlu0 %1420
        %1423 = vset.pattern.permute.xlu0 1
        %1424 = vperm.xlu0 %1423, %v1102
        %v1425 = vpop.permute.xlu0 %1424
        %1427 = vset.pattern.permute.xlu0 1
        %1428 = vperm.xlu0 %1427, %v1103
        %v1429 = vpop.permute.xlu0 %1428
        %1431 = vset.pattern.permute.xlu0 1
        %1432 = vperm.xlu0 %1431, %v1104
        %v1433 = vpop.permute.xlu0 %1432
        %1435 = vset.pattern.permute.xlu0 1
        %1436 = vperm.xlu0 %1435, %v1105
        %v1437 = vpop.permute.xlu0 %1436
        %1439 = vset.pattern.permute.xlu0 1
        %1440 = vperm.xlu0 %1439, %v1106
        %v1441 = vpop.permute.xlu0 %1440
        %1443 = vset.pattern.permute.xlu0 1
        %1444 = vperm.xlu0 %1443, %v1107
        %v1445 = vpop.permute.xlu0 %1444
        %1447 = vset.pattern.permute.xlu0 1
        %1448 = vperm.xlu0 %1447, %v1108
        %v1449 = vpop.permute.xlu0 %1448
        %1451 = vset.pattern.permute.xlu0 1
        %1452 = vperm.xlu0 %1451, %v1109
        %v1453 = vpop.permute.xlu0 %1452
        %1455 = vset.pattern.permute.xlu0 1
        %1456 = vperm.xlu0 %1455, %v1110
        %v1457 = vpop.permute.xlu0 %1456
        %1459 = vset.pattern.permute.xlu0 1
        %1460 = vperm.xlu0 %1459, %v1111
        %v1461 = vpop.permute.xlu0 %1460
        %1463 = vset.pattern.permute.xlu0 1
        %1464 = vperm.xlu0 %1463, %v1112
        %v1465 = vpop.permute.xlu0 %1464
        %1467 = vset.pattern.permute.xlu0 1
        %1468 = vperm.xlu0 %1467, %v1113
        %v1469 = vpop.permute.xlu0 %1468
        %1471 = vset.pattern.permute.xlu0 1
        %1472 = vperm.xlu0 %1471, %v1114
        %v1473 = vpop.permute.xlu0 %1472
        %1475 = vset.pattern.permute.xlu0 1
        %1476 = vperm.xlu0 %1475, %v1115
        %v1477 = vpop.permute.xlu0 %1476
        %v1479 = vlaneseq
        %v1480 = vshrl.u32 %v1479, 7
        %v1481 = vsub.s32 1, %v1480
        %v1482 = vrot.slane %v259, %v1481
        %v1483 = vmul.f32 %v1353, %v1482
        %v1484 = vmul.f32 %v1357, %v1482
        %v1485 = vmul.f32 %v1361, %v1482
        %v1486 = vmul.f32 %v1365, %v1482
        %v1487 = vmul.f32 %v1369, %v1482
        %v1488 = vmul.f32 %v1373, %v1482
        %v1489 = vmul.f32 %v1377, %v1482
        %v1490 = vmul.f32 %v1381, %v1482
        %v1491 = vmul.f32 %v1385, %v1482
        %v1492 = vmul.f32 %v1389, %v1482
        %v1493 = vmul.f32 %v1393, %v1482
        %v1494 = vmul.f32 %v1397, %v1482
        %v1495 = vmul.f32 %v1401, %v1482
        %v1496 = vmul.f32 %v1405, %v1482
        %v1497 = vmul.f32 %v1409, %v1482
        %v1498 = vmul.f32 %v1413, %v1482
        %v1499 = vmul.f32 %v1417, %v1482
        %v1500 = vmul.f32 %v1421, %v1482
        %v1501 = vmul.f32 %v1425, %v1482
        %v1502 = vmul.f32 %v1429, %v1482
        %v1503 = vmul.f32 %v1433, %v1482
        %v1504 = vmul.f32 %v1437, %v1482
        %v1505 = vmul.f32 %v1441, %v1482
        %v1506 = vmul.f32 %v1445, %v1482
        %v1507 = vmul.f32 %v1449, %v1482
        %v1508 = vmul.f32 %v1453, %v1482
        %v1509 = vmul.f32 %v1457, %v1482
        %v1510 = vmul.f32 %v1461, %v1482
        %v1511 = vmul.f32 %v1465, %v1482
        %v1512 = vmul.f32 %v1469, %v1482
        %v1513 = vmul.f32 %v1473, %v1482
        %v1514 = vmul.f32 %v1477, %v1482
        %v1515 = vadd.f32 %v1319, %v1483
        %v1516 = vadd.f32 %v1320, %v1484
        %v1517 = vadd.f32 %v1321, %v1485
        %v1518 = vadd.f32 %v1322, %v1486
        %v1519 = vadd.f32 %v1323, %v1487
        %v1520 = vadd.f32 %v1324, %v1488
        %v1521 = vadd.f32 %v1325, %v1489
        %v1522 = vadd.f32 %v1326, %v1490
        %v1523 = vadd.f32 %v1327, %v1491
        %v1524 = vadd.f32 %v1328, %v1492
        %v1525 = vadd.f32 %v1329, %v1493
        %v1526 = vadd.f32 %v1330, %v1494
        %v1527 = vadd.f32 %v1331, %v1495
        %v1528 = vadd.f32 %v1332, %v1496
        %v1529 = vadd.f32 %v1333, %v1497
        %v1530 = vadd.f32 %v1334, %v1498
        %v1531 = vadd.f32 %v1335, %v1499
        %v1532 = vadd.f32 %v1336, %v1500
        %v1533 = vadd.f32 %v1337, %v1501
        %v1534 = vadd.f32 %v1338, %v1502
        %v1535 = vadd.f32 %v1339, %v1503
        %v1536 = vadd.f32 %v1340, %v1504
        %v1537 = vadd.f32 %v1341, %v1505
        %v1538 = vadd.f32 %v1342, %v1506
        %v1539 = vadd.f32 %v1343, %v1507
        %v1540 = vadd.f32 %v1344, %v1508
        %v1541 = vadd.f32 %v1345, %v1509
        %v1542 = vadd.f32 %v1346, %v1510
        %v1543 = vadd.f32 %v1347, %v1511
        %v1544 = vadd.f32 %v1348, %v1512
        %v1545 = vadd.f32 %v1349, %v1513
        %v1546 = vadd.f32 %v1350, %v1514
        %1547 = vset.pattern.permute.xlu0 2
        %1548 = vperm.xlu0 %1547, %v1084
        %v1549 = vpop.permute.xlu0 %1548
        %1551 = vset.pattern.permute.xlu0 2
        %1552 = vperm.xlu0 %1551, %v1085
        %v1553 = vpop.permute.xlu0 %1552
        %1555 = vset.pattern.permute.xlu0 2
        %1556 = vperm.xlu0 %1555, %v1086
        %v1557 = vpop.permute.xlu0 %1556
        %1559 = vset.pattern.permute.xlu0 2
        %1560 = vperm.xlu0 %1559, %v1087
        %v1561 = vpop.permute.xlu0 %1560
        %1563 = vset.pattern.permute.xlu0 2
        %1564 = vperm.xlu0 %1563, %v1088
        %v1565 = vpop.permute.xlu0 %1564
        %1567 = vset.pattern.permute.xlu0 2
        %1568 = vperm.xlu0 %1567, %v1089
        %v1569 = vpop.permute.xlu0 %1568
        %1571 = vset.pattern.permute.xlu0 2
        %1572 = vperm.xlu0 %1571, %v1090
        %v1573 = vpop.permute.xlu0 %1572
        %1575 = vset.pattern.permute.xlu0 2
        %1576 = vperm.xlu0 %1575, %v1091
        %v1577 = vpop.permute.xlu0 %1576
        %1579 = vset.pattern.permute.xlu0 2
        %1580 = vperm.xlu0 %1579, %v1092
        %v1581 = vpop.permute.xlu0 %1580
        %1583 = vset.pattern.permute.xlu0 2
        %1584 = vperm.xlu0 %1583, %v1093
        %v1585 = vpop.permute.xlu0 %1584
        %1587 = vset.pattern.permute.xlu0 2
        %1588 = vperm.xlu0 %1587, %v1094
        %v1589 = vpop.permute.xlu0 %1588
        %1591 = vset.pattern.permute.xlu0 2
        %1592 = vperm.xlu0 %1591, %v1095
        %v1593 = vpop.permute.xlu0 %1592
        %1595 = vset.pattern.permute.xlu0 2
        %1596 = vperm.xlu0 %1595, %v1096
        %v1597 = vpop.permute.xlu0 %1596
        %1599 = vset.pattern.permute.xlu0 2
        %1600 = vperm.xlu0 %1599, %v1097
        %v1601 = vpop.permute.xlu0 %1600
        %1603 = vset.pattern.permute.xlu0 2
        %1604 = vperm.xlu0 %1603, %v1098
        %v1605 = vpop.permute.xlu0 %1604
        %1607 = vset.pattern.permute.xlu0 2
        %1608 = vperm.xlu0 %1607, %v1099
        %v1609 = vpop.permute.xlu0 %1608
        %1611 = vset.pattern.permute.xlu0 2
        %1612 = vperm.xlu0 %1611, %v1100
        %v1613 = vpop.permute.xlu0 %1612
        %1615 = vset.pattern.permute.xlu0 2
        %1616 = vperm.xlu0 %1615, %v1101
        %v1617 = vpop.permute.xlu0 %1616
        %1619 = vset.pattern.permute.xlu0 2
        %1620 = vperm.xlu0 %1619, %v1102
        %v1621 = vpop.permute.xlu0 %1620
        %1623 = vset.pattern.permute.xlu0 2
        %1624 = vperm.xlu0 %1623, %v1103
        %v1625 = vpop.permute.xlu0 %1624
        %1627 = vset.pattern.permute.xlu0 2
        %1628 = vperm.xlu0 %1627, %v1104
        %v1629 = vpop.permute.xlu0 %1628
        %1631 = vset.pattern.permute.xlu0 2
        %1632 = vperm.xlu0 %1631, %v1105
        %v1633 = vpop.permute.xlu0 %1632
        %1635 = vset.pattern.permute.xlu0 2
        %1636 = vperm.xlu0 %1635, %v1106
        %v1637 = vpop.permute.xlu0 %1636
        %1639 = vset.pattern.permute.xlu0 2
        %1640 = vperm.xlu0 %1639, %v1107
        %v1641 = vpop.permute.xlu0 %1640
        %1643 = vset.pattern.permute.xlu0 2
        %1644 = vperm.xlu0 %1643, %v1108
        %v1645 = vpop.permute.xlu0 %1644
        %1647 = vset.pattern.permute.xlu0 2
        %1648 = vperm.xlu0 %1647, %v1109
        %v1649 = vpop.permute.xlu0 %1648
        %1651 = vset.pattern.permute.xlu0 2
        %1652 = vperm.xlu0 %1651, %v1110
        %v1653 = vpop.permute.xlu0 %1652
        %1655 = vset.pattern.permute.xlu0 2
        %1656 = vperm.xlu0 %1655, %v1111
        %v1657 = vpop.permute.xlu0 %1656
        %1659 = vset.pattern.permute.xlu0 2
        %1660 = vperm.xlu0 %1659, %v1112
        %v1661 = vpop.permute.xlu0 %1660
        %1663 = vset.pattern.permute.xlu0 2
        %1664 = vperm.xlu0 %1663, %v1113
        %v1665 = vpop.permute.xlu0 %1664
        %1667 = vset.pattern.permute.xlu0 2
        %1668 = vperm.xlu0 %1667, %v1114
        %v1669 = vpop.permute.xlu0 %1668
        %1671 = vset.pattern.permute.xlu0 2
        %1672 = vperm.xlu0 %1671, %v1115
        %v1673 = vpop.permute.xlu0 %1672
        %v1675 = vlaneseq
        %v1676 = vshrl.u32 %v1675, 7
        %v1677 = vsub.s32 2, %v1676
        %v1678 = vrot.slane %v259, %v1677
        %v1679 = vmul.f32 %v1549, %v1678
        %v1680 = vmul.f32 %v1553, %v1678
        %v1681 = vmul.f32 %v1557, %v1678
        %v1682 = vmul.f32 %v1561, %v1678
        %v1683 = vmul.f32 %v1565, %v1678
        %v1684 = vmul.f32 %v1569, %v1678
        %v1685 = vmul.f32 %v1573, %v1678
        %v1686 = vmul.f32 %v1577, %v1678
        %v1687 = vmul.f32 %v1581, %v1678
        %v1688 = vmul.f32 %v1585, %v1678
        %v1689 = vmul.f32 %v1589, %v1678
        %v1690 = vmul.f32 %v1593, %v1678
        %v1691 = vmul.f32 %v1597, %v1678
        %v1692 = vmul.f32 %v1601, %v1678
        %v1693 = vmul.f32 %v1605, %v1678
        %v1694 = vmul.f32 %v1609, %v1678
        %v1695 = vmul.f32 %v1613, %v1678
        %v1696 = vmul.f32 %v1617, %v1678
        %v1697 = vmul.f32 %v1621, %v1678
        %v1698 = vmul.f32 %v1625, %v1678
        %v1699 = vmul.f32 %v1629, %v1678
        %v1700 = vmul.f32 %v1633, %v1678
        %v1701 = vmul.f32 %v1637, %v1678
        %v1702 = vmul.f32 %v1641, %v1678
        %v1703 = vmul.f32 %v1645, %v1678
        %v1704 = vmul.f32 %v1649, %v1678
        %v1705 = vmul.f32 %v1653, %v1678
        %v1706 = vmul.f32 %v1657, %v1678
        %v1707 = vmul.f32 %v1661, %v1678
        %v1708 = vmul.f32 %v1665, %v1678
        %v1709 = vmul.f32 %v1669, %v1678
        %v1710 = vmul.f32 %v1673, %v1678
        %v1711 = vadd.f32 %v1515, %v1679
        %v1712 = vadd.f32 %v1516, %v1680
        %v1713 = vadd.f32 %v1517, %v1681
        %v1714 = vadd.f32 %v1518, %v1682
        %v1715 = vadd.f32 %v1519, %v1683
        %v1716 = vadd.f32 %v1520, %v1684
        %v1717 = vadd.f32 %v1521, %v1685
        %v1718 = vadd.f32 %v1522, %v1686
        %v1719 = vadd.f32 %v1523, %v1687
        %v1720 = vadd.f32 %v1524, %v1688
        %v1721 = vadd.f32 %v1525, %v1689
        %v1722 = vadd.f32 %v1526, %v1690
        %v1723 = vadd.f32 %v1527, %v1691
        %v1724 = vadd.f32 %v1528, %v1692
        %v1725 = vadd.f32 %v1529, %v1693
        %v1726 = vadd.f32 %v1530, %v1694
        %v1727 = vadd.f32 %v1531, %v1695
        %v1728 = vadd.f32 %v1532, %v1696
        %v1729 = vadd.f32 %v1533, %v1697
        %v1730 = vadd.f32 %v1534, %v1698
        %v1731 = vadd.f32 %v1535, %v1699
        %v1732 = vadd.f32 %v1536, %v1700
        %v1733 = vadd.f32 %v1537, %v1701
        %v1734 = vadd.f32 %v1538, %v1702
        %v1735 = vadd.f32 %v1539, %v1703
        %v1736 = vadd.f32 %v1540, %v1704
        %v1737 = vadd.f32 %v1541, %v1705
        %v1738 = vadd.f32 %v1542, %v1706
        %v1739 = vadd.f32 %v1543, %v1707
        %v1740 = vadd.f32 %v1544, %v1708
        %v1741 = vadd.f32 %v1545, %v1709
        %v1742 = vadd.f32 %v1546, %v1710
        %1743 = vset.pattern.permute.xlu0 3
        %1744 = vperm.xlu0 %1743, %v1084
        %v1745 = vpop.permute.xlu0 %1744
        %1747 = vset.pattern.permute.xlu0 3
        %1748 = vperm.xlu0 %1747, %v1085
        %v1749 = vpop.permute.xlu0 %1748
        %1751 = vset.pattern.permute.xlu0 3
        %1752 = vperm.xlu0 %1751, %v1086
        %v1753 = vpop.permute.xlu0 %1752
        %1755 = vset.pattern.permute.xlu0 3
        %1756 = vperm.xlu0 %1755, %v1087
        %v1757 = vpop.permute.xlu0 %1756
        %1759 = vset.pattern.permute.xlu0 3
        %1760 = vperm.xlu0 %1759, %v1088
        %v1761 = vpop.permute.xlu0 %1760
        %1763 = vset.pattern.permute.xlu0 3
        %1764 = vperm.xlu0 %1763, %v1089
        %v1765 = vpop.permute.xlu0 %1764
        %1767 = vset.pattern.permute.xlu0 3
        %1768 = vperm.xlu0 %1767, %v1090
        %v1769 = vpop.permute.xlu0 %1768
        %1771 = vset.pattern.permute.xlu0 3
        %1772 = vperm.xlu0 %1771, %v1091
        %v1773 = vpop.permute.xlu0 %1772
        %1775 = vset.pattern.permute.xlu0 3
        %1776 = vperm.xlu0 %1775, %v1092
        %v1777 = vpop.permute.xlu0 %1776
        %1779 = vset.pattern.permute.xlu0 3
        %1780 = vperm.xlu0 %1779, %v1093
        %v1781 = vpop.permute.xlu0 %1780
        %1783 = vset.pattern.permute.xlu0 3
        %1784 = vperm.xlu0 %1783, %v1094
        %v1785 = vpop.permute.xlu0 %1784
        %1787 = vset.pattern.permute.xlu0 3
        %1788 = vperm.xlu0 %1787, %v1095
        %v1789 = vpop.permute.xlu0 %1788
        %1791 = vset.pattern.permute.xlu0 3
        %1792 = vperm.xlu0 %1791, %v1096
        %v1793 = vpop.permute.xlu0 %1792
        %1795 = vset.pattern.permute.xlu0 3
        %1796 = vperm.xlu0 %1795, %v1097
        %v1797 = vpop.permute.xlu0 %1796
        %1799 = vset.pattern.permute.xlu0 3
        %1800 = vperm.xlu0 %1799, %v1098
        %v1801 = vpop.permute.xlu0 %1800
        %1803 = vset.pattern.permute.xlu0 3
        %1804 = vperm.xlu0 %1803, %v1099
        %v1805 = vpop.permute.xlu0 %1804
        %1807 = vset.pattern.permute.xlu0 3
        %1808 = vperm.xlu0 %1807, %v1100
        %v1809 = vpop.permute.xlu0 %1808
        %1811 = vset.pattern.permute.xlu0 3
        %1812 = vperm.xlu0 %1811, %v1101
        %v1813 = vpop.permute.xlu0 %1812
        %1815 = vset.pattern.permute.xlu0 3
        %1816 = vperm.xlu0 %1815, %v1102
        %v1817 = vpop.permute.xlu0 %1816
        %1819 = vset.pattern.permute.xlu0 3
        %1820 = vperm.xlu0 %1819, %v1103
        %v1821 = vpop.permute.xlu0 %1820
        %1823 = vset.pattern.permute.xlu0 3
        %1824 = vperm.xlu0 %1823, %v1104
        %v1825 = vpop.permute.xlu0 %1824
        %1827 = vset.pattern.permute.xlu0 3
        %1828 = vperm.xlu0 %1827, %v1105
        %v1829 = vpop.permute.xlu0 %1828
        %1831 = vset.pattern.permute.xlu0 3
        %1832 = vperm.xlu0 %1831, %v1106
        %v1833 = vpop.permute.xlu0 %1832
        %1835 = vset.pattern.permute.xlu0 3
        %1836 = vperm.xlu0 %1835, %v1107
        %v1837 = vpop.permute.xlu0 %1836
        %1839 = vset.pattern.permute.xlu0 3
        %1840 = vperm.xlu0 %1839, %v1108
        %v1841 = vpop.permute.xlu0 %1840
        %1843 = vset.pattern.permute.xlu0 3
        %1844 = vperm.xlu0 %1843, %v1109
        %v1845 = vpop.permute.xlu0 %1844
        %1847 = vset.pattern.permute.xlu0 3
        %1848 = vperm.xlu0 %1847, %v1110
        %v1849 = vpop.permute.xlu0 %1848
        %1851 = vset.pattern.permute.xlu0 3
        %1852 = vperm.xlu0 %1851, %v1111
        %v1853 = vpop.permute.xlu0 %1852
        %1855 = vset.pattern.permute.xlu0 3
        %1856 = vperm.xlu0 %1855, %v1112
        %v1857 = vpop.permute.xlu0 %1856
        %1859 = vset.pattern.permute.xlu0 3
        %1860 = vperm.xlu0 %1859, %v1113
        %v1861 = vpop.permute.xlu0 %1860
        %1863 = vset.pattern.permute.xlu0 3
        %1864 = vperm.xlu0 %1863, %v1114
        %v1865 = vpop.permute.xlu0 %1864
        %1867 = vset.pattern.permute.xlu0 3
        %1868 = vperm.xlu0 %1867, %v1115
        %v1869 = vpop.permute.xlu0 %1868
        %v1871 = vlaneseq
        %v1872 = vshrl.u32 %v1871, 7
        %v1873 = vsub.s32 3, %v1872
        %v1874 = vrot.slane %v259, %v1873
        %v1875 = vmul.f32 %v1745, %v1874
        %v1876 = vmul.f32 %v1749, %v1874
        %v1877 = vmul.f32 %v1753, %v1874
        %v1878 = vmul.f32 %v1757, %v1874
        %v1879 = vmul.f32 %v1761, %v1874
        %v1880 = vmul.f32 %v1765, %v1874
        %v1881 = vmul.f32 %v1769, %v1874
        %v1882 = vmul.f32 %v1773, %v1874
        %v1883 = vmul.f32 %v1777, %v1874
        %v1884 = vmul.f32 %v1781, %v1874
        %v1885 = vmul.f32 %v1785, %v1874
        %v1886 = vmul.f32 %v1789, %v1874
        %v1887 = vmul.f32 %v1793, %v1874
        %v1888 = vmul.f32 %v1797, %v1874
        %v1889 = vmul.f32 %v1801, %v1874
        %v1890 = vmul.f32 %v1805, %v1874
        %v1891 = vmul.f32 %v1809, %v1874
        %v1892 = vmul.f32 %v1813, %v1874
        %v1893 = vmul.f32 %v1817, %v1874
        %v1894 = vmul.f32 %v1821, %v1874
        %v1895 = vmul.f32 %v1825, %v1874
        %v1896 = vmul.f32 %v1829, %v1874
        %v1897 = vmul.f32 %v1833, %v1874
        %v1898 = vmul.f32 %v1837, %v1874
        %v1899 = vmul.f32 %v1841, %v1874
        %v1900 = vmul.f32 %v1845, %v1874
        %v1901 = vmul.f32 %v1849, %v1874
        %v1902 = vmul.f32 %v1853, %v1874
        %v1903 = vmul.f32 %v1857, %v1874
        %v1904 = vmul.f32 %v1861, %v1874
        %v1905 = vmul.f32 %v1865, %v1874
        %v1906 = vmul.f32 %v1869, %v1874
        %v1907 = vadd.f32 %v1711, %v1875
        %v1908 = vadd.f32 %v1712, %v1876
        %v1909 = vadd.f32 %v1713, %v1877
        %v1910 = vadd.f32 %v1714, %v1878
        %v1911 = vadd.f32 %v1715, %v1879
        %v1912 = vadd.f32 %v1716, %v1880
        %v1913 = vadd.f32 %v1717, %v1881
        %v1914 = vadd.f32 %v1718, %v1882
        %v1915 = vadd.f32 %v1719, %v1883
        %v1916 = vadd.f32 %v1720, %v1884
        %v1917 = vadd.f32 %v1721, %v1885
        %v1918 = vadd.f32 %v1722, %v1886
        %v1919 = vadd.f32 %v1723, %v1887
        %v1920 = vadd.f32 %v1724, %v1888
        %v1921 = vadd.f32 %v1725, %v1889
        %v1922 = vadd.f32 %v1726, %v1890
        %v1923 = vadd.f32 %v1727, %v1891
        %v1924 = vadd.f32 %v1728, %v1892
        %v1925 = vadd.f32 %v1729, %v1893
        %v1926 = vadd.f32 %v1730, %v1894
        %v1927 = vadd.f32 %v1731, %v1895
        %v1928 = vadd.f32 %v1732, %v1896
        %v1929 = vadd.f32 %v1733, %v1897
        %v1930 = vadd.f32 %v1734, %v1898
        %v1931 = vadd.f32 %v1735, %v1899
        %v1932 = vadd.f32 %v1736, %v1900
        %v1933 = vadd.f32 %v1737, %v1901
        %v1934 = vadd.f32 %v1738, %v1902
        %v1935 = vadd.f32 %v1739, %v1903
        %v1936 = vadd.f32 %v1740, %v1904
        %v1937 = vadd.f32 %v1741, %v1905
        %v1938 = vadd.f32 %v1742, %v1906
        %1939 = vset.pattern.permute.xlu0 4
        %1940 = vperm.xlu0 %1939, %v1084
        %v1941 = vpop.permute.xlu0 %1940
        %1943 = vset.pattern.permute.xlu0 4
        %1944 = vperm.xlu0 %1943, %v1085
        %v1945 = vpop.permute.xlu0 %1944
        %1947 = vset.pattern.permute.xlu0 4
        %1948 = vperm.xlu0 %1947, %v1086
        %v1949 = vpop.permute.xlu0 %1948
        %1951 = vset.pattern.permute.xlu0 4
        %1952 = vperm.xlu0 %1951, %v1087
        %v1953 = vpop.permute.xlu0 %1952
        %1955 = vset.pattern.permute.xlu0 4
        %1956 = vperm.xlu0 %1955, %v1088
        %v1957 = vpop.permute.xlu0 %1956
        %1959 = vset.pattern.permute.xlu0 4
        %1960 = vperm.xlu0 %1959, %v1089
        %v1961 = vpop.permute.xlu0 %1960
        %1963 = vset.pattern.permute.xlu0 4
        %1964 = vperm.xlu0 %1963, %v1090
        %v1965 = vpop.permute.xlu0 %1964
        %1967 = vset.pattern.permute.xlu0 4
        %1968 = vperm.xlu0 %1967, %v1091
        %v1969 = vpop.permute.xlu0 %1968
        %1971 = vset.pattern.permute.xlu0 4
        %1972 = vperm.xlu0 %1971, %v1092
        %v1973 = vpop.permute.xlu0 %1972
        %1975 = vset.pattern.permute.xlu0 4
        %1976 = vperm.xlu0 %1975, %v1093
        %v1977 = vpop.permute.xlu0 %1976
        %1979 = vset.pattern.permute.xlu0 4
        %1980 = vperm.xlu0 %1979, %v1094
        %v1981 = vpop.permute.xlu0 %1980
        %1983 = vset.pattern.permute.xlu0 4
        %1984 = vperm.xlu0 %1983, %v1095
        %v1985 = vpop.permute.xlu0 %1984
        %1987 = vset.pattern.permute.xlu0 4
        %1988 = vperm.xlu0 %1987, %v1096
        %v1989 = vpop.permute.xlu0 %1988
        %1991 = vset.pattern.permute.xlu0 4
        %1992 = vperm.xlu0 %1991, %v1097
        %v1993 = vpop.permute.xlu0 %1992
        %1995 = vset.pattern.permute.xlu0 4
        %1996 = vperm.xlu0 %1995, %v1098
        %v1997 = vpop.permute.xlu0 %1996
        %1999 = vset.pattern.permute.xlu0 4
        %2000 = vperm.xlu0 %1999, %v1099
        %v2001 = vpop.permute.xlu0 %2000
        %2003 = vset.pattern.permute.xlu0 4
        %2004 = vperm.xlu0 %2003, %v1100
        %v2005 = vpop.permute.xlu0 %2004
        %2007 = vset.pattern.permute.xlu0 4
        %2008 = vperm.xlu0 %2007, %v1101
        %v2009 = vpop.permute.xlu0 %2008
        %2011 = vset.pattern.permute.xlu0 4
        %2012 = vperm.xlu0 %2011, %v1102
        %v2013 = vpop.permute.xlu0 %2012
        %2015 = vset.pattern.permute.xlu0 4
        %2016 = vperm.xlu0 %2015, %v1103
        %v2017 = vpop.permute.xlu0 %2016
        %2019 = vset.pattern.permute.xlu0 4
        %2020 = vperm.xlu0 %2019, %v1104
        %v2021 = vpop.permute.xlu0 %2020
        %2023 = vset.pattern.permute.xlu0 4
        %2024 = vperm.xlu0 %2023, %v1105
        %v2025 = vpop.permute.xlu0 %2024
        %2027 = vset.pattern.permute.xlu0 4
        %2028 = vperm.xlu0 %2027, %v1106
        %v2029 = vpop.permute.xlu0 %2028
        %2031 = vset.pattern.permute.xlu0 4
        %2032 = vperm.xlu0 %2031, %v1107
        %v2033 = vpop.permute.xlu0 %2032
        %2035 = vset.pattern.permute.xlu0 4
        %2036 = vperm.xlu0 %2035, %v1108
        %v2037 = vpop.permute.xlu0 %2036
        %2039 = vset.pattern.permute.xlu0 4
        %2040 = vperm.xlu0 %2039, %v1109
        %v2041 = vpop.permute.xlu0 %2040
        %2043 = vset.pattern.permute.xlu0 4
        %2044 = vperm.xlu0 %2043, %v1110
        %v2045 = vpop.permute.xlu0 %2044
        %2047 = vset.pattern.permute.xlu0 4
        %2048 = vperm.xlu0 %2047, %v1111
        %v2049 = vpop.permute.xlu0 %2048
        %2051 = vset.pattern.permute.xlu0 4
        %2052 = vperm.xlu0 %2051, %v1112
        %v2053 = vpop.permute.xlu0 %2052
        %2055 = vset.pattern.permute.xlu0 4
        %2056 = vperm.xlu0 %2055, %v1113
        %v2057 = vpop.permute.xlu0 %2056
        %2059 = vset.pattern.permute.xlu0 4
        %2060 = vperm.xlu0 %2059, %v1114
        %v2061 = vpop.permute.xlu0 %2060
        %2063 = vset.pattern.permute.xlu0 4
        %2064 = vperm.xlu0 %2063, %v1115
        %v2065 = vpop.permute.xlu0 %2064
        %v2067 = vlaneseq
        %v2068 = vshrl.u32 %v2067, 7
        %v2069 = vsub.s32 4, %v2068
        %v2070 = vrot.slane %v259, %v2069
        %v2071 = vmul.f32 %v1941, %v2070
        %v2072 = vmul.f32 %v1945, %v2070
        %v2073 = vmul.f32 %v1949, %v2070
        %v2074 = vmul.f32 %v1953, %v2070
        %v2075 = vmul.f32 %v1957, %v2070
        %v2076 = vmul.f32 %v1961, %v2070
        %v2077 = vmul.f32 %v1965, %v2070
        %v2078 = vmul.f32 %v1969, %v2070
        %v2079 = vmul.f32 %v1973, %v2070
        %v2080 = vmul.f32 %v1977, %v2070
        %v2081 = vmul.f32 %v1981, %v2070
        %v2082 = vmul.f32 %v1985, %v2070
        %v2083 = vmul.f32 %v1989, %v2070
        %v2084 = vmul.f32 %v1993, %v2070
        %v2085 = vmul.f32 %v1997, %v2070
        %v2086 = vmul.f32 %v2001, %v2070
        %v2087 = vmul.f32 %v2005, %v2070
        %v2088 = vmul.f32 %v2009, %v2070
        %v2089 = vmul.f32 %v2013, %v2070
        %v2090 = vmul.f32 %v2017, %v2070
        %v2091 = vmul.f32 %v2021, %v2070
        %v2092 = vmul.f32 %v2025, %v2070
        %v2093 = vmul.f32 %v2029, %v2070
        %v2094 = vmul.f32 %v2033, %v2070
        %v2095 = vmul.f32 %v2037, %v2070
        %v2096 = vmul.f32 %v2041, %v2070
        %v2097 = vmul.f32 %v2045, %v2070
        %v2098 = vmul.f32 %v2049, %v2070
        %v2099 = vmul.f32 %v2053, %v2070
        %v2100 = vmul.f32 %v2057, %v2070
        %v2101 = vmul.f32 %v2061, %v2070
        %v2102 = vmul.f32 %v2065, %v2070
        %v2103 = vadd.f32 %v1907, %v2071
        %v2104 = vadd.f32 %v1908, %v2072
        %v2105 = vadd.f32 %v1909, %v2073
        %v2106 = vadd.f32 %v1910, %v2074
        %v2107 = vadd.f32 %v1911, %v2075
        %v2108 = vadd.f32 %v1912, %v2076
        %v2109 = vadd.f32 %v1913, %v2077
        %v2110 = vadd.f32 %v1914, %v2078
        %v2111 = vadd.f32 %v1915, %v2079
        %v2112 = vadd.f32 %v1916, %v2080
        %v2113 = vadd.f32 %v1917, %v2081
        %v2114 = vadd.f32 %v1918, %v2082
        %v2115 = vadd.f32 %v1919, %v2083
        %v2116 = vadd.f32 %v1920, %v2084
        %v2117 = vadd.f32 %v1921, %v2085
        %v2118 = vadd.f32 %v1922, %v2086
        %v2119 = vadd.f32 %v1923, %v2087
        %v2120 = vadd.f32 %v1924, %v2088
        %v2121 = vadd.f32 %v1925, %v2089
        %v2122 = vadd.f32 %v1926, %v2090
        %v2123 = vadd.f32 %v1927, %v2091
        %v2124 = vadd.f32 %v1928, %v2092
        %v2125 = vadd.f32 %v1929, %v2093
        %v2126 = vadd.f32 %v1930, %v2094
        %v2127 = vadd.f32 %v1931, %v2095
        %v2128 = vadd.f32 %v1932, %v2096
        %v2129 = vadd.f32 %v1933, %v2097
        %v2130 = vadd.f32 %v1934, %v2098
        %v2131 = vadd.f32 %v1935, %v2099
        %v2132 = vadd.f32 %v1936, %v2100
        %v2133 = vadd.f32 %v1937, %v2101
        %v2134 = vadd.f32 %v1938, %v2102
        %2135 = vset.pattern.permute.xlu0 5
        %2136 = vperm.xlu0 %2135, %v1084
        %v2137 = vpop.permute.xlu0 %2136
        %2139 = vset.pattern.permute.xlu0 5
        %2140 = vperm.xlu0 %2139, %v1085
        %v2141 = vpop.permute.xlu0 %2140
        %2143 = vset.pattern.permute.xlu0 5
        %2144 = vperm.xlu0 %2143, %v1086
        %v2145 = vpop.permute.xlu0 %2144
        %2147 = vset.pattern.permute.xlu0 5
        %2148 = vperm.xlu0 %2147, %v1087
        %v2149 = vpop.permute.xlu0 %2148
        %2151 = vset.pattern.permute.xlu0 5
        %2152 = vperm.xlu0 %2151, %v1088
        %v2153 = vpop.permute.xlu0 %2152
        %2155 = vset.pattern.permute.xlu0 5
        %2156 = vperm.xlu0 %2155, %v1089
        %v2157 = vpop.permute.xlu0 %2156
        %2159 = vset.pattern.permute.xlu0 5
        %2160 = vperm.xlu0 %2159, %v1090
        %v2161 = vpop.permute.xlu0 %2160
        %2163 = vset.pattern.permute.xlu0 5
        %2164 = vperm.xlu0 %2163, %v1091
        %v2165 = vpop.permute.xlu0 %2164
        %2167 = vset.pattern.permute.xlu0 5
        %2168 = vperm.xlu0 %2167, %v1092
        %v2169 = vpop.permute.xlu0 %2168
        %2171 = vset.pattern.permute.xlu0 5
        %2172 = vperm.xlu0 %2171, %v1093
        %v2173 = vpop.permute.xlu0 %2172
        %2175 = vset.pattern.permute.xlu0 5
        %2176 = vperm.xlu0 %2175, %v1094
        %v2177 = vpop.permute.xlu0 %2176
        %2179 = vset.pattern.permute.xlu0 5
        %2180 = vperm.xlu0 %2179, %v1095
        %v2181 = vpop.permute.xlu0 %2180
        %2183 = vset.pattern.permute.xlu0 5
        %2184 = vperm.xlu0 %2183, %v1096
        %v2185 = vpop.permute.xlu0 %2184
        %2187 = vset.pattern.permute.xlu0 5
        %2188 = vperm.xlu0 %2187, %v1097
        %v2189 = vpop.permute.xlu0 %2188
        %2191 = vset.pattern.permute.xlu0 5
        %2192 = vperm.xlu0 %2191, %v1098
        %v2193 = vpop.permute.xlu0 %2192
        %2195 = vset.pattern.permute.xlu0 5
        %2196 = vperm.xlu0 %2195, %v1099
        %v2197 = vpop.permute.xlu0 %2196
        %2199 = vset.pattern.permute.xlu0 5
        %2200 = vperm.xlu0 %2199, %v1100
        %v2201 = vpop.permute.xlu0 %2200
        %2203 = vset.pattern.permute.xlu0 5
        %2204 = vperm.xlu0 %2203, %v1101
        %v2205 = vpop.permute.xlu0 %2204
        %2207 = vset.pattern.permute.xlu0 5
        %2208 = vperm.xlu0 %2207, %v1102
        %v2209 = vpop.permute.xlu0 %2208
        %2211 = vset.pattern.permute.xlu0 5
        %2212 = vperm.xlu0 %2211, %v1103
        %v2213 = vpop.permute.xlu0 %2212
        %2215 = vset.pattern.permute.xlu0 5
        %2216 = vperm.xlu0 %2215, %v1104
        %v2217 = vpop.permute.xlu0 %2216
        %2219 = vset.pattern.permute.xlu0 5
        %2220 = vperm.xlu0 %2219, %v1105
        %v2221 = vpop.permute.xlu0 %2220
        %2223 = vset.pattern.permute.xlu0 5
        %2224 = vperm.xlu0 %2223, %v1106
        %v2225 = vpop.permute.xlu0 %2224
        %2227 = vset.pattern.permute.xlu0 5
        %2228 = vperm.xlu0 %2227, %v1107
        %v2229 = vpop.permute.xlu0 %2228
        %2231 = vset.pattern.permute.xlu0 5
        %2232 = vperm.xlu0 %2231, %v1108
        %v2233 = vpop.permute.xlu0 %2232
        %2235 = vset.pattern.permute.xlu0 5
        %2236 = vperm.xlu0 %2235, %v1109
        %v2237 = vpop.permute.xlu0 %2236
        %2239 = vset.pattern.permute.xlu0 5
        %2240 = vperm.xlu0 %2239, %v1110
        %v2241 = vpop.permute.xlu0 %2240
        %2243 = vset.pattern.permute.xlu0 5
        %2244 = vperm.xlu0 %2243, %v1111
        %v2245 = vpop.permute.xlu0 %2244
        %2247 = vset.pattern.permute.xlu0 5
        %2248 = vperm.xlu0 %2247, %v1112
        %v2249 = vpop.permute.xlu0 %2248
        %2251 = vset.pattern.permute.xlu0 5
        %2252 = vperm.xlu0 %2251, %v1113
        %v2253 = vpop.permute.xlu0 %2252
        %2255 = vset.pattern.permute.xlu0 5
        %2256 = vperm.xlu0 %2255, %v1114
        %v2257 = vpop.permute.xlu0 %2256
        %2259 = vset.pattern.permute.xlu0 5
        %2260 = vperm.xlu0 %2259, %v1115
        %v2261 = vpop.permute.xlu0 %2260
        %v2263 = vlaneseq
        %v2264 = vshrl.u32 %v2263, 7
        %v2265 = vsub.s32 5, %v2264
        %v2266 = vrot.slane %v259, %v2265
        %v2267 = vmul.f32 %v2137, %v2266
        %v2268 = vmul.f32 %v2141, %v2266
        %v2269 = vmul.f32 %v2145, %v2266
        %v2270 = vmul.f32 %v2149, %v2266
        %v2271 = vmul.f32 %v2153, %v2266
        %v2272 = vmul.f32 %v2157, %v2266
        %v2273 = vmul.f32 %v2161, %v2266
        %v2274 = vmul.f32 %v2165, %v2266
        %v2275 = vmul.f32 %v2169, %v2266
        %v2276 = vmul.f32 %v2173, %v2266
        %v2277 = vmul.f32 %v2177, %v2266
        %v2278 = vmul.f32 %v2181, %v2266
        %v2279 = vmul.f32 %v2185, %v2266
        %v2280 = vmul.f32 %v2189, %v2266
        %v2281 = vmul.f32 %v2193, %v2266
        %v2282 = vmul.f32 %v2197, %v2266
        %v2283 = vmul.f32 %v2201, %v2266
        %v2284 = vmul.f32 %v2205, %v2266
        %v2285 = vmul.f32 %v2209, %v2266
        %v2286 = vmul.f32 %v2213, %v2266
        %v2287 = vmul.f32 %v2217, %v2266
        %v2288 = vmul.f32 %v2221, %v2266
        %v2289 = vmul.f32 %v2225, %v2266
        %v2290 = vmul.f32 %v2229, %v2266
        %v2291 = vmul.f32 %v2233, %v2266
        %v2292 = vmul.f32 %v2237, %v2266
        %v2293 = vmul.f32 %v2241, %v2266
        %v2294 = vmul.f32 %v2245, %v2266
        %v2295 = vmul.f32 %v2249, %v2266
        %v2296 = vmul.f32 %v2253, %v2266
        %v2297 = vmul.f32 %v2257, %v2266
        %v2298 = vmul.f32 %v2261, %v2266
        %v2299 = vadd.f32 %v2103, %v2267
        %v2300 = vadd.f32 %v2104, %v2268
        %v2301 = vadd.f32 %v2105, %v2269
        %v2302 = vadd.f32 %v2106, %v2270
        %v2303 = vadd.f32 %v2107, %v2271
        %v2304 = vadd.f32 %v2108, %v2272
        %v2305 = vadd.f32 %v2109, %v2273
        %v2306 = vadd.f32 %v2110, %v2274
        %v2307 = vadd.f32 %v2111, %v2275
        %v2308 = vadd.f32 %v2112, %v2276
        %v2309 = vadd.f32 %v2113, %v2277
        %v2310 = vadd.f32 %v2114, %v2278
        %v2311 = vadd.f32 %v2115, %v2279
        %v2312 = vadd.f32 %v2116, %v2280
        %v2313 = vadd.f32 %v2117, %v2281
        %v2314 = vadd.f32 %v2118, %v2282
        %v2315 = vadd.f32 %v2119, %v2283
        %v2316 = vadd.f32 %v2120, %v2284
        %v2317 = vadd.f32 %v2121, %v2285
        %v2318 = vadd.f32 %v2122, %v2286
        %v2319 = vadd.f32 %v2123, %v2287
        %v2320 = vadd.f32 %v2124, %v2288
        %v2321 = vadd.f32 %v2125, %v2289
        %v2322 = vadd.f32 %v2126, %v2290
        %v2323 = vadd.f32 %v2127, %v2291
        %v2324 = vadd.f32 %v2128, %v2292
        %v2325 = vadd.f32 %v2129, %v2293
        %v2326 = vadd.f32 %v2130, %v2294
        %v2327 = vadd.f32 %v2131, %v2295
        %v2328 = vadd.f32 %v2132, %v2296
        %v2329 = vadd.f32 %v2133, %v2297
        %v2330 = vadd.f32 %v2134, %v2298
        %2331 = vset.pattern.permute.xlu0 6
        %2332 = vperm.xlu0 %2331, %v1084
        %v2333 = vpop.permute.xlu0 %2332
        %2335 = vset.pattern.permute.xlu0 6
        %2336 = vperm.xlu0 %2335, %v1085
        %v2337 = vpop.permute.xlu0 %2336
        %2339 = vset.pattern.permute.xlu0 6
        %2340 = vperm.xlu0 %2339, %v1086
        %v2341 = vpop.permute.xlu0 %2340
        %2343 = vset.pattern.permute.xlu0 6
        %2344 = vperm.xlu0 %2343, %v1087
        %v2345 = vpop.permute.xlu0 %2344
        %2347 = vset.pattern.permute.xlu0 6
        %2348 = vperm.xlu0 %2347, %v1088
        %v2349 = vpop.permute.xlu0 %2348
        %2351 = vset.pattern.permute.xlu0 6
        %2352 = vperm.xlu0 %2351, %v1089
        %v2353 = vpop.permute.xlu0 %2352
        %2355 = vset.pattern.permute.xlu0 6
        %2356 = vperm.xlu0 %2355, %v1090
        %v2357 = vpop.permute.xlu0 %2356
        %2359 = vset.pattern.permute.xlu0 6
        %2360 = vperm.xlu0 %2359, %v1091
        %v2361 = vpop.permute.xlu0 %2360
        %2363 = vset.pattern.permute.xlu0 6
        %2364 = vperm.xlu0 %2363, %v1092
        %v2365 = vpop.permute.xlu0 %2364
        %2367 = vset.pattern.permute.xlu0 6
        %2368 = vperm.xlu0 %2367, %v1093
        %v2369 = vpop.permute.xlu0 %2368
        %2371 = vset.pattern.permute.xlu0 6
        %2372 = vperm.xlu0 %2371, %v1094
        %v2373 = vpop.permute.xlu0 %2372
        %2375 = vset.pattern.permute.xlu0 6
        %2376 = vperm.xlu0 %2375, %v1095
        %v2377 = vpop.permute.xlu0 %2376
        %2379 = vset.pattern.permute.xlu0 6
        %2380 = vperm.xlu0 %2379, %v1096
        %v2381 = vpop.permute.xlu0 %2380
        %2383 = vset.pattern.permute.xlu0 6
        %2384 = vperm.xlu0 %2383, %v1097
        %v2385 = vpop.permute.xlu0 %2384
        %2387 = vset.pattern.permute.xlu0 6
        %2388 = vperm.xlu0 %2387, %v1098
        %v2389 = vpop.permute.xlu0 %2388
        %2391 = vset.pattern.permute.xlu0 6
        %2392 = vperm.xlu0 %2391, %v1099
        %v2393 = vpop.permute.xlu0 %2392
        %2395 = vset.pattern.permute.xlu0 6
        %2396 = vperm.xlu0 %2395, %v1100
        %v2397 = vpop.permute.xlu0 %2396
        %2399 = vset.pattern.permute.xlu0 6
        %2400 = vperm.xlu0 %2399, %v1101
        %v2401 = vpop.permute.xlu0 %2400
        %2403 = vset.pattern.permute.xlu0 6
        %2404 = vperm.xlu0 %2403, %v1102
        %v2405 = vpop.permute.xlu0 %2404
        %2407 = vset.pattern.permute.xlu0 6
        %2408 = vperm.xlu0 %2407, %v1103
        %v2409 = vpop.permute.xlu0 %2408
        %2411 = vset.pattern.permute.xlu0 6
        %2412 = vperm.xlu0 %2411, %v1104
        %v2413 = vpop.permute.xlu0 %2412
        %2415 = vset.pattern.permute.xlu0 6
        %2416 = vperm.xlu0 %2415, %v1105
        %v2417 = vpop.permute.xlu0 %2416
        %2419 = vset.pattern.permute.xlu0 6
        %2420 = vperm.xlu0 %2419, %v1106
        %v2421 = vpop.permute.xlu0 %2420
        %2423 = vset.pattern.permute.xlu0 6
        %2424 = vperm.xlu0 %2423, %v1107
        %v2425 = vpop.permute.xlu0 %2424
        %2427 = vset.pattern.permute.xlu0 6
        %2428 = vperm.xlu0 %2427, %v1108
        %v2429 = vpop.permute.xlu0 %2428
        %2431 = vset.pattern.permute.xlu0 6
        %2432 = vperm.xlu0 %2431, %v1109
        %v2433 = vpop.permute.xlu0 %2432
        %2435 = vset.pattern.permute.xlu0 6
        %2436 = vperm.xlu0 %2435, %v1110
        %v2437 = vpop.permute.xlu0 %2436
        %2439 = vset.pattern.permute.xlu0 6
        %2440 = vperm.xlu0 %2439, %v1111
        %v2441 = vpop.permute.xlu0 %2440
        %2443 = vset.pattern.permute.xlu0 6
        %2444 = vperm.xlu0 %2443, %v1112
        %v2445 = vpop.permute.xlu0 %2444
        %2447 = vset.pattern.permute.xlu0 6
        %2448 = vperm.xlu0 %2447, %v1113
        %v2449 = vpop.permute.xlu0 %2448
        %2451 = vset.pattern.permute.xlu0 6
        %2452 = vperm.xlu0 %2451, %v1114
        %v2453 = vpop.permute.xlu0 %2452
        %2455 = vset.pattern.permute.xlu0 6
        %2456 = vperm.xlu0 %2455, %v1115
        %v2457 = vpop.permute.xlu0 %2456
        %v2459 = vlaneseq
        %v2460 = vshrl.u32 %v2459, 7
        %v2461 = vsub.s32 6, %v2460
        %v2462 = vrot.slane %v259, %v2461
        %v2463 = vmul.f32 %v2333, %v2462
        %v2464 = vmul.f32 %v2337, %v2462
        %v2465 = vmul.f32 %v2341, %v2462
        %v2466 = vmul.f32 %v2345, %v2462
        %v2467 = vmul.f32 %v2349, %v2462
        %v2468 = vmul.f32 %v2353, %v2462
        %v2469 = vmul.f32 %v2357, %v2462
        %v2470 = vmul.f32 %v2361, %v2462
        %v2471 = vmul.f32 %v2365, %v2462
        %v2472 = vmul.f32 %v2369, %v2462
        %v2473 = vmul.f32 %v2373, %v2462
        %v2474 = vmul.f32 %v2377, %v2462
        %v2475 = vmul.f32 %v2381, %v2462
        %v2476 = vmul.f32 %v2385, %v2462
        %v2477 = vmul.f32 %v2389, %v2462
        %v2478 = vmul.f32 %v2393, %v2462
        %v2479 = vmul.f32 %v2397, %v2462
        %v2480 = vmul.f32 %v2401, %v2462
        %v2481 = vmul.f32 %v2405, %v2462
        %v2482 = vmul.f32 %v2409, %v2462
        %v2483 = vmul.f32 %v2413, %v2462
        %v2484 = vmul.f32 %v2417, %v2462
        %v2485 = vmul.f32 %v2421, %v2462
        %v2486 = vmul.f32 %v2425, %v2462
        %v2487 = vmul.f32 %v2429, %v2462
        %v2488 = vmul.f32 %v2433, %v2462
        %v2489 = vmul.f32 %v2437, %v2462
        %v2490 = vmul.f32 %v2441, %v2462
        %v2491 = vmul.f32 %v2445, %v2462
        %v2492 = vmul.f32 %v2449, %v2462
        %v2493 = vmul.f32 %v2453, %v2462
        %v2494 = vmul.f32 %v2457, %v2462
        %v2495 = vadd.f32 %v2299, %v2463
        %v2496 = vadd.f32 %v2300, %v2464
        %v2497 = vadd.f32 %v2301, %v2465
        %v2498 = vadd.f32 %v2302, %v2466
        %v2499 = vadd.f32 %v2303, %v2467
        %v2500 = vadd.f32 %v2304, %v2468
        %v2501 = vadd.f32 %v2305, %v2469
        %v2502 = vadd.f32 %v2306, %v2470
        %v2503 = vadd.f32 %v2307, %v2471
        %v2504 = vadd.f32 %v2308, %v2472
        %v2505 = vadd.f32 %v2309, %v2473
        %v2506 = vadd.f32 %v2310, %v2474
        %v2507 = vadd.f32 %v2311, %v2475
        %v2508 = vadd.f32 %v2312, %v2476
        %v2509 = vadd.f32 %v2313, %v2477
        %v2510 = vadd.f32 %v2314, %v2478
        %v2511 = vadd.f32 %v2315, %v2479
        %v2512 = vadd.f32 %v2316, %v2480
        %v2513 = vadd.f32 %v2317, %v2481
        %v2514 = vadd.f32 %v2318, %v2482
        %v2515 = vadd.f32 %v2319, %v2483
        %v2516 = vadd.f32 %v2320, %v2484
        %v2517 = vadd.f32 %v2321, %v2485
        %v2518 = vadd.f32 %v2322, %v2486
        %v2519 = vadd.f32 %v2323, %v2487
        %v2520 = vadd.f32 %v2324, %v2488
        %v2521 = vadd.f32 %v2325, %v2489
        %v2522 = vadd.f32 %v2326, %v2490
        %v2523 = vadd.f32 %v2327, %v2491
        %v2524 = vadd.f32 %v2328, %v2492
        %v2525 = vadd.f32 %v2329, %v2493
        %v2526 = vadd.f32 %v2330, %v2494
        %2527 = vset.pattern.permute.xlu0 7
        %2528 = vperm.xlu0 %2527, %v1084
        %v2529 = vpop.permute.xlu0 %2528
        %2531 = vset.pattern.permute.xlu0 7
        %2532 = vperm.xlu0 %2531, %v1085
        %v2533 = vpop.permute.xlu0 %2532
        %2535 = vset.pattern.permute.xlu0 7
        %2536 = vperm.xlu0 %2535, %v1086
        %v2537 = vpop.permute.xlu0 %2536
        %2539 = vset.pattern.permute.xlu0 7
        %2540 = vperm.xlu0 %2539, %v1087
        %v2541 = vpop.permute.xlu0 %2540
        %2543 = vset.pattern.permute.xlu0 7
        %2544 = vperm.xlu0 %2543, %v1088
        %v2545 = vpop.permute.xlu0 %2544
        %2547 = vset.pattern.permute.xlu0 7
        %2548 = vperm.xlu0 %2547, %v1089
        %v2549 = vpop.permute.xlu0 %2548
        %2551 = vset.pattern.permute.xlu0 7
        %2552 = vperm.xlu0 %2551, %v1090
        %v2553 = vpop.permute.xlu0 %2552
        %2555 = vset.pattern.permute.xlu0 7
        %2556 = vperm.xlu0 %2555, %v1091
        %v2557 = vpop.permute.xlu0 %2556
        %2559 = vset.pattern.permute.xlu0 7
        %2560 = vperm.xlu0 %2559, %v1092
        %v2561 = vpop.permute.xlu0 %2560
        %2563 = vset.pattern.permute.xlu0 7
        %2564 = vperm.xlu0 %2563, %v1093
        %v2565 = vpop.permute.xlu0 %2564
        %2567 = vset.pattern.permute.xlu0 7
        %2568 = vperm.xlu0 %2567, %v1094
        %v2569 = vpop.permute.xlu0 %2568
        %2571 = vset.pattern.permute.xlu0 7
        %2572 = vperm.xlu0 %2571, %v1095
        %v2573 = vpop.permute.xlu0 %2572
        %2575 = vset.pattern.permute.xlu0 7
        %2576 = vperm.xlu0 %2575, %v1096
        %v2577 = vpop.permute.xlu0 %2576
        %2579 = vset.pattern.permute.xlu0 7
        %2580 = vperm.xlu0 %2579, %v1097
        %v2581 = vpop.permute.xlu0 %2580
        %2583 = vset.pattern.permute.xlu0 7
        %2584 = vperm.xlu0 %2583, %v1098
        %v2585 = vpop.permute.xlu0 %2584
        %2587 = vset.pattern.permute.xlu0 7
        %2588 = vperm.xlu0 %2587, %v1099
        %v2589 = vpop.permute.xlu0 %2588
        %2591 = vset.pattern.permute.xlu0 7
        %2592 = vperm.xlu0 %2591, %v1100
        %v2593 = vpop.permute.xlu0 %2592
        %2595 = vset.pattern.permute.xlu0 7
        %2596 = vperm.xlu0 %2595, %v1101
        %v2597 = vpop.permute.xlu0 %2596
        %2599 = vset.pattern.permute.xlu0 7
        %2600 = vperm.xlu0 %2599, %v1102
        %v2601 = vpop.permute.xlu0 %2600
        %2603 = vset.pattern.permute.xlu0 7
        %2604 = vperm.xlu0 %2603, %v1103
        %v2605 = vpop.permute.xlu0 %2604
        %2607 = vset.pattern.permute.xlu0 7
        %2608 = vperm.xlu0 %2607, %v1104
        %v2609 = vpop.permute.xlu0 %2608
        %2611 = vset.pattern.permute.xlu0 7
        %2612 = vperm.xlu0 %2611, %v1105
        %v2613 = vpop.permute.xlu0 %2612
        %2615 = vset.pattern.permute.xlu0 7
        %2616 = vperm.xlu0 %2615, %v1106
        %v2617 = vpop.permute.xlu0 %2616
        %2619 = vset.pattern.permute.xlu0 7
        %2620 = vperm.xlu0 %2619, %v1107
        %v2621 = vpop.permute.xlu0 %2620
        %2623 = vset.pattern.permute.xlu0 7
        %2624 = vperm.xlu0 %2623, %v1108
        %v2625 = vpop.permute.xlu0 %2624
        %2627 = vset.pattern.permute.xlu0 7
        %2628 = vperm.xlu0 %2627, %v1109
        %v2629 = vpop.permute.xlu0 %2628
        %2631 = vset.pattern.permute.xlu0 7
        %2632 = vperm.xlu0 %2631, %v1110
        %v2633 = vpop.permute.xlu0 %2632
        %2635 = vset.pattern.permute.xlu0 7
        %2636 = vperm.xlu0 %2635, %v1111
        %v2637 = vpop.permute.xlu0 %2636
        %2639 = vset.pattern.permute.xlu0 7
        %2640 = vperm.xlu0 %2639, %v1112
        %v2641 = vpop.permute.xlu0 %2640
        %2643 = vset.pattern.permute.xlu0 7
        %2644 = vperm.xlu0 %2643, %v1113
        %v2645 = vpop.permute.xlu0 %2644
        %2647 = vset.pattern.permute.xlu0 7
        %2648 = vperm.xlu0 %2647, %v1114
        %v2649 = vpop.permute.xlu0 %2648
        %2651 = vset.pattern.permute.xlu0 7
        %2652 = vperm.xlu0 %2651, %v1115
        %v2653 = vpop.permute.xlu0 %2652
        %v2655 = vlaneseq
        %v2656 = vshrl.u32 %v2655, 7
        %v2657 = vsub.s32 7, %v2656
        %v2658 = vrot.slane %v259, %v2657
        %v2659 = vmul.f32 %v2529, %v2658
        %v2660 = vmul.f32 %v2533, %v2658
        %v2661 = vmul.f32 %v2537, %v2658
        %v2662 = vmul.f32 %v2541, %v2658
        %v2663 = vmul.f32 %v2545, %v2658
        %v2664 = vmul.f32 %v2549, %v2658
        %v2665 = vmul.f32 %v2553, %v2658
        %v2666 = vmul.f32 %v2557, %v2658
        %v2667 = vmul.f32 %v2561, %v2658
        %v2668 = vmul.f32 %v2565, %v2658
        %v2669 = vmul.f32 %v2569, %v2658
        %v2670 = vmul.f32 %v2573, %v2658
        %v2671 = vmul.f32 %v2577, %v2658
        %v2672 = vmul.f32 %v2581, %v2658
        %v2673 = vmul.f32 %v2585, %v2658
        %v2674 = vmul.f32 %v2589, %v2658
        %v2675 = vmul.f32 %v2593, %v2658
        %v2676 = vmul.f32 %v2597, %v2658
        %v2677 = vmul.f32 %v2601, %v2658
        %v2678 = vmul.f32 %v2605, %v2658
        %v2679 = vmul.f32 %v2609, %v2658
        %v2680 = vmul.f32 %v2613, %v2658
        %v2681 = vmul.f32 %v2617, %v2658
        %v2682 = vmul.f32 %v2621, %v2658
        %v2683 = vmul.f32 %v2625, %v2658
        %v2684 = vmul.f32 %v2629, %v2658
        %v2685 = vmul.f32 %v2633, %v2658
        %v2686 = vmul.f32 %v2637, %v2658
        %v2687 = vmul.f32 %v2641, %v2658
        %v2688 = vmul.f32 %v2645, %v2658
        %v2689 = vmul.f32 %v2649, %v2658
        %v2690 = vmul.f32 %v2653, %v2658
        %v2691 = vadd.f32 %v2495, %v2659
        %v2692 = vadd.f32 %v2496, %v2660
        %v2693 = vadd.f32 %v2497, %v2661
        %v2694 = vadd.f32 %v2498, %v2662
        %v2695 = vadd.f32 %v2499, %v2663
        %v2696 = vadd.f32 %v2500, %v2664
        %v2697 = vadd.f32 %v2501, %v2665
        %v2698 = vadd.f32 %v2502, %v2666
        %v2699 = vadd.f32 %v2503, %v2667
        %v2700 = vadd.f32 %v2504, %v2668
        %v2701 = vadd.f32 %v2505, %v2669
        %v2702 = vadd.f32 %v2506, %v2670
        %v2703 = vadd.f32 %v2507, %v2671
        %v2704 = vadd.f32 %v2508, %v2672
        %v2705 = vadd.f32 %v2509, %v2673
        %v2706 = vadd.f32 %v2510, %v2674
        %v2707 = vadd.f32 %v2511, %v2675
        %v2708 = vadd.f32 %v2512, %v2676
        %v2709 = vadd.f32 %v2513, %v2677
        %v2710 = vadd.f32 %v2514, %v2678
        %v2711 = vadd.f32 %v2515, %v2679
        %v2712 = vadd.f32 %v2516, %v2680
        %v2713 = vadd.f32 %v2517, %v2681
        %v2714 = vadd.f32 %v2518, %v2682
        %v2715 = vadd.f32 %v2519, %v2683
        %v2716 = vadd.f32 %v2520, %v2684
        %v2717 = vadd.f32 %v2521, %v2685
        %v2718 = vadd.f32 %v2522, %v2686
        %v2719 = vadd.f32 %v2523, %v2687
        %v2720 = vadd.f32 %v2524, %v2688
        %v2721 = vadd.f32 %v2525, %v2689
        %v2722 = vadd.f32 %v2526, %v2690
        %2723 = vset.pattern.permute.xlu0 8
        %2724 = vperm.xlu0 %2723, %v1084
        %v2725 = vpop.permute.xlu0 %2724
        %2727 = vset.pattern.permute.xlu0 8
        %2728 = vperm.xlu0 %2727, %v1085
        %v2729 = vpop.permute.xlu0 %2728
        %2731 = vset.pattern.permute.xlu0 8
        %2732 = vperm.xlu0 %2731, %v1086
        %v2733 = vpop.permute.xlu0 %2732
        %2735 = vset.pattern.permute.xlu0 8
        %2736 = vperm.xlu0 %2735, %v1087
        %v2737 = vpop.permute.xlu0 %2736
        %2739 = vset.pattern.permute.xlu0 8
        %2740 = vperm.xlu0 %2739, %v1088
        %v2741 = vpop.permute.xlu0 %2740
        %2743 = vset.pattern.permute.xlu0 8
        %2744 = vperm.xlu0 %2743, %v1089
        %v2745 = vpop.permute.xlu0 %2744
        %2747 = vset.pattern.permute.xlu0 8
        %2748 = vperm.xlu0 %2747, %v1090
        %v2749 = vpop.permute.xlu0 %2748
        %2751 = vset.pattern.permute.xlu0 8
        %2752 = vperm.xlu0 %2751, %v1091
        %v2753 = vpop.permute.xlu0 %2752
        %2755 = vset.pattern.permute.xlu0 8
        %2756 = vperm.xlu0 %2755, %v1092
        %v2757 = vpop.permute.xlu0 %2756
        %2759 = vset.pattern.permute.xlu0 8
        %2760 = vperm.xlu0 %2759, %v1093
        %v2761 = vpop.permute.xlu0 %2760
        %2763 = vset.pattern.permute.xlu0 8
        %2764 = vperm.xlu0 %2763, %v1094
        %v2765 = vpop.permute.xlu0 %2764
        %2767 = vset.pattern.permute.xlu0 8
        %2768 = vperm.xlu0 %2767, %v1095
        %v2769 = vpop.permute.xlu0 %2768
        %2771 = vset.pattern.permute.xlu0 8
        %2772 = vperm.xlu0 %2771, %v1096
        %v2773 = vpop.permute.xlu0 %2772
        %2775 = vset.pattern.permute.xlu0 8
        %2776 = vperm.xlu0 %2775, %v1097
        %v2777 = vpop.permute.xlu0 %2776
        %2779 = vset.pattern.permute.xlu0 8
        %2780 = vperm.xlu0 %2779, %v1098
        %v2781 = vpop.permute.xlu0 %2780
        %2783 = vset.pattern.permute.xlu0 8
        %2784 = vperm.xlu0 %2783, %v1099
        %v2785 = vpop.permute.xlu0 %2784
        %2787 = vset.pattern.permute.xlu0 8
        %2788 = vperm.xlu0 %2787, %v1100
        %v2789 = vpop.permute.xlu0 %2788
        %2791 = vset.pattern.permute.xlu0 8
        %2792 = vperm.xlu0 %2791, %v1101
        %v2793 = vpop.permute.xlu0 %2792
        %2795 = vset.pattern.permute.xlu0 8
        %2796 = vperm.xlu0 %2795, %v1102
        %v2797 = vpop.permute.xlu0 %2796
        %2799 = vset.pattern.permute.xlu0 8
        %2800 = vperm.xlu0 %2799, %v1103
        %v2801 = vpop.permute.xlu0 %2800
        %2803 = vset.pattern.permute.xlu0 8
        %2804 = vperm.xlu0 %2803, %v1104
        %v2805 = vpop.permute.xlu0 %2804
        %2807 = vset.pattern.permute.xlu0 8
        %2808 = vperm.xlu0 %2807, %v1105
        %v2809 = vpop.permute.xlu0 %2808
        %2811 = vset.pattern.permute.xlu0 8
        %2812 = vperm.xlu0 %2811, %v1106
        %v2813 = vpop.permute.xlu0 %2812
        %2815 = vset.pattern.permute.xlu0 8
        %2816 = vperm.xlu0 %2815, %v1107
        %v2817 = vpop.permute.xlu0 %2816
        %2819 = vset.pattern.permute.xlu0 8
        %2820 = vperm.xlu0 %2819, %v1108
        %v2821 = vpop.permute.xlu0 %2820
        %2823 = vset.pattern.permute.xlu0 8
        %2824 = vperm.xlu0 %2823, %v1109
        %v2825 = vpop.permute.xlu0 %2824
        %2827 = vset.pattern.permute.xlu0 8
        %2828 = vperm.xlu0 %2827, %v1110
        %v2829 = vpop.permute.xlu0 %2828
        %2831 = vset.pattern.permute.xlu0 8
        %2832 = vperm.xlu0 %2831, %v1111
        %v2833 = vpop.permute.xlu0 %2832
        %2835 = vset.pattern.permute.xlu0 8
        %2836 = vperm.xlu0 %2835, %v1112
        %v2837 = vpop.permute.xlu0 %2836
        %2839 = vset.pattern.permute.xlu0 8
        %2840 = vperm.xlu0 %2839, %v1113
        %v2841 = vpop.permute.xlu0 %2840
        %2843 = vset.pattern.permute.xlu0 8
        %2844 = vperm.xlu0 %2843, %v1114
        %v2845 = vpop.permute.xlu0 %2844
        %2847 = vset.pattern.permute.xlu0 8
        %2848 = vperm.xlu0 %2847, %v1115
        %v2849 = vpop.permute.xlu0 %2848
        %v2851 = vlaneseq
        %v2852 = vshrl.u32 %v2851, 7
        %v2853 = vsub.s32 0, %v2852
        %v2854 = vrot.slane %v260, %v2853
        %v2855 = vmul.f32 %v2725, %v2854
        %v2856 = vmul.f32 %v2729, %v2854
        %v2857 = vmul.f32 %v2733, %v2854
        %v2858 = vmul.f32 %v2737, %v2854
        %v2859 = vmul.f32 %v2741, %v2854
        %v2860 = vmul.f32 %v2745, %v2854
        %v2861 = vmul.f32 %v2749, %v2854
        %v2862 = vmul.f32 %v2753, %v2854
        %v2863 = vmul.f32 %v2757, %v2854
        %v2864 = vmul.f32 %v2761, %v2854
        %v2865 = vmul.f32 %v2765, %v2854
        %v2866 = vmul.f32 %v2769, %v2854
        %v2867 = vmul.f32 %v2773, %v2854
        %v2868 = vmul.f32 %v2777, %v2854
        %v2869 = vmul.f32 %v2781, %v2854
        %v2870 = vmul.f32 %v2785, %v2854
        %v2871 = vmul.f32 %v2789, %v2854
        %v2872 = vmul.f32 %v2793, %v2854
        %v2873 = vmul.f32 %v2797, %v2854
        %v2874 = vmul.f32 %v2801, %v2854
        %v2875 = vmul.f32 %v2805, %v2854
        %v2876 = vmul.f32 %v2809, %v2854
        %v2877 = vmul.f32 %v2813, %v2854
        %v2878 = vmul.f32 %v2817, %v2854
        %v2879 = vmul.f32 %v2821, %v2854
        %v2880 = vmul.f32 %v2825, %v2854
        %v2881 = vmul.f32 %v2829, %v2854
        %v2882 = vmul.f32 %v2833, %v2854
        %v2883 = vmul.f32 %v2837, %v2854
        %v2884 = vmul.f32 %v2841, %v2854
        %v2885 = vmul.f32 %v2845, %v2854
        %v2886 = vmul.f32 %v2849, %v2854
        %v2887 = vadd.f32 %v2691, %v2855
        %v2888 = vadd.f32 %v2692, %v2856
        %v2889 = vadd.f32 %v2693, %v2857
        %v2890 = vadd.f32 %v2694, %v2858
        %v2891 = vadd.f32 %v2695, %v2859
        %v2892 = vadd.f32 %v2696, %v2860
        %v2893 = vadd.f32 %v2697, %v2861
        %v2894 = vadd.f32 %v2698, %v2862
        %v2895 = vadd.f32 %v2699, %v2863
        %v2896 = vadd.f32 %v2700, %v2864
        %v2897 = vadd.f32 %v2701, %v2865
        %v2898 = vadd.f32 %v2702, %v2866
        %v2899 = vadd.f32 %v2703, %v2867
        %v2900 = vadd.f32 %v2704, %v2868
        %v2901 = vadd.f32 %v2705, %v2869
        %v2902 = vadd.f32 %v2706, %v2870
        %v2903 = vadd.f32 %v2707, %v2871
        %v2904 = vadd.f32 %v2708, %v2872
        %v2905 = vadd.f32 %v2709, %v2873
        %v2906 = vadd.f32 %v2710, %v2874
        %v2907 = vadd.f32 %v2711, %v2875
        %v2908 = vadd.f32 %v2712, %v2876
        %v2909 = vadd.f32 %v2713, %v2877
        %v2910 = vadd.f32 %v2714, %v2878
        %v2911 = vadd.f32 %v2715, %v2879
        %v2912 = vadd.f32 %v2716, %v2880
        %v2913 = vadd.f32 %v2717, %v2881
        %v2914 = vadd.f32 %v2718, %v2882
        %v2915 = vadd.f32 %v2719, %v2883
        %v2916 = vadd.f32 %v2720, %v2884
        %v2917 = vadd.f32 %v2721, %v2885
        %v2918 = vadd.f32 %v2722, %v2886
        %2919 = vset.pattern.permute.xlu0 9
        %2920 = vperm.xlu0 %2919, %v1084
        %v2921 = vpop.permute.xlu0 %2920
        %2923 = vset.pattern.permute.xlu0 9
        %2924 = vperm.xlu0 %2923, %v1085
        %v2925 = vpop.permute.xlu0 %2924
        %2927 = vset.pattern.permute.xlu0 9
        %2928 = vperm.xlu0 %2927, %v1086
        %v2929 = vpop.permute.xlu0 %2928
        %2931 = vset.pattern.permute.xlu0 9
        %2932 = vperm.xlu0 %2931, %v1087
        %v2933 = vpop.permute.xlu0 %2932
        %2935 = vset.pattern.permute.xlu0 9
        %2936 = vperm.xlu0 %2935, %v1088
        %v2937 = vpop.permute.xlu0 %2936
        %2939 = vset.pattern.permute.xlu0 9
        %2940 = vperm.xlu0 %2939, %v1089
        %v2941 = vpop.permute.xlu0 %2940
        %2943 = vset.pattern.permute.xlu0 9
        %2944 = vperm.xlu0 %2943, %v1090
        %v2945 = vpop.permute.xlu0 %2944
        %2947 = vset.pattern.permute.xlu0 9
        %2948 = vperm.xlu0 %2947, %v1091
        %v2949 = vpop.permute.xlu0 %2948
        %2951 = vset.pattern.permute.xlu0 9
        %2952 = vperm.xlu0 %2951, %v1092
        %v2953 = vpop.permute.xlu0 %2952
        %2955 = vset.pattern.permute.xlu0 9
        %2956 = vperm.xlu0 %2955, %v1093
        %v2957 = vpop.permute.xlu0 %2956
        %2959 = vset.pattern.permute.xlu0 9
        %2960 = vperm.xlu0 %2959, %v1094
        %v2961 = vpop.permute.xlu0 %2960
        %2963 = vset.pattern.permute.xlu0 9
        %2964 = vperm.xlu0 %2963, %v1095
        %v2965 = vpop.permute.xlu0 %2964
        %2967 = vset.pattern.permute.xlu0 9
        %2968 = vperm.xlu0 %2967, %v1096
        %v2969 = vpop.permute.xlu0 %2968
        %2971 = vset.pattern.permute.xlu0 9
        %2972 = vperm.xlu0 %2971, %v1097
        %v2973 = vpop.permute.xlu0 %2972
        %2975 = vset.pattern.permute.xlu0 9
        %2976 = vperm.xlu0 %2975, %v1098
        %v2977 = vpop.permute.xlu0 %2976
        %2979 = vset.pattern.permute.xlu0 9
        %2980 = vperm.xlu0 %2979, %v1099
        %v2981 = vpop.permute.xlu0 %2980
        %2983 = vset.pattern.permute.xlu0 9
        %2984 = vperm.xlu0 %2983, %v1100
        %v2985 = vpop.permute.xlu0 %2984
        %2987 = vset.pattern.permute.xlu0 9
        %2988 = vperm.xlu0 %2987, %v1101
        %v2989 = vpop.permute.xlu0 %2988
        %2991 = vset.pattern.permute.xlu0 9
        %2992 = vperm.xlu0 %2991, %v1102
        %v2993 = vpop.permute.xlu0 %2992
        %2995 = vset.pattern.permute.xlu0 9
        %2996 = vperm.xlu0 %2995, %v1103
        %v2997 = vpop.permute.xlu0 %2996
        %2999 = vset.pattern.permute.xlu0 9
        %3000 = vperm.xlu0 %2999, %v1104
        %v3001 = vpop.permute.xlu0 %3000
        %3003 = vset.pattern.permute.xlu0 9
        %3004 = vperm.xlu0 %3003, %v1105
        %v3005 = vpop.permute.xlu0 %3004
        %3007 = vset.pattern.permute.xlu0 9
        %3008 = vperm.xlu0 %3007, %v1106
        %v3009 = vpop.permute.xlu0 %3008
        %3011 = vset.pattern.permute.xlu0 9
        %3012 = vperm.xlu0 %3011, %v1107
        %v3013 = vpop.permute.xlu0 %3012
        %3015 = vset.pattern.permute.xlu0 9
        %3016 = vperm.xlu0 %3015, %v1108
        %v3017 = vpop.permute.xlu0 %3016
        %3019 = vset.pattern.permute.xlu0 9
        %3020 = vperm.xlu0 %3019, %v1109
        %v3021 = vpop.permute.xlu0 %3020
        %3023 = vset.pattern.permute.xlu0 9
        %3024 = vperm.xlu0 %3023, %v1110
        %v3025 = vpop.permute.xlu0 %3024
        %3027 = vset.pattern.permute.xlu0 9
        %3028 = vperm.xlu0 %3027, %v1111
        %v3029 = vpop.permute.xlu0 %3028
        %3031 = vset.pattern.permute.xlu0 9
        %3032 = vperm.xlu0 %3031, %v1112
        %v3033 = vpop.permute.xlu0 %3032
        %3035 = vset.pattern.permute.xlu0 9
        %3036 = vperm.xlu0 %3035, %v1113
        %v3037 = vpop.permute.xlu0 %3036
        %3039 = vset.pattern.permute.xlu0 9
        %3040 = vperm.xlu0 %3039, %v1114
        %v3041 = vpop.permute.xlu0 %3040
        %3043 = vset.pattern.permute.xlu0 9
        %3044 = vperm.xlu0 %3043, %v1115
        %v3045 = vpop.permute.xlu0 %3044
        %v3047 = vlaneseq
        %v3048 = vshrl.u32 %v3047, 7
        %v3049 = vsub.s32 1, %v3048
        %v3050 = vrot.slane %v260, %v3049
        %v3051 = vmul.f32 %v2921, %v3050
        %v3052 = vmul.f32 %v2925, %v3050
        %v3053 = vmul.f32 %v2929, %v3050
        %v3054 = vmul.f32 %v2933, %v3050
        %v3055 = vmul.f32 %v2937, %v3050
        %v3056 = vmul.f32 %v2941, %v3050
        %v3057 = vmul.f32 %v2945, %v3050
        %v3058 = vmul.f32 %v2949, %v3050
        %v3059 = vmul.f32 %v2953, %v3050
        %v3060 = vmul.f32 %v2957, %v3050
        %v3061 = vmul.f32 %v2961, %v3050
        %v3062 = vmul.f32 %v2965, %v3050
        %v3063 = vmul.f32 %v2969, %v3050
        %v3064 = vmul.f32 %v2973, %v3050
        %v3065 = vmul.f32 %v2977, %v3050
        %v3066 = vmul.f32 %v2981, %v3050
        %v3067 = vmul.f32 %v2985, %v3050
        %v3068 = vmul.f32 %v2989, %v3050
        %v3069 = vmul.f32 %v2993, %v3050
        %v3070 = vmul.f32 %v2997, %v3050
        %v3071 = vmul.f32 %v3001, %v3050
        %v3072 = vmul.f32 %v3005, %v3050
        %v3073 = vmul.f32 %v3009, %v3050
        %v3074 = vmul.f32 %v3013, %v3050
        %v3075 = vmul.f32 %v3017, %v3050
        %v3076 = vmul.f32 %v3021, %v3050
        %v3077 = vmul.f32 %v3025, %v3050
        %v3078 = vmul.f32 %v3029, %v3050
        %v3079 = vmul.f32 %v3033, %v3050
        %v3080 = vmul.f32 %v3037, %v3050
        %v3081 = vmul.f32 %v3041, %v3050
        %v3082 = vmul.f32 %v3045, %v3050
        %v3083 = vadd.f32 %v2887, %v3051
        %v3084 = vadd.f32 %v2888, %v3052
        %v3085 = vadd.f32 %v2889, %v3053
        %v3086 = vadd.f32 %v2890, %v3054
        %v3087 = vadd.f32 %v2891, %v3055
        %v3088 = vadd.f32 %v2892, %v3056
        %v3089 = vadd.f32 %v2893, %v3057
        %v3090 = vadd.f32 %v2894, %v3058
        %v3091 = vadd.f32 %v2895, %v3059
        %v3092 = vadd.f32 %v2896, %v3060
        %v3093 = vadd.f32 %v2897, %v3061
        %v3094 = vadd.f32 %v2898, %v3062
        %v3095 = vadd.f32 %v2899, %v3063
        %v3096 = vadd.f32 %v2900, %v3064
        %v3097 = vadd.f32 %v2901, %v3065
        %v3098 = vadd.f32 %v2902, %v3066
        %v3099 = vadd.f32 %v2903, %v3067
        %v3100 = vadd.f32 %v2904, %v3068
        %v3101 = vadd.f32 %v2905, %v3069
        %v3102 = vadd.f32 %v2906, %v3070
        %v3103 = vadd.f32 %v2907, %v3071
        %v3104 = vadd.f32 %v2908, %v3072
        %v3105 = vadd.f32 %v2909, %v3073
        %v3106 = vadd.f32 %v2910, %v3074
        %v3107 = vadd.f32 %v2911, %v3075
        %v3108 = vadd.f32 %v2912, %v3076
        %v3109 = vadd.f32 %v2913, %v3077
        %v3110 = vadd.f32 %v2914, %v3078
        %v3111 = vadd.f32 %v2915, %v3079
        %v3112 = vadd.f32 %v2916, %v3080
        %v3113 = vadd.f32 %v2917, %v3081
        %v3114 = vadd.f32 %v2918, %v3082
        %3115 = vset.pattern.permute.xlu0 10
        %3116 = vperm.xlu0 %3115, %v1084
        %v3117 = vpop.permute.xlu0 %3116
        %3119 = vset.pattern.permute.xlu0 10
        %3120 = vperm.xlu0 %3119, %v1085
        %v3121 = vpop.permute.xlu0 %3120
        %3123 = vset.pattern.permute.xlu0 10
        %3124 = vperm.xlu0 %3123, %v1086
        %v3125 = vpop.permute.xlu0 %3124
        %3127 = vset.pattern.permute.xlu0 10
        %3128 = vperm.xlu0 %3127, %v1087
        %v3129 = vpop.permute.xlu0 %3128
        %3131 = vset.pattern.permute.xlu0 10
        %3132 = vperm.xlu0 %3131, %v1088
        %v3133 = vpop.permute.xlu0 %3132
        %3135 = vset.pattern.permute.xlu0 10
        %3136 = vperm.xlu0 %3135, %v1089
        %v3137 = vpop.permute.xlu0 %3136
        %3139 = vset.pattern.permute.xlu0 10
        %3140 = vperm.xlu0 %3139, %v1090
        %v3141 = vpop.permute.xlu0 %3140
        %3143 = vset.pattern.permute.xlu0 10
        %3144 = vperm.xlu0 %3143, %v1091
        %v3145 = vpop.permute.xlu0 %3144
        %3147 = vset.pattern.permute.xlu0 10
        %3148 = vperm.xlu0 %3147, %v1092
        %v3149 = vpop.permute.xlu0 %3148
        %3151 = vset.pattern.permute.xlu0 10
        %3152 = vperm.xlu0 %3151, %v1093
        %v3153 = vpop.permute.xlu0 %3152
        %3155 = vset.pattern.permute.xlu0 10
        %3156 = vperm.xlu0 %3155, %v1094
        %v3157 = vpop.permute.xlu0 %3156
        %3159 = vset.pattern.permute.xlu0 10
        %3160 = vperm.xlu0 %3159, %v1095
        %v3161 = vpop.permute.xlu0 %3160
        %3163 = vset.pattern.permute.xlu0 10
        %3164 = vperm.xlu0 %3163, %v1096
        %v3165 = vpop.permute.xlu0 %3164
        %3167 = vset.pattern.permute.xlu0 10
        %3168 = vperm.xlu0 %3167, %v1097
        %v3169 = vpop.permute.xlu0 %3168
        %3171 = vset.pattern.permute.xlu0 10
        %3172 = vperm.xlu0 %3171, %v1098
        %v3173 = vpop.permute.xlu0 %3172
        %3175 = vset.pattern.permute.xlu0 10
        %3176 = vperm.xlu0 %3175, %v1099
        %v3177 = vpop.permute.xlu0 %3176
        %3179 = vset.pattern.permute.xlu0 10
        %3180 = vperm.xlu0 %3179, %v1100
        %v3181 = vpop.permute.xlu0 %3180
        %3183 = vset.pattern.permute.xlu0 10
        %3184 = vperm.xlu0 %3183, %v1101
        %v3185 = vpop.permute.xlu0 %3184
        %3187 = vset.pattern.permute.xlu0 10
        %3188 = vperm.xlu0 %3187, %v1102
        %v3189 = vpop.permute.xlu0 %3188
        %3191 = vset.pattern.permute.xlu0 10
        %3192 = vperm.xlu0 %3191, %v1103
        %v3193 = vpop.permute.xlu0 %3192
        %3195 = vset.pattern.permute.xlu0 10
        %3196 = vperm.xlu0 %3195, %v1104
        %v3197 = vpop.permute.xlu0 %3196
        %3199 = vset.pattern.permute.xlu0 10
        %3200 = vperm.xlu0 %3199, %v1105
        %v3201 = vpop.permute.xlu0 %3200
        %3203 = vset.pattern.permute.xlu0 10
        %3204 = vperm.xlu0 %3203, %v1106
        %v3205 = vpop.permute.xlu0 %3204
        %3207 = vset.pattern.permute.xlu0 10
        %3208 = vperm.xlu0 %3207, %v1107
        %v3209 = vpop.permute.xlu0 %3208
        %3211 = vset.pattern.permute.xlu0 10
        %3212 = vperm.xlu0 %3211, %v1108
        %v3213 = vpop.permute.xlu0 %3212
        %3215 = vset.pattern.permute.xlu0 10
        %3216 = vperm.xlu0 %3215, %v1109
        %v3217 = vpop.permute.xlu0 %3216
        %3219 = vset.pattern.permute.xlu0 10
        %3220 = vperm.xlu0 %3219, %v1110
        %v3221 = vpop.permute.xlu0 %3220
        %3223 = vset.pattern.permute.xlu0 10
        %3224 = vperm.xlu0 %3223, %v1111
        %v3225 = vpop.permute.xlu0 %3224
        %3227 = vset.pattern.permute.xlu0 10
        %3228 = vperm.xlu0 %3227, %v1112
        %v3229 = vpop.permute.xlu0 %3228
        %3231 = vset.pattern.permute.xlu0 10
        %3232 = vperm.xlu0 %3231, %v1113
        %v3233 = vpop.permute.xlu0 %3232
        %3235 = vset.pattern.permute.xlu0 10
        %3236 = vperm.xlu0 %3235, %v1114
        %v3237 = vpop.permute.xlu0 %3236
        %3239 = vset.pattern.permute.xlu0 10
        %3240 = vperm.xlu0 %3239, %v1115
        %v3241 = vpop.permute.xlu0 %3240
        %v3243 = vlaneseq
        %v3244 = vshrl.u32 %v3243, 7
        %v3245 = vsub.s32 2, %v3244
        %v3246 = vrot.slane %v260, %v3245
        %v3247 = vmul.f32 %v3117, %v3246
        %v3248 = vmul.f32 %v3121, %v3246
        %v3249 = vmul.f32 %v3125, %v3246
        %v3250 = vmul.f32 %v3129, %v3246
        %v3251 = vmul.f32 %v3133, %v3246
        %v3252 = vmul.f32 %v3137, %v3246
        %v3253 = vmul.f32 %v3141, %v3246
        %v3254 = vmul.f32 %v3145, %v3246
        %v3255 = vmul.f32 %v3149, %v3246
        %v3256 = vmul.f32 %v3153, %v3246
        %v3257 = vmul.f32 %v3157, %v3246
        %v3258 = vmul.f32 %v3161, %v3246
        %v3259 = vmul.f32 %v3165, %v3246
        %v3260 = vmul.f32 %v3169, %v3246
        %v3261 = vmul.f32 %v3173, %v3246
        %v3262 = vmul.f32 %v3177, %v3246
        %v3263 = vmul.f32 %v3181, %v3246
        %v3264 = vmul.f32 %v3185, %v3246
        %v3265 = vmul.f32 %v3189, %v3246
        %v3266 = vmul.f32 %v3193, %v3246
        %v3267 = vmul.f32 %v3197, %v3246
        %v3268 = vmul.f32 %v3201, %v3246
        %v3269 = vmul.f32 %v3205, %v3246
        %v3270 = vmul.f32 %v3209, %v3246
        %v3271 = vmul.f32 %v3213, %v3246
        %v3272 = vmul.f32 %v3217, %v3246
        %v3273 = vmul.f32 %v3221, %v3246
        %v3274 = vmul.f32 %v3225, %v3246
        %v3275 = vmul.f32 %v3229, %v3246
        %v3276 = vmul.f32 %v3233, %v3246
        %v3277 = vmul.f32 %v3237, %v3246
        %v3278 = vmul.f32 %v3241, %v3246
        %v3279 = vadd.f32 %v3083, %v3247
        %v3280 = vadd.f32 %v3084, %v3248
        %v3281 = vadd.f32 %v3085, %v3249
        %v3282 = vadd.f32 %v3086, %v3250
        %v3283 = vadd.f32 %v3087, %v3251
        %v3284 = vadd.f32 %v3088, %v3252
        %v3285 = vadd.f32 %v3089, %v3253
        %v3286 = vadd.f32 %v3090, %v3254
        %v3287 = vadd.f32 %v3091, %v3255
        %v3288 = vadd.f32 %v3092, %v3256
        %v3289 = vadd.f32 %v3093, %v3257
        %v3290 = vadd.f32 %v3094, %v3258
        %v3291 = vadd.f32 %v3095, %v3259
        %v3292 = vadd.f32 %v3096, %v3260
        %v3293 = vadd.f32 %v3097, %v3261
        %v3294 = vadd.f32 %v3098, %v3262
        %v3295 = vadd.f32 %v3099, %v3263
        %v3296 = vadd.f32 %v3100, %v3264
        %v3297 = vadd.f32 %v3101, %v3265
        %v3298 = vadd.f32 %v3102, %v3266
        %v3299 = vadd.f32 %v3103, %v3267
        %v3300 = vadd.f32 %v3104, %v3268
        %v3301 = vadd.f32 %v3105, %v3269
        %v3302 = vadd.f32 %v3106, %v3270
        %v3303 = vadd.f32 %v3107, %v3271
        %v3304 = vadd.f32 %v3108, %v3272
        %v3305 = vadd.f32 %v3109, %v3273
        %v3306 = vadd.f32 %v3110, %v3274
        %v3307 = vadd.f32 %v3111, %v3275
        %v3308 = vadd.f32 %v3112, %v3276
        %v3309 = vadd.f32 %v3113, %v3277
        %v3310 = vadd.f32 %v3114, %v3278
        %3311 = vset.pattern.permute.xlu0 11
        %3312 = vperm.xlu0 %3311, %v1084
        %v3313 = vpop.permute.xlu0 %3312
        %3315 = vset.pattern.permute.xlu0 11
        %3316 = vperm.xlu0 %3315, %v1085
        %v3317 = vpop.permute.xlu0 %3316
        %3319 = vset.pattern.permute.xlu0 11
        %3320 = vperm.xlu0 %3319, %v1086
        %v3321 = vpop.permute.xlu0 %3320
        %3323 = vset.pattern.permute.xlu0 11
        %3324 = vperm.xlu0 %3323, %v1087
        %v3325 = vpop.permute.xlu0 %3324
        %3327 = vset.pattern.permute.xlu0 11
        %3328 = vperm.xlu0 %3327, %v1088
        %v3329 = vpop.permute.xlu0 %3328
        %3331 = vset.pattern.permute.xlu0 11
        %3332 = vperm.xlu0 %3331, %v1089
        %v3333 = vpop.permute.xlu0 %3332
        %3335 = vset.pattern.permute.xlu0 11
        %3336 = vperm.xlu0 %3335, %v1090
        %v3337 = vpop.permute.xlu0 %3336
        %3339 = vset.pattern.permute.xlu0 11
        %3340 = vperm.xlu0 %3339, %v1091
        %v3341 = vpop.permute.xlu0 %3340
        %3343 = vset.pattern.permute.xlu0 11
        %3344 = vperm.xlu0 %3343, %v1092
        %v3345 = vpop.permute.xlu0 %3344
        %3347 = vset.pattern.permute.xlu0 11
        %3348 = vperm.xlu0 %3347, %v1093
        %v3349 = vpop.permute.xlu0 %3348
        %3351 = vset.pattern.permute.xlu0 11
        %3352 = vperm.xlu0 %3351, %v1094
        %v3353 = vpop.permute.xlu0 %3352
        %3355 = vset.pattern.permute.xlu0 11
        %3356 = vperm.xlu0 %3355, %v1095
        %v3357 = vpop.permute.xlu0 %3356
        %3359 = vset.pattern.permute.xlu0 11
        %3360 = vperm.xlu0 %3359, %v1096
        %v3361 = vpop.permute.xlu0 %3360
        %3363 = vset.pattern.permute.xlu0 11
        %3364 = vperm.xlu0 %3363, %v1097
        %v3365 = vpop.permute.xlu0 %3364
        %3367 = vset.pattern.permute.xlu0 11
        %3368 = vperm.xlu0 %3367, %v1098
        %v3369 = vpop.permute.xlu0 %3368
        %3371 = vset.pattern.permute.xlu0 11
        %3372 = vperm.xlu0 %3371, %v1099
        %v3373 = vpop.permute.xlu0 %3372
        %3375 = vset.pattern.permute.xlu0 11
        %3376 = vperm.xlu0 %3375, %v1100
        %v3377 = vpop.permute.xlu0 %3376
        %3379 = vset.pattern.permute.xlu0 11
        %3380 = vperm.xlu0 %3379, %v1101
        %v3381 = vpop.permute.xlu0 %3380
        %3383 = vset.pattern.permute.xlu0 11
        %3384 = vperm.xlu0 %3383, %v1102
        %v3385 = vpop.permute.xlu0 %3384
        %3387 = vset.pattern.permute.xlu0 11
        %3388 = vperm.xlu0 %3387, %v1103
        %v3389 = vpop.permute.xlu0 %3388
        %3391 = vset.pattern.permute.xlu0 11
        %3392 = vperm.xlu0 %3391, %v1104
        %v3393 = vpop.permute.xlu0 %3392
        %3395 = vset.pattern.permute.xlu0 11
        %3396 = vperm.xlu0 %3395, %v1105
        %v3397 = vpop.permute.xlu0 %3396
        %3399 = vset.pattern.permute.xlu0 11
        %3400 = vperm.xlu0 %3399, %v1106
        %v3401 = vpop.permute.xlu0 %3400
        %3403 = vset.pattern.permute.xlu0 11
        %3404 = vperm.xlu0 %3403, %v1107
        %v3405 = vpop.permute.xlu0 %3404
        %3407 = vset.pattern.permute.xlu0 11
        %3408 = vperm.xlu0 %3407, %v1108
        %v3409 = vpop.permute.xlu0 %3408
        %3411 = vset.pattern.permute.xlu0 11
        %3412 = vperm.xlu0 %3411, %v1109
        %v3413 = vpop.permute.xlu0 %3412
        %3415 = vset.pattern.permute.xlu0 11
        %3416 = vperm.xlu0 %3415, %v1110
        %v3417 = vpop.permute.xlu0 %3416
        %3419 = vset.pattern.permute.xlu0 11
        %3420 = vperm.xlu0 %3419, %v1111
        %v3421 = vpop.permute.xlu0 %3420
        %3423 = vset.pattern.permute.xlu0 11
        %3424 = vperm.xlu0 %3423, %v1112
        %v3425 = vpop.permute.xlu0 %3424
        %3427 = vset.pattern.permute.xlu0 11
        %3428 = vperm.xlu0 %3427, %v1113
        %v3429 = vpop.permute.xlu0 %3428
        %3431 = vset.pattern.permute.xlu0 11
        %3432 = vperm.xlu0 %3431, %v1114
        %v3433 = vpop.permute.xlu0 %3432
        %3435 = vset.pattern.permute.xlu0 11
        %3436 = vperm.xlu0 %3435, %v1115
        %v3437 = vpop.permute.xlu0 %3436
        %v3439 = vlaneseq
        %v3440 = vshrl.u32 %v3439, 7
        %v3441 = vsub.s32 3, %v3440
        %v3442 = vrot.slane %v260, %v3441
        %v3443 = vmul.f32 %v3313, %v3442
        %v3444 = vmul.f32 %v3317, %v3442
        %v3445 = vmul.f32 %v3321, %v3442
        %v3446 = vmul.f32 %v3325, %v3442
        %v3447 = vmul.f32 %v3329, %v3442
        %v3448 = vmul.f32 %v3333, %v3442
        %v3449 = vmul.f32 %v3337, %v3442
        %v3450 = vmul.f32 %v3341, %v3442
        %v3451 = vmul.f32 %v3345, %v3442
        %v3452 = vmul.f32 %v3349, %v3442
        %v3453 = vmul.f32 %v3353, %v3442
        %v3454 = vmul.f32 %v3357, %v3442
        %v3455 = vmul.f32 %v3361, %v3442
        %v3456 = vmul.f32 %v3365, %v3442
        %v3457 = vmul.f32 %v3369, %v3442
        %v3458 = vmul.f32 %v3373, %v3442
        %v3459 = vmul.f32 %v3377, %v3442
        %v3460 = vmul.f32 %v3381, %v3442
        %v3461 = vmul.f32 %v3385, %v3442
        %v3462 = vmul.f32 %v3389, %v3442
        %v3463 = vmul.f32 %v3393, %v3442
        %v3464 = vmul.f32 %v3397, %v3442
        %v3465 = vmul.f32 %v3401, %v3442
        %v3466 = vmul.f32 %v3405, %v3442
        %v3467 = vmul.f32 %v3409, %v3442
        %v3468 = vmul.f32 %v3413, %v3442
        %v3469 = vmul.f32 %v3417, %v3442
        %v3470 = vmul.f32 %v3421, %v3442
        %v3471 = vmul.f32 %v3425, %v3442
        %v3472 = vmul.f32 %v3429, %v3442
        %v3473 = vmul.f32 %v3433, %v3442
        %v3474 = vmul.f32 %v3437, %v3442
        %v3475 = vadd.f32 %v3279, %v3443
        %v3476 = vadd.f32 %v3280, %v3444
        %v3477 = vadd.f32 %v3281, %v3445
        %v3478 = vadd.f32 %v3282, %v3446
        %v3479 = vadd.f32 %v3283, %v3447
        %v3480 = vadd.f32 %v3284, %v3448
        %v3481 = vadd.f32 %v3285, %v3449
        %v3482 = vadd.f32 %v3286, %v3450
        %v3483 = vadd.f32 %v3287, %v3451
        %v3484 = vadd.f32 %v3288, %v3452
        %v3485 = vadd.f32 %v3289, %v3453
        %v3486 = vadd.f32 %v3290, %v3454
        %v3487 = vadd.f32 %v3291, %v3455
        %v3488 = vadd.f32 %v3292, %v3456
        %v3489 = vadd.f32 %v3293, %v3457
        %v3490 = vadd.f32 %v3294, %v3458
        %v3491 = vadd.f32 %v3295, %v3459
        %v3492 = vadd.f32 %v3296, %v3460
        %v3493 = vadd.f32 %v3297, %v3461
        %v3494 = vadd.f32 %v3298, %v3462
        %v3495 = vadd.f32 %v3299, %v3463
        %v3496 = vadd.f32 %v3300, %v3464
        %v3497 = vadd.f32 %v3301, %v3465
        %v3498 = vadd.f32 %v3302, %v3466
        %v3499 = vadd.f32 %v3303, %v3467
        %v3500 = vadd.f32 %v3304, %v3468
        %v3501 = vadd.f32 %v3305, %v3469
        %v3502 = vadd.f32 %v3306, %v3470
        %v3503 = vadd.f32 %v3307, %v3471
        %v3504 = vadd.f32 %v3308, %v3472
        %v3505 = vadd.f32 %v3309, %v3473
        %v3506 = vadd.f32 %v3310, %v3474
        %3507 = vset.pattern.permute.xlu0 12
        %3508 = vperm.xlu0 %3507, %v1084
        %v3509 = vpop.permute.xlu0 %3508
        %3511 = vset.pattern.permute.xlu0 12
        %3512 = vperm.xlu0 %3511, %v1085
        %v3513 = vpop.permute.xlu0 %3512
        %3515 = vset.pattern.permute.xlu0 12
        %3516 = vperm.xlu0 %3515, %v1086
        %v3517 = vpop.permute.xlu0 %3516
        %3519 = vset.pattern.permute.xlu0 12
        %3520 = vperm.xlu0 %3519, %v1087
        %v3521 = vpop.permute.xlu0 %3520
        %3523 = vset.pattern.permute.xlu0 12
        %3524 = vperm.xlu0 %3523, %v1088
        %v3525 = vpop.permute.xlu0 %3524
        %3527 = vset.pattern.permute.xlu0 12
        %3528 = vperm.xlu0 %3527, %v1089
        %v3529 = vpop.permute.xlu0 %3528
        %3531 = vset.pattern.permute.xlu0 12
        %3532 = vperm.xlu0 %3531, %v1090
        %v3533 = vpop.permute.xlu0 %3532
        %3535 = vset.pattern.permute.xlu0 12
        %3536 = vperm.xlu0 %3535, %v1091
        %v3537 = vpop.permute.xlu0 %3536
        %3539 = vset.pattern.permute.xlu0 12
        %3540 = vperm.xlu0 %3539, %v1092
        %v3541 = vpop.permute.xlu0 %3540
        %3543 = vset.pattern.permute.xlu0 12
        %3544 = vperm.xlu0 %3543, %v1093
        %v3545 = vpop.permute.xlu0 %3544
        %3547 = vset.pattern.permute.xlu0 12
        %3548 = vperm.xlu0 %3547, %v1094
        %v3549 = vpop.permute.xlu0 %3548
        %3551 = vset.pattern.permute.xlu0 12
        %3552 = vperm.xlu0 %3551, %v1095
        %v3553 = vpop.permute.xlu0 %3552
        %3555 = vset.pattern.permute.xlu0 12
        %3556 = vperm.xlu0 %3555, %v1096
        %v3557 = vpop.permute.xlu0 %3556
        %3559 = vset.pattern.permute.xlu0 12
        %3560 = vperm.xlu0 %3559, %v1097
        %v3561 = vpop.permute.xlu0 %3560
        %3563 = vset.pattern.permute.xlu0 12
        %3564 = vperm.xlu0 %3563, %v1098
        %v3565 = vpop.permute.xlu0 %3564
        %3567 = vset.pattern.permute.xlu0 12
        %3568 = vperm.xlu0 %3567, %v1099
        %v3569 = vpop.permute.xlu0 %3568
        %3571 = vset.pattern.permute.xlu0 12
        %3572 = vperm.xlu0 %3571, %v1100
        %v3573 = vpop.permute.xlu0 %3572
        %3575 = vset.pattern.permute.xlu0 12
        %3576 = vperm.xlu0 %3575, %v1101
        %v3577 = vpop.permute.xlu0 %3576
        %3579 = vset.pattern.permute.xlu0 12
        %3580 = vperm.xlu0 %3579, %v1102
        %v3581 = vpop.permute.xlu0 %3580
        %3583 = vset.pattern.permute.xlu0 12
        %3584 = vperm.xlu0 %3583, %v1103
        %v3585 = vpop.permute.xlu0 %3584
        %3587 = vset.pattern.permute.xlu0 12
        %3588 = vperm.xlu0 %3587, %v1104
        %v3589 = vpop.permute.xlu0 %3588
        %3591 = vset.pattern.permute.xlu0 12
        %3592 = vperm.xlu0 %3591, %v1105
        %v3593 = vpop.permute.xlu0 %3592
        %3595 = vset.pattern.permute.xlu0 12
        %3596 = vperm.xlu0 %3595, %v1106
        %v3597 = vpop.permute.xlu0 %3596
        %3599 = vset.pattern.permute.xlu0 12
        %3600 = vperm.xlu0 %3599, %v1107
        %v3601 = vpop.permute.xlu0 %3600
        %3603 = vset.pattern.permute.xlu0 12
        %3604 = vperm.xlu0 %3603, %v1108
        %v3605 = vpop.permute.xlu0 %3604
        %3607 = vset.pattern.permute.xlu0 12
        %3608 = vperm.xlu0 %3607, %v1109
        %v3609 = vpop.permute.xlu0 %3608
        %3611 = vset.pattern.permute.xlu0 12
        %3612 = vperm.xlu0 %3611, %v1110
        %v3613 = vpop.permute.xlu0 %3612
        %3615 = vset.pattern.permute.xlu0 12
        %3616 = vperm.xlu0 %3615, %v1111
        %v3617 = vpop.permute.xlu0 %3616
        %3619 = vset.pattern.permute.xlu0 12
        %3620 = vperm.xlu0 %3619, %v1112
        %v3621 = vpop.permute.xlu0 %3620
        %3623 = vset.pattern.permute.xlu0 12
        %3624 = vperm.xlu0 %3623, %v1113
        %v3625 = vpop.permute.xlu0 %3624
        %3627 = vset.pattern.permute.xlu0 12
        %3628 = vperm.xlu0 %3627, %v1114
        %v3629 = vpop.permute.xlu0 %3628
        %3631 = vset.pattern.permute.xlu0 12
        %3632 = vperm.xlu0 %3631, %v1115
        %v3633 = vpop.permute.xlu0 %3632
        %v3635 = vlaneseq
        %v3636 = vshrl.u32 %v3635, 7
        %v3637 = vsub.s32 4, %v3636
        %v3638 = vrot.slane %v260, %v3637
        %v3639 = vmul.f32 %v3509, %v3638
        %v3640 = vmul.f32 %v3513, %v3638
        %v3641 = vmul.f32 %v3517, %v3638
        %v3642 = vmul.f32 %v3521, %v3638
        %v3643 = vmul.f32 %v3525, %v3638
        %v3644 = vmul.f32 %v3529, %v3638
        %v3645 = vmul.f32 %v3533, %v3638
        %v3646 = vmul.f32 %v3537, %v3638
        %v3647 = vmul.f32 %v3541, %v3638
        %v3648 = vmul.f32 %v3545, %v3638
        %v3649 = vmul.f32 %v3549, %v3638
        %v3650 = vmul.f32 %v3553, %v3638
        %v3651 = vmul.f32 %v3557, %v3638
        %v3652 = vmul.f32 %v3561, %v3638
        %v3653 = vmul.f32 %v3565, %v3638
        %v3654 = vmul.f32 %v3569, %v3638
        %v3655 = vmul.f32 %v3573, %v3638
        %v3656 = vmul.f32 %v3577, %v3638
        %v3657 = vmul.f32 %v3581, %v3638
        %v3658 = vmul.f32 %v3585, %v3638
        %v3659 = vmul.f32 %v3589, %v3638
        %v3660 = vmul.f32 %v3593, %v3638
        %v3661 = vmul.f32 %v3597, %v3638
        %v3662 = vmul.f32 %v3601, %v3638
        %v3663 = vmul.f32 %v3605, %v3638
        %v3664 = vmul.f32 %v3609, %v3638
        %v3665 = vmul.f32 %v3613, %v3638
        %v3666 = vmul.f32 %v3617, %v3638
        %v3667 = vmul.f32 %v3621, %v3638
        %v3668 = vmul.f32 %v3625, %v3638
        %v3669 = vmul.f32 %v3629, %v3638
        %v3670 = vmul.f32 %v3633, %v3638
        %v3671 = vadd.f32 %v3475, %v3639
        %v3672 = vadd.f32 %v3476, %v3640
        %v3673 = vadd.f32 %v3477, %v3641
        %v3674 = vadd.f32 %v3478, %v3642
        %v3675 = vadd.f32 %v3479, %v3643
        %v3676 = vadd.f32 %v3480, %v3644
        %v3677 = vadd.f32 %v3481, %v3645
        %v3678 = vadd.f32 %v3482, %v3646
        %v3679 = vadd.f32 %v3483, %v3647
        %v3680 = vadd.f32 %v3484, %v3648
        %v3681 = vadd.f32 %v3485, %v3649
        %v3682 = vadd.f32 %v3486, %v3650
        %v3683 = vadd.f32 %v3487, %v3651
        %v3684 = vadd.f32 %v3488, %v3652
        %v3685 = vadd.f32 %v3489, %v3653
        %v3686 = vadd.f32 %v3490, %v3654
        %v3687 = vadd.f32 %v3491, %v3655
        %v3688 = vadd.f32 %v3492, %v3656
        %v3689 = vadd.f32 %v3493, %v3657
        %v3690 = vadd.f32 %v3494, %v3658
        %v3691 = vadd.f32 %v3495, %v3659
        %v3692 = vadd.f32 %v3496, %v3660
        %v3693 = vadd.f32 %v3497, %v3661
        %v3694 = vadd.f32 %v3498, %v3662
        %v3695 = vadd.f32 %v3499, %v3663
        %v3696 = vadd.f32 %v3500, %v3664
        %v3697 = vadd.f32 %v3501, %v3665
        %v3698 = vadd.f32 %v3502, %v3666
        %v3699 = vadd.f32 %v3503, %v3667
        %v3700 = vadd.f32 %v3504, %v3668
        %v3701 = vadd.f32 %v3505, %v3669
        %v3702 = vadd.f32 %v3506, %v3670
        %3703 = vset.pattern.permute.xlu0 13
        %3704 = vperm.xlu0 %3703, %v1084
        %v3705 = vpop.permute.xlu0 %3704
        %3707 = vset.pattern.permute.xlu0 13
        %3708 = vperm.xlu0 %3707, %v1085
        %v3709 = vpop.permute.xlu0 %3708
        %3711 = vset.pattern.permute.xlu0 13
        %3712 = vperm.xlu0 %3711, %v1086
        %v3713 = vpop.permute.xlu0 %3712
        %3715 = vset.pattern.permute.xlu0 13
        %3716 = vperm.xlu0 %3715, %v1087
        %v3717 = vpop.permute.xlu0 %3716
        %3719 = vset.pattern.permute.xlu0 13
        %3720 = vperm.xlu0 %3719, %v1088
        %v3721 = vpop.permute.xlu0 %3720
        %3723 = vset.pattern.permute.xlu0 13
        %3724 = vperm.xlu0 %3723, %v1089
        %v3725 = vpop.permute.xlu0 %3724
        %3727 = vset.pattern.permute.xlu0 13
        %3728 = vperm.xlu0 %3727, %v1090
        %v3729 = vpop.permute.xlu0 %3728
        %3731 = vset.pattern.permute.xlu0 13
        %3732 = vperm.xlu0 %3731, %v1091
        %v3733 = vpop.permute.xlu0 %3732
        %3735 = vset.pattern.permute.xlu0 13
        %3736 = vperm.xlu0 %3735, %v1092
        %v3737 = vpop.permute.xlu0 %3736
        %3739 = vset.pattern.permute.xlu0 13
        %3740 = vperm.xlu0 %3739, %v1093
        %v3741 = vpop.permute.xlu0 %3740
        %3743 = vset.pattern.permute.xlu0 13
        %3744 = vperm.xlu0 %3743, %v1094
        %v3745 = vpop.permute.xlu0 %3744
        %3747 = vset.pattern.permute.xlu0 13
        %3748 = vperm.xlu0 %3747, %v1095
        %v3749 = vpop.permute.xlu0 %3748
        %3751 = vset.pattern.permute.xlu0 13
        %3752 = vperm.xlu0 %3751, %v1096
        %v3753 = vpop.permute.xlu0 %3752
        %3755 = vset.pattern.permute.xlu0 13
        %3756 = vperm.xlu0 %3755, %v1097
        %v3757 = vpop.permute.xlu0 %3756
        %3759 = vset.pattern.permute.xlu0 13
        %3760 = vperm.xlu0 %3759, %v1098
        %v3761 = vpop.permute.xlu0 %3760
        %3763 = vset.pattern.permute.xlu0 13
        %3764 = vperm.xlu0 %3763, %v1099
        %v3765 = vpop.permute.xlu0 %3764
        %3767 = vset.pattern.permute.xlu0 13
        %3768 = vperm.xlu0 %3767, %v1100
        %v3769 = vpop.permute.xlu0 %3768
        %3771 = vset.pattern.permute.xlu0 13
        %3772 = vperm.xlu0 %3771, %v1101
        %v3773 = vpop.permute.xlu0 %3772
        %3775 = vset.pattern.permute.xlu0 13
        %3776 = vperm.xlu0 %3775, %v1102
        %v3777 = vpop.permute.xlu0 %3776
        %3779 = vset.pattern.permute.xlu0 13
        %3780 = vperm.xlu0 %3779, %v1103
        %v3781 = vpop.permute.xlu0 %3780
        %3783 = vset.pattern.permute.xlu0 13
        %3784 = vperm.xlu0 %3783, %v1104
        %v3785 = vpop.permute.xlu0 %3784
        %3787 = vset.pattern.permute.xlu0 13
        %3788 = vperm.xlu0 %3787, %v1105
        %v3789 = vpop.permute.xlu0 %3788
        %3791 = vset.pattern.permute.xlu0 13
        %3792 = vperm.xlu0 %3791, %v1106
        %v3793 = vpop.permute.xlu0 %3792
        %3795 = vset.pattern.permute.xlu0 13
        %3796 = vperm.xlu0 %3795, %v1107
        %v3797 = vpop.permute.xlu0 %3796
        %3799 = vset.pattern.permute.xlu0 13
        %3800 = vperm.xlu0 %3799, %v1108
        %v3801 = vpop.permute.xlu0 %3800
        %3803 = vset.pattern.permute.xlu0 13
        %3804 = vperm.xlu0 %3803, %v1109
        %v3805 = vpop.permute.xlu0 %3804
        %3807 = vset.pattern.permute.xlu0 13
        %3808 = vperm.xlu0 %3807, %v1110
        %v3809 = vpop.permute.xlu0 %3808
        %3811 = vset.pattern.permute.xlu0 13
        %3812 = vperm.xlu0 %3811, %v1111
        %v3813 = vpop.permute.xlu0 %3812
        %3815 = vset.pattern.permute.xlu0 13
        %3816 = vperm.xlu0 %3815, %v1112
        %v3817 = vpop.permute.xlu0 %3816
        %3819 = vset.pattern.permute.xlu0 13
        %3820 = vperm.xlu0 %3819, %v1113
        %v3821 = vpop.permute.xlu0 %3820
        %3823 = vset.pattern.permute.xlu0 13
        %3824 = vperm.xlu0 %3823, %v1114
        %v3825 = vpop.permute.xlu0 %3824
        %3827 = vset.pattern.permute.xlu0 13
        %3828 = vperm.xlu0 %3827, %v1115
        %v3829 = vpop.permute.xlu0 %3828
        %v3831 = vlaneseq
        %v3832 = vshrl.u32 %v3831, 7
        %v3833 = vsub.s32 5, %v3832
        %v3834 = vrot.slane %v260, %v3833
        %v3835 = vmul.f32 %v3705, %v3834
        %v3836 = vmul.f32 %v3709, %v3834
        %v3837 = vmul.f32 %v3713, %v3834
        %v3838 = vmul.f32 %v3717, %v3834
        %v3839 = vmul.f32 %v3721, %v3834
        %v3840 = vmul.f32 %v3725, %v3834
        %v3841 = vmul.f32 %v3729, %v3834
        %v3842 = vmul.f32 %v3733, %v3834
        %v3843 = vmul.f32 %v3737, %v3834
        %v3844 = vmul.f32 %v3741, %v3834
        %v3845 = vmul.f32 %v3745, %v3834
        %v3846 = vmul.f32 %v3749, %v3834
        %v3847 = vmul.f32 %v3753, %v3834
        %v3848 = vmul.f32 %v3757, %v3834
        %v3849 = vmul.f32 %v3761, %v3834
        %v3850 = vmul.f32 %v3765, %v3834
        %v3851 = vmul.f32 %v3769, %v3834
        %v3852 = vmul.f32 %v3773, %v3834
        %v3853 = vmul.f32 %v3777, %v3834
        %v3854 = vmul.f32 %v3781, %v3834
        %v3855 = vmul.f32 %v3785, %v3834
        %v3856 = vmul.f32 %v3789, %v3834
        %v3857 = vmul.f32 %v3793, %v3834
        %v3858 = vmul.f32 %v3797, %v3834
        %v3859 = vmul.f32 %v3801, %v3834
        %v3860 = vmul.f32 %v3805, %v3834
        %v3861 = vmul.f32 %v3809, %v3834
        %v3862 = vmul.f32 %v3813, %v3834
        %v3863 = vmul.f32 %v3817, %v3834
        %v3864 = vmul.f32 %v3821, %v3834
        %v3865 = vmul.f32 %v3825, %v3834
        %v3866 = vmul.f32 %v3829, %v3834
        %v3867 = vadd.f32 %v3671, %v3835
        %v3868 = vadd.f32 %v3672, %v3836
        %v3869 = vadd.f32 %v3673, %v3837
        %v3870 = vadd.f32 %v3674, %v3838
        %v3871 = vadd.f32 %v3675, %v3839
        %v3872 = vadd.f32 %v3676, %v3840
        %v3873 = vadd.f32 %v3677, %v3841
        %v3874 = vadd.f32 %v3678, %v3842
        %v3875 = vadd.f32 %v3679, %v3843
        %v3876 = vadd.f32 %v3680, %v3844
        %v3877 = vadd.f32 %v3681, %v3845
        %v3878 = vadd.f32 %v3682, %v3846
        %v3879 = vadd.f32 %v3683, %v3847
        %v3880 = vadd.f32 %v3684, %v3848
        %v3881 = vadd.f32 %v3685, %v3849
        %v3882 = vadd.f32 %v3686, %v3850
        %v3883 = vadd.f32 %v3687, %v3851
        %v3884 = vadd.f32 %v3688, %v3852
        %v3885 = vadd.f32 %v3689, %v3853
        %v3886 = vadd.f32 %v3690, %v3854
        %v3887 = vadd.f32 %v3691, %v3855
        %v3888 = vadd.f32 %v3692, %v3856
        %v3889 = vadd.f32 %v3693, %v3857
        %v3890 = vadd.f32 %v3694, %v3858
        %v3891 = vadd.f32 %v3695, %v3859
        %v3892 = vadd.f32 %v3696, %v3860
        %v3893 = vadd.f32 %v3697, %v3861
        %v3894 = vadd.f32 %v3698, %v3862
        %v3895 = vadd.f32 %v3699, %v3863
        %v3896 = vadd.f32 %v3700, %v3864
        %v3897 = vadd.f32 %v3701, %v3865
        %v3898 = vadd.f32 %v3702, %v3866
        %3899 = vset.pattern.permute.xlu0 14
        %3900 = vperm.xlu0 %3899, %v1084
        %v3901 = vpop.permute.xlu0 %3900
        %3903 = vset.pattern.permute.xlu0 14
        %3904 = vperm.xlu0 %3903, %v1085
        %v3905 = vpop.permute.xlu0 %3904
        %3907 = vset.pattern.permute.xlu0 14
        %3908 = vperm.xlu0 %3907, %v1086
        %v3909 = vpop.permute.xlu0 %3908
        %3911 = vset.pattern.permute.xlu0 14
        %3912 = vperm.xlu0 %3911, %v1087
        %v3913 = vpop.permute.xlu0 %3912
        %3915 = vset.pattern.permute.xlu0 14
        %3916 = vperm.xlu0 %3915, %v1088
        %v3917 = vpop.permute.xlu0 %3916
        %3919 = vset.pattern.permute.xlu0 14
        %3920 = vperm.xlu0 %3919, %v1089
        %v3921 = vpop.permute.xlu0 %3920
        %3923 = vset.pattern.permute.xlu0 14
        %3924 = vperm.xlu0 %3923, %v1090
        %v3925 = vpop.permute.xlu0 %3924
        %3927 = vset.pattern.permute.xlu0 14
        %3928 = vperm.xlu0 %3927, %v1091
        %v3929 = vpop.permute.xlu0 %3928
        %3931 = vset.pattern.permute.xlu0 14
        %3932 = vperm.xlu0 %3931, %v1092
        %v3933 = vpop.permute.xlu0 %3932
        %3935 = vset.pattern.permute.xlu0 14
        %3936 = vperm.xlu0 %3935, %v1093
        %v3937 = vpop.permute.xlu0 %3936
        %3939 = vset.pattern.permute.xlu0 14
        %3940 = vperm.xlu0 %3939, %v1094
        %v3941 = vpop.permute.xlu0 %3940
        %3943 = vset.pattern.permute.xlu0 14
        %3944 = vperm.xlu0 %3943, %v1095
        %v3945 = vpop.permute.xlu0 %3944
        %3947 = vset.pattern.permute.xlu0 14
        %3948 = vperm.xlu0 %3947, %v1096
        %v3949 = vpop.permute.xlu0 %3948
        %3951 = vset.pattern.permute.xlu0 14
        %3952 = vperm.xlu0 %3951, %v1097
        %v3953 = vpop.permute.xlu0 %3952
        %3955 = vset.pattern.permute.xlu0 14
        %3956 = vperm.xlu0 %3955, %v1098
        %v3957 = vpop.permute.xlu0 %3956
        %3959 = vset.pattern.permute.xlu0 14
        %3960 = vperm.xlu0 %3959, %v1099
        %v3961 = vpop.permute.xlu0 %3960
        %3963 = vset.pattern.permute.xlu0 14
        %3964 = vperm.xlu0 %3963, %v1100
        %v3965 = vpop.permute.xlu0 %3964
        %3967 = vset.pattern.permute.xlu0 14
        %3968 = vperm.xlu0 %3967, %v1101
        %v3969 = vpop.permute.xlu0 %3968
        %3971 = vset.pattern.permute.xlu0 14
        %3972 = vperm.xlu0 %3971, %v1102
        %v3973 = vpop.permute.xlu0 %3972
        %3975 = vset.pattern.permute.xlu0 14
        %3976 = vperm.xlu0 %3975, %v1103
        %v3977 = vpop.permute.xlu0 %3976
        %3979 = vset.pattern.permute.xlu0 14
        %3980 = vperm.xlu0 %3979, %v1104
        %v3981 = vpop.permute.xlu0 %3980
        %3983 = vset.pattern.permute.xlu0 14
        %3984 = vperm.xlu0 %3983, %v1105
        %v3985 = vpop.permute.xlu0 %3984
        %3987 = vset.pattern.permute.xlu0 14
        %3988 = vperm.xlu0 %3987, %v1106
        %v3989 = vpop.permute.xlu0 %3988
        %3991 = vset.pattern.permute.xlu0 14
        %3992 = vperm.xlu0 %3991, %v1107
        %v3993 = vpop.permute.xlu0 %3992
        %3995 = vset.pattern.permute.xlu0 14
        %3996 = vperm.xlu0 %3995, %v1108
        %v3997 = vpop.permute.xlu0 %3996
        %3999 = vset.pattern.permute.xlu0 14
        %4000 = vperm.xlu0 %3999, %v1109
        %v4001 = vpop.permute.xlu0 %4000
        %4003 = vset.pattern.permute.xlu0 14
        %4004 = vperm.xlu0 %4003, %v1110
        %v4005 = vpop.permute.xlu0 %4004
        %4007 = vset.pattern.permute.xlu0 14
        %4008 = vperm.xlu0 %4007, %v1111
        %v4009 = vpop.permute.xlu0 %4008
        %4011 = vset.pattern.permute.xlu0 14
        %4012 = vperm.xlu0 %4011, %v1112
        %v4013 = vpop.permute.xlu0 %4012
        %4015 = vset.pattern.permute.xlu0 14
        %4016 = vperm.xlu0 %4015, %v1113
        %v4017 = vpop.permute.xlu0 %4016
        %4019 = vset.pattern.permute.xlu0 14
        %4020 = vperm.xlu0 %4019, %v1114
        %v4021 = vpop.permute.xlu0 %4020
        %4023 = vset.pattern.permute.xlu0 14
        %4024 = vperm.xlu0 %4023, %v1115
        %v4025 = vpop.permute.xlu0 %4024
        %v4027 = vlaneseq
        %v4028 = vshrl.u32 %v4027, 7
        %v4029 = vsub.s32 6, %v4028
        %v4030 = vrot.slane %v260, %v4029
        %v4031 = vmul.f32 %v3901, %v4030
        %v4032 = vmul.f32 %v3905, %v4030
        %v4033 = vmul.f32 %v3909, %v4030
        %v4034 = vmul.f32 %v3913, %v4030
        %v4035 = vmul.f32 %v3917, %v4030
        %v4036 = vmul.f32 %v3921, %v4030
        %v4037 = vmul.f32 %v3925, %v4030
        %v4038 = vmul.f32 %v3929, %v4030
        %v4039 = vmul.f32 %v3933, %v4030
        %v4040 = vmul.f32 %v3937, %v4030
        %v4041 = vmul.f32 %v3941, %v4030
        %v4042 = vmul.f32 %v3945, %v4030
        %v4043 = vmul.f32 %v3949, %v4030
        %v4044 = vmul.f32 %v3953, %v4030
        %v4045 = vmul.f32 %v3957, %v4030
        %v4046 = vmul.f32 %v3961, %v4030
        %v4047 = vmul.f32 %v3965, %v4030
        %v4048 = vmul.f32 %v3969, %v4030
        %v4049 = vmul.f32 %v3973, %v4030
        %v4050 = vmul.f32 %v3977, %v4030
        %v4051 = vmul.f32 %v3981, %v4030
        %v4052 = vmul.f32 %v3985, %v4030
        %v4053 = vmul.f32 %v3989, %v4030
        %v4054 = vmul.f32 %v3993, %v4030
        %v4055 = vmul.f32 %v3997, %v4030
        %v4056 = vmul.f32 %v4001, %v4030
        %v4057 = vmul.f32 %v4005, %v4030
        %v4058 = vmul.f32 %v4009, %v4030
        %v4059 = vmul.f32 %v4013, %v4030
        %v4060 = vmul.f32 %v4017, %v4030
        %v4061 = vmul.f32 %v4021, %v4030
        %v4062 = vmul.f32 %v4025, %v4030
        %v4063 = vadd.f32 %v3867, %v4031
        %v4064 = vadd.f32 %v3868, %v4032
        %v4065 = vadd.f32 %v3869, %v4033
        %v4066 = vadd.f32 %v3870, %v4034
        %v4067 = vadd.f32 %v3871, %v4035
        %v4068 = vadd.f32 %v3872, %v4036
        %v4069 = vadd.f32 %v3873, %v4037
        %v4070 = vadd.f32 %v3874, %v4038
        %v4071 = vadd.f32 %v3875, %v4039
        %v4072 = vadd.f32 %v3876, %v4040
        %v4073 = vadd.f32 %v3877, %v4041
        %v4074 = vadd.f32 %v3878, %v4042
        %v4075 = vadd.f32 %v3879, %v4043
        %v4076 = vadd.f32 %v3880, %v4044
        %v4077 = vadd.f32 %v3881, %v4045
        %v4078 = vadd.f32 %v3882, %v4046
        %v4079 = vadd.f32 %v3883, %v4047
        %v4080 = vadd.f32 %v3884, %v4048
        %v4081 = vadd.f32 %v3885, %v4049
        %v4082 = vadd.f32 %v3886, %v4050
        %v4083 = vadd.f32 %v3887, %v4051
        %v4084 = vadd.f32 %v3888, %v4052
        %v4085 = vadd.f32 %v3889, %v4053
        %v4086 = vadd.f32 %v3890, %v4054
        %v4087 = vadd.f32 %v3891, %v4055
        %v4088 = vadd.f32 %v3892, %v4056
        %v4089 = vadd.f32 %v3893, %v4057
        %v4090 = vadd.f32 %v3894, %v4058
        %v4091 = vadd.f32 %v3895, %v4059
        %v4092 = vadd.f32 %v3896, %v4060
        %v4093 = vadd.f32 %v3897, %v4061
        %v4094 = vadd.f32 %v3898, %v4062
        %4095 = vset.pattern.permute.xlu0 15
        %4096 = vperm.xlu0 %4095, %v1084
        %v4097 = vpop.permute.xlu0 %4096
        %4099 = vset.pattern.permute.xlu0 15
        %4100 = vperm.xlu0 %4099, %v1085
        %v4101 = vpop.permute.xlu0 %4100
        %4103 = vset.pattern.permute.xlu0 15
        %4104 = vperm.xlu0 %4103, %v1086
        %v4105 = vpop.permute.xlu0 %4104
        %4107 = vset.pattern.permute.xlu0 15
        %4108 = vperm.xlu0 %4107, %v1087
        %v4109 = vpop.permute.xlu0 %4108
        %4111 = vset.pattern.permute.xlu0 15
        %4112 = vperm.xlu0 %4111, %v1088
        %v4113 = vpop.permute.xlu0 %4112
        %4115 = vset.pattern.permute.xlu0 15
        %4116 = vperm.xlu0 %4115, %v1089
        %v4117 = vpop.permute.xlu0 %4116
        %4119 = vset.pattern.permute.xlu0 15
        %4120 = vperm.xlu0 %4119, %v1090
        %v4121 = vpop.permute.xlu0 %4120
        %4123 = vset.pattern.permute.xlu0 15
        %4124 = vperm.xlu0 %4123, %v1091
        %v4125 = vpop.permute.xlu0 %4124
        %4127 = vset.pattern.permute.xlu0 15
        %4128 = vperm.xlu0 %4127, %v1092
        %v4129 = vpop.permute.xlu0 %4128
        %4131 = vset.pattern.permute.xlu0 15
        %4132 = vperm.xlu0 %4131, %v1093
        %v4133 = vpop.permute.xlu0 %4132
        %4135 = vset.pattern.permute.xlu0 15
        %4136 = vperm.xlu0 %4135, %v1094
        %v4137 = vpop.permute.xlu0 %4136
        %4139 = vset.pattern.permute.xlu0 15
        %4140 = vperm.xlu0 %4139, %v1095
        %v4141 = vpop.permute.xlu0 %4140
        %4143 = vset.pattern.permute.xlu0 15
        %4144 = vperm.xlu0 %4143, %v1096
        %v4145 = vpop.permute.xlu0 %4144
        %4147 = vset.pattern.permute.xlu0 15
        %4148 = vperm.xlu0 %4147, %v1097
        %v4149 = vpop.permute.xlu0 %4148
        %4151 = vset.pattern.permute.xlu0 15
        %4152 = vperm.xlu0 %4151, %v1098
        %v4153 = vpop.permute.xlu0 %4152
        %4155 = vset.pattern.permute.xlu0 15
        %4156 = vperm.xlu0 %4155, %v1099
        %v4157 = vpop.permute.xlu0 %4156
        %4159 = vset.pattern.permute.xlu0 15
        %4160 = vperm.xlu0 %4159, %v1100
        %v4161 = vpop.permute.xlu0 %4160
        %4163 = vset.pattern.permute.xlu0 15
        %4164 = vperm.xlu0 %4163, %v1101
        %v4165 = vpop.permute.xlu0 %4164
        %4167 = vset.pattern.permute.xlu0 15
        %4168 = vperm.xlu0 %4167, %v1102
        %v4169 = vpop.permute.xlu0 %4168
        %4171 = vset.pattern.permute.xlu0 15
        %4172 = vperm.xlu0 %4171, %v1103
        %v4173 = vpop.permute.xlu0 %4172
        %4175 = vset.pattern.permute.xlu0 15
        %4176 = vperm.xlu0 %4175, %v1104
        %v4177 = vpop.permute.xlu0 %4176
        %4179 = vset.pattern.permute.xlu0 15
        %4180 = vperm.xlu0 %4179, %v1105
        %v4181 = vpop.permute.xlu0 %4180
        %4183 = vset.pattern.permute.xlu0 15
        %4184 = vperm.xlu0 %4183, %v1106
        %v4185 = vpop.permute.xlu0 %4184
        %4187 = vset.pattern.permute.xlu0 15
        %4188 = vperm.xlu0 %4187, %v1107
        %v4189 = vpop.permute.xlu0 %4188
        %4191 = vset.pattern.permute.xlu0 15
        %4192 = vperm.xlu0 %4191, %v1108
        %v4193 = vpop.permute.xlu0 %4192
        %4195 = vset.pattern.permute.xlu0 15
        %4196 = vperm.xlu0 %4195, %v1109
        %v4197 = vpop.permute.xlu0 %4196
        %4199 = vset.pattern.permute.xlu0 15
        %4200 = vperm.xlu0 %4199, %v1110
        %v4201 = vpop.permute.xlu0 %4200
        %4203 = vset.pattern.permute.xlu0 15
        %4204 = vperm.xlu0 %4203, %v1111
        %v4205 = vpop.permute.xlu0 %4204
        %4207 = vset.pattern.permute.xlu0 15
        %4208 = vperm.xlu0 %4207, %v1112
        %v4209 = vpop.permute.xlu0 %4208
        %4211 = vset.pattern.permute.xlu0 15
        %4212 = vperm.xlu0 %4211, %v1113
        %v4213 = vpop.permute.xlu0 %4212
        %4215 = vset.pattern.permute.xlu0 15
        %4216 = vperm.xlu0 %4215, %v1114
        %v4217 = vpop.permute.xlu0 %4216
        %4219 = vset.pattern.permute.xlu0 15
        %4220 = vperm.xlu0 %4219, %v1115
        %v4221 = vpop.permute.xlu0 %4220
        %v4223 = vlaneseq
        %v4224 = vshrl.u32 %v4223, 7
        %v4225 = vsub.s32 7, %v4224
        %v4226 = vrot.slane %v260, %v4225
        %v4227 = vmul.f32 %v4097, %v4226
        %v4228 = vmul.f32 %v4101, %v4226
        %v4229 = vmul.f32 %v4105, %v4226
        %v4230 = vmul.f32 %v4109, %v4226
        %v4231 = vmul.f32 %v4113, %v4226
        %v4232 = vmul.f32 %v4117, %v4226
        %v4233 = vmul.f32 %v4121, %v4226
        %v4234 = vmul.f32 %v4125, %v4226
        %v4235 = vmul.f32 %v4129, %v4226
        %v4236 = vmul.f32 %v4133, %v4226
        %v4237 = vmul.f32 %v4137, %v4226
        %v4238 = vmul.f32 %v4141, %v4226
        %v4239 = vmul.f32 %v4145, %v4226
        %v4240 = vmul.f32 %v4149, %v4226
        %v4241 = vmul.f32 %v4153, %v4226
        %v4242 = vmul.f32 %v4157, %v4226
        %v4243 = vmul.f32 %v4161, %v4226
        %v4244 = vmul.f32 %v4165, %v4226
        %v4245 = vmul.f32 %v4169, %v4226
        %v4246 = vmul.f32 %v4173, %v4226
        %v4247 = vmul.f32 %v4177, %v4226
        %v4248 = vmul.f32 %v4181, %v4226
        %v4249 = vmul.f32 %v4185, %v4226
        %v4250 = vmul.f32 %v4189, %v4226
        %v4251 = vmul.f32 %v4193, %v4226
        %v4252 = vmul.f32 %v4197, %v4226
        %v4253 = vmul.f32 %v4201, %v4226
        %v4254 = vmul.f32 %v4205, %v4226
        %v4255 = vmul.f32 %v4209, %v4226
        %v4256 = vmul.f32 %v4213, %v4226
        %v4257 = vmul.f32 %v4217, %v4226
        %v4258 = vmul.f32 %v4221, %v4226
        %v4259 = vadd.f32 %v4063, %v4227
        %v4260 = vadd.f32 %v4064, %v4228
        %v4261 = vadd.f32 %v4065, %v4229
        %v4262 = vadd.f32 %v4066, %v4230
        %v4263 = vadd.f32 %v4067, %v4231
        %v4264 = vadd.f32 %v4068, %v4232
        %v4265 = vadd.f32 %v4069, %v4233
        %v4266 = vadd.f32 %v4070, %v4234
        %v4267 = vadd.f32 %v4071, %v4235
        %v4268 = vadd.f32 %v4072, %v4236
        %v4269 = vadd.f32 %v4073, %v4237
        %v4270 = vadd.f32 %v4074, %v4238
        %v4271 = vadd.f32 %v4075, %v4239
        %v4272 = vadd.f32 %v4076, %v4240
        %v4273 = vadd.f32 %v4077, %v4241
        %v4274 = vadd.f32 %v4078, %v4242
        %v4275 = vadd.f32 %v4079, %v4243
        %v4276 = vadd.f32 %v4080, %v4244
        %v4277 = vadd.f32 %v4081, %v4245
        %v4278 = vadd.f32 %v4082, %v4246
        %v4279 = vadd.f32 %v4083, %v4247
        %v4280 = vadd.f32 %v4084, %v4248
        %v4281 = vadd.f32 %v4085, %v4249
        %v4282 = vadd.f32 %v4086, %v4250
        %v4283 = vadd.f32 %v4087, %v4251
        %v4284 = vadd.f32 %v4088, %v4252
        %v4285 = vadd.f32 %v4089, %v4253
        %v4286 = vadd.f32 %v4090, %v4254
        %v4287 = vadd.f32 %v4091, %v4255
        %v4288 = vadd.f32 %v4092, %v4256
        %v4289 = vadd.f32 %v4093, %v4257
        %v4290 = vadd.f32 %v4094, %v4258
        %v4291 = vtanh.pop %v4259
        %v4292 = vtanh.pop %v4260
        %v4293 = vtanh.pop %v4261
        %v4294 = vtanh.pop %v4262
        %v4295 = vtanh.pop %v4263
        %v4296 = vtanh.pop %v4264
        %v4297 = vtanh.pop %v4265
        %v4298 = vtanh.pop %v4266
        %v4299 = vtanh.pop %v4267
        %v4300 = vtanh.pop %v4268
        %v4301 = vtanh.pop %v4269
        %v4302 = vtanh.pop %v4270
        %v4303 = vtanh.pop %v4271
        %v4304 = vtanh.pop %v4272
        %v4305 = vtanh.pop %v4273
        %v4306 = vtanh.pop %v4274
        %v4307 = vtanh.pop %v4275
        %v4308 = vtanh.pop %v4276
        %v4309 = vtanh.pop %v4277
        %v4310 = vtanh.pop %v4278
        %v4311 = vtanh.pop %v4279
        %v4312 = vtanh.pop %v4280
        %v4313 = vtanh.pop %v4281
        %v4314 = vtanh.pop %v4282
        %v4315 = vtanh.pop %v4283
        %v4316 = vtanh.pop %v4284
        %v4317 = vtanh.pop %v4285
        %v4318 = vtanh.pop %v4286
        %v4319 = vtanh.pop %v4287
        %v4320 = vtanh.pop %v4288
        %v4321 = vtanh.pop %v4289
        %v4322 = vtanh.pop %v4290
        %4323 = vst [vmem:[%s218] sm:$0xff] %v4291
        %4324 = vst [vmem:[%s218 + $0x8] sm:$0xff] %v4292
        %4325 = vst [vmem:[%s218 + $0x10] sm:$0xff] %v4293
        %4326 = vst [vmem:[%s218 + $0x18] sm:$0xff] %v4294
        %4327 = vst [vmem:[%s218 + $0x20] sm:$0xff] %v4295
        %4328 = vst [vmem:[%s218 + $0x28] sm:$0xff] %v4296
        %4329 = vst [vmem:[%s218 + $0x30] sm:$0xff] %v4297
        %4330 = vst [vmem:[%s218 + $0x38] sm:$0xff] %v4298
        %4331 = vst [vmem:[%s218 + $0x40] sm:$0xff] %v4299
        %4332 = vst [vmem:[%s218 + $0x48] sm:$0xff] %v4300
        %4333 = vst [vmem:[%s218 + $0x50] sm:$0xff] %v4301
        %4334 = vst [vmem:[%s218 + $0x58] sm:$0xff] %v4302
        %4335 = vst [vmem:[%s218 + $0x60] sm:$0xff] %v4303
        %4336 = vst [vmem:[%s218 + $0x68] sm:$0xff] %v4304
        %4337 = vst [vmem:[%s218 + $0x70] sm:$0xff] %v4305
        %4338 = vst [vmem:[%s218 + $0x78] sm:$0xff] %v4306
        %4339 = vst [vmem:[%s218 + $0x80] sm:$0xff] %v4307
        %4340 = vst [vmem:[%s218 + $0x88] sm:$0xff] %v4308
        %4341 = vst [vmem:[%s218 + $0x90] sm:$0xff] %v4309
        %4342 = vst [vmem:[%s218 + $0x98] sm:$0xff] %v4310
        %4343 = vst [vmem:[%s218 + $0xa0] sm:$0xff] %v4311
        %4344 = vst [vmem:[%s218 + $0xa8] sm:$0xff] %v4312
        %4345 = vst [vmem:[%s218 + $0xb0] sm:$0xff] %v4313
        %4346 = vst [vmem:[%s218 + $0xb8] sm:$0xff] %v4314
        %4347 = vst [vmem:[%s218 + $0xc0] sm:$0xff] %v4315
        %4348 = vst [vmem:[%s218 + $0xc8] sm:$0xff] %v4316
        %4349 = vst [vmem:[%s218 + $0xd0] sm:$0xff] %v4317
        %4350 = vst [vmem:[%s218 + $0xd8] sm:$0xff] %v4318
        %4351 = vst [vmem:[%s218 + $0xe0] sm:$0xff] %v4319
        %4352 = vst [vmem:[%s218 + $0xe8] sm:$0xff] %v4320
        %4353 = vst [vmem:[%s218 + $0xf0] sm:$0xff] %v4321
        %4354 = vst [vmem:[%s218 + $0xf8] sm:$0xff] %v4322
        %s4355 = sand.u32 %s137, 1
        %s4356 = scalar_lea.sflag [#allocation3], %s4355
        %s4357 = sand.u32 %s137, 1
        %s4358 = smul.addr %s4357, 256
        %s4359 = scalar_lea.vmem [#allocation2], %s4358
        // Predicated region
        $region41: #{tpu_custom_call.1} parent=39 // pred_check
          %p4360 = pneg %p147
        $region42: #{tpu_custom_call.1} parent=39 // pred_check_branch
          %4362 = sbr.rel (%p4360) target = $region44
        $region43: #{tpu_custom_call.1} parent=39 // pred_region
          %s4363 = smul.u32 32, %s19
          %s4365 = ssub.s32 4096, 4096
          %4366 = vsyncadd %s4356, %s4365
          %s4367 = smul.addr %s4363, 128
          %s4368 = scalar_lea.hbm %s5, %s4367
          %s4369 = sshll.u32 %s4359, 4
          %s4370 = int_to_ptr.vmem [resolvable:$true] %s4369
          %4375 = dma.vmem_to_hbm [thread:$0]  %s4370, 4096, %s4368, %s4356, 128, 128, 8
        $region44: #{tpu_custom_call.1} parent=39 // pred_fallthru
          _
      $region40: #{tpu_custom_call.1} parent=5 // pred_fallthru
        _
      %p4376 = scmp.le.s32.totalorder 2, %s14
      // Predicated region
      $region45: #{tpu_custom_call.1} parent=5 // pred_check
        %p4377 = pneg %p4376
      $region46: #{tpu_custom_call.1} parent=5 // pred_check_branch
        %4379 = sbr.rel (%p4377) target = $region48
      $region47: #{tpu_custom_call.1} parent=5 // pred_region
        %s4380 = ssub.s32 %s14, 2
        // Predicated region
        $region49: #{tpu_custom_call.1} parent=47 // pred_check
          %p4381 = pneg %p153
        $region50: #{tpu_custom_call.1} parent=47 // pred_check_branch
          %4383 = sbr.rel (%p4381) target = $region52
        $region51: #{tpu_custom_call.1} parent=47 // pred_region
          %s4384 = sand.u32 %s138, 1
          %s4385 = scalar_lea.sflag [#allocation3], %s4384
          %s4386 = sand.u32 %s138, 1
          %s4387 = smul.addr %s4386, 256
          %s4388 = scalar_lea.vmem [#allocation2], %s4387
          %4389 = dma.done %s4385, 4096
        $region52: #{tpu_custom_call.1} parent=47 // pred_fallthru
          _
      $region48: #{tpu_custom_call.1} parent=5 // pred_fallthru
        _
    $region6: #{tpu_custom_call.1} parent=1 // loop_footer
      %s18 = sadd.s32 1, %s14
    $region7: #{tpu_custom_call.1} parent=1 // loop_footer_branch
      %13 = sbr.rel target = $region3
    $region8: #{tpu_custom_call.1} parent=1 // loop_exit
      _
    %4390 = vsyncpa [#allocation3], 1
    %s4391 = scalar_lea.sflag [#allocation3], 1
    %4392 = vsyncpa %s4391, 1

</llo_original>
